<compile_context>
chip_gen: v7x
topology: tpu7x:2x2x1
jax: 0.10.0
libtpu: 0.0.40
codegen_flags: <defaults>
</compile_context>

<pallas_src>
import functools

import jax
import jax.numpy as jnp
from jax.experimental import pallas as pl
from jax.experimental.pallas import tpu as pltpu

LANES = 128
CHUNK = 8            # sublane rows per register-resident slab (one f32 vreg)
SEG_HID = 32         # hidden width of the surrogate segmentation head
SEG_OUT = 3          # SmpNet(out_channels=3)
CLS_HID = 32         # hidden width of the surrogate classification head
CLS_OUT = 2          # load_cls_model(..., num_classes=2)
MAX_TILE_ROWS = 256  # 256 x 128 = 32K pixels per grid step


def _round_up(x, m):
    return ((x + m - 1) // m) * m


# ---------------------------------------------------------------------------
# Kernel 1: classification branch + fused channel-0 statistics.
#   Pointwise conv 3 -> 32, ReLU, global-sum-pool with w2 folded in early so
#   only CLS_OUT accumulator vregs stay live; channel-0 sum / sum-of-squares
#   accumulated as per-position (8,128) partials for the seg normalization.
#   Grid: (batch, pixel-tiles) = ("parallel", "arbitrary").
# ---------------------------------------------------------------------------
def _cls_kernel(x_ref, w1_ref, b1_ref, w2_ref, z_ref, stat_ref, *,
                n_chan, tile_rows):
    j = pl.program_id(1)

    @pl.when(j == 0)
    def _init():
        z_ref[...] = jnp.zeros_like(z_ref)
        stat_ref[...] = jnp.zeros_like(stat_ref)

    @pl.loop(0, tile_rows // CHUNK)
    def _chunk(ci):
        rs = pl.multiple_of(ci * CHUNK, CHUNK)
        xs = [x_ref[0, c, pl.ds(rs, CHUNK), :] for c in range(n_chan)]

        # fused statistics of channel 0 (the segmentation input)
        stat_ref[0, 0] = stat_ref[0, 0] + xs[0]
        stat_ref[0, 1] = stat_ref[0, 1] + xs[0] * xs[0]

        # hidden units one vreg at a time; never materialize (CLS_HID, tile)
        zacc = [jnp.zeros((CHUNK, LANES), jnp.float32) for _ in range(CLS_OUT)]
        for k in range(CLS_HID):
            h = jnp.zeros((CHUNK, LANES), jnp.float32) + b1_ref[k]
            for c in range(n_chan):
                h = h + xs[c] * w1_ref[k * n_chan + c]
            h = jnp.maximum(h, 0.0)
            for o in range(CLS_OUT):
                zacc[o] = zacc[o] + h * w2_ref[k * CLS_OUT + o]
        for o in range(CLS_OUT):
            z_ref[0, o] = z_ref[0, o] + zacc[o]


# ---------------------------------------------------------------------------
# Kernel 2: segmentation branch.
#   Fused (x - mean) * inv_std + per-pixel MLP 1 -> 32 -> 3 with the flip-TTA
#   batch mean folded in (w2 pre-scaled by 1/B, b2 added once).  Pixels stay
#   on lanes; every load and store is a full unmasked (8,128) vreg.
# ---------------------------------------------------------------------------
def _seg_kernel(stats_ref, x_ref, w1_ref, b1_ref, w2_ref, b2_ref, o_ref, *,
                n_batch, tile_rows):
    mean = stats_ref[0]
    inv = stats_ref[1]

    @pl.loop(0, tile_rows // CHUNK)
    def _chunk(ci):
        rs = pl.multiple_of(ci * CHUNK, CHUNK)
        acc = [jnp.zeros((CHUNK, LANES), jnp.float32) + b2_ref[c]
               for c in range(SEG_OUT)]
        for b in range(n_batch):
            xb = (x_ref[b, 0, pl.ds(rs, CHUNK), :] - mean) * inv
            for k in range(SEG_HID):
                h = jnp.maximum(xb * w1_ref[k] + b1_ref[k], 0.0)
                for c in range(SEG_OUT):
                    acc[c] = acc[c] + h * w2_ref[k * SEG_OUT + c]  # w2 already / B
        for c in range(SEG_OUT):
            o_ref[c, pl.ds(rs, CHUNK), :] = acc[c]


# ---------------------------------------------------------------------------
# IUGCNet.forward(inp, mode='inference')  (eval / TTA path)
# ---------------------------------------------------------------------------
def iugcnet_forward(inp, seg_params, cls_params):
    n_batch, n_chan, hh, ww = inp.shape
    n_pix = hh * ww

    w1s, b1s, w2s, b2s = seg_params          # (32,), (32,), (32,3), (3,)
    w1c, b1c, w2c, b2c = cls_params          # (32,3), (32,), (32,2), (2,)

    # ---- shared lane-dense pixel layout (single optional pad, no slicing) ----
    rows = pl.cdiv(n_pix, LANES)
    tile_rows = min(MAX_TILE_ROWS, _round_up(rows, CHUNK))
    rows_pad = _round_up(rows, tile_rows)
    pix_pad = rows_pad * LANES

    x = inp.reshape(n_batch, n_chan, n_pix)
    if pix_pad != n_pix:
        x = jnp.pad(x, ((0, 0), (0, 0), (0, pix_pad - n_pix)))
    x4 = x.reshape(n_batch, n_chan, rows_pad, LANES)
    n_tiles = rows_pad // tile_rows

    # ---- cls pass (IUGCNet.tta over nets[0]) + fused channel-0 statistics ----
    z_out, stat_out = pl.pallas_call(
        functools.partial(_cls_kernel, n_chan=n_chan, tile_rows=tile_rows),
        out_shape=(
            jax.ShapeDtypeStruct((n_batch, CLS_OUT, CHUNK, LANES), jnp.float32),
            jax.ShapeDtypeStruct((n_batch, 2, CHUNK, LANES), jnp.float32),
        ),
        grid=(n_batch, n_tiles),
        in_specs=[
            pl.BlockSpec((1, n_chan, tile_rows, LANES), lambda b, j: (b, 0, j, 0)),
            pl.BlockSpec(memory_space=pltpu.MemorySpace.SMEM),   # w1 flat (HID*C,)
            pl.BlockSpec(memory_space=pltpu.MemorySpace.SMEM),   # b1 (HID,)
            pl.BlockSpec(memory_space=pltpu.MemorySpace.SMEM),   # w2 flat (HID*OUT,)
        ],
        out_specs=(
            pl.BlockSpec((1, CLS_OUT, CHUNK, LANES), lambda b, j: (b, 0, 0, 0)),
            pl.BlockSpec((1, 2, CHUNK, LANES), lambda b, j: (b, 0, 0, 0)),
        ),
        compiler_params=pltpu.CompilerParams(
            dimension_semantics=("parallel", "arbitrary")),
    )(x4, w1c.reshape(-1), b1c, w2c.reshape(-1))

    # KB-sized finalizations stay in XLA.
    n_pad = pix_pad - n_pix
    z_sum = jnp.sum(z_out, axis=(2, 3))                           # (B, CLS_OUT)
    corr = jnp.float32(n_pad) * (jnp.maximum(b1c, 0.0) @ w2c)     # zero-pad -> relu(b1)
    logits = (z_sum - corr) / jnp.float32(n_pix) + b2c            # (B, CLS_OUT)
    out_cls = jnp.mean(logits, axis=0, keepdims=True)             # 2-way flip TTA == batch mean

    # global mean / unbiased std of channel 0 (torch x.mean(), x.std())
    n_true = float(n_batch * n_pix)
    s = jnp.sum(stat_out[:, 0])
    q = jnp.sum(stat_out[:, 1])
    mean = s / n_true
    var = (q - n_true * mean * mean) / max(n_true - 1.0, 1.0)
    inv = 1.0 / (jnp.sqrt(jnp.maximum(var, 0.0)) + 1e-6)
    stats = jnp.stack([mean, inv]).astype(jnp.float32)            # (2,) SMEM input

    # ---- seg pass (SmpNet.forward eval): normalize + MLP + 4-way TTA mean ----
    seg = pl.pallas_call(
        functools.partial(_seg_kernel, n_batch=n_batch, tile_rows=tile_rows),
        out_shape=jax.ShapeDtypeStruct((SEG_OUT, rows_pad, LANES), jnp.float32),
        grid=(n_tiles,),
        in_specs=[
            pl.BlockSpec(memory_space=pltpu.MemorySpace.SMEM),                   # stats (2,)
            pl.BlockSpec((n_batch, 1, tile_rows, LANES), lambda i: (0, 0, i, 0)),  # channel 0
            pl.BlockSpec(memory_space=pltpu.MemorySpace.SMEM),                   # w1 (HID,)
            pl.BlockSpec(memory_space=pltpu.MemorySpace.SMEM),                   # b1 (HID,)
            pl.BlockSpec(memory_space=pltpu.MemorySpace.SMEM),                   # w2/B flat
            pl.BlockSpec(memory_space=pltpu.MemorySpace.SMEM),                   # b2 (3,)
        ],
        out_specs=pl.BlockSpec((SEG_OUT, tile_rows, LANES), lambda i: (0, i, 0)),
        compiler_params=pltpu.CompilerParams(
            dimension_semantics=("parallel",)),
    )(stats, x4, w1s, b1s, (w2s / n_batch).reshape(-1), b2s)

    out_seg = seg.reshape(SEG_OUT, pix_pad)[:, :n_pix].reshape(SEG_OUT, hh, ww)[None]
    return out_cls, out_seg


# ---------------------------------------------------------------------------
# Deterministic parameter init (synthetic weights; no checkpoint loading)
# ---------------------------------------------------------------------------
def init_params(key):
    ks = jax.random.split(key, 8)
    seg_p = (
        jax.random.normal(ks[0], (SEG_HID,), jnp.float32) * 0.5,            # w1: 1->HID
        jax.random.normal(ks[1], (SEG_HID,), jnp.float32) * 0.1,            # b1
        jax.random.normal(ks[2], (SEG_HID, SEG_OUT), jnp.float32) * 0.2,    # w2
        jax.random.normal(ks[3], (SEG_OUT,), jnp.float32) * 0.1,            # b2
    )
    cls_p = (
        jax.random.normal(ks[4], (CLS_HID, 3), jnp.float32) * 0.3,          # w1
        jax.random.normal(ks[5], (CLS_HID,), jnp.float32) * 0.1,            # b1
        jax.random.normal(ks[6], (CLS_HID, CLS_OUT), jnp.float32) * 0.2,    # w2
        jax.random.normal(ks[7], (CLS_OUT,), jnp.float32) * 0.1,            # b2
    )
    return seg_p, cls_p


# Pure-JAX reference of the surrogate forward (correctness check only).
def _reference_forward(inp, seg_params, cls_params):
    w1s, b1s, w2s, b2s = seg_params
    w1c, b1c, w2c, b2c = cls_params
    nb, nc, hh, ww = inp.shape

    x0 = inp[:, 0].astype(jnp.float32)                        # (B, H, W)
    mean = x0.mean()
    std = jnp.std(x0, ddof=1)                                  # torch .std() is unbiased
    xn = (x0 - mean) / (std + 1e-6)
    h = jnp.maximum(xn[..., None] * w1s + b1s, 0.0)            # (B, H, W, HID)
    seg = h @ w2s + b2s                                        # (B, H, W, 3)
    out_seg = seg.mean(axis=0).transpose(2, 0, 1)[None]        # (1, 3, H, W)

    xc = inp.reshape(nb, nc, hh * ww).astype(jnp.float32)
    hc = jnp.maximum(jnp.einsum('kc,bcp->bkp', w1c, xc) + b1c[None, :, None], 0.0)
    pooled = hc.mean(axis=-1)                                  # (B, HID)
    logits = pooled @ w2c + b2c                                # (B, 2)
    out_cls = logits.mean(axis=0, keepdims=True)               # (1, 2)
    return out_cls, out_seg


if __name__ == "__main__":
    key = jax.random.PRNGKey(0)
    kx, kp = jax.random.split(key)
    inp = jax.random.normal(kx, (2, 3, 16, 16), jnp.float32)   # NCHW
    seg_params, cls_params = init_params(kp)

    fwd = jax.jit(iugcnet_forward)
    out_cls, out_seg = fwd(inp, seg_params, cls_params)
    jax.block_until_ready((out_cls, out_seg))

    assert out_cls.shape == (1, CLS_OUT)
    assert out_seg.shape == (1, SEG_OUT, 16, 16)
    assert bool(jnp.all(jnp.isfinite(out_cls)))
    assert bool(jnp.all(jnp.isfinite(out_seg)))

    ref_cls, ref_seg = _reference_forward(inp, seg_params, cls_params)
    assert float(jnp.max(jnp.abs(out_cls - ref_cls))) < 1e-3
    assert float(jnp.max(jnp.abs(out_seg - ref_seg))) < 1e-3

    print("KERNEL_OK")
</pallas_src>

<mosaic_0001>
module attributes {stable_mosaic.version = 11 : i64} {
  func.func @_cls_kernel(%arg0: i32, %arg1: i32, %arg2: memref<1x3x8x128xf32, #tpu.memory_space<vmem>>, %arg3: memref<96xf32, #tpu.memory_space<smem>>, %arg4: memref<32xf32, #tpu.memory_space<smem>>, %arg5: memref<64xf32, #tpu.memory_space<smem>>, %arg6: memref<1x2x8x128xf32, #tpu.memory_space<vmem>>, %arg7: memref<1x2x8x128xf32, #tpu.memory_space<vmem>>) attributes {dimension_semantics = [#tpu.dimension_semantics<parallel>, #tpu.dimension_semantics<arbitrary>], iteration_bounds = array<i64: 2, 1>, scalar_prefetch = 0 : i64, scratch_operands = 0 : i64, tpu.core_type = #tpu.core_type<tc>, window_params = [{transform_indices = @transform_0, window_bounds = array<i64: 1, 3, 8, 128>}, {transform_indices = @transform_1, window_bounds = array<i64: 96>}, {transform_indices = @transform_2, window_bounds = array<i64: 32>}, {transform_indices = @transform_3, window_bounds = array<i64: 64>}, {transform_indices = @transform_4, window_bounds = array<i64: 1, 2, 8, 128>}, {transform_indices = @transform_5, window_bounds = array<i64: 1, 2, 8, 128>}]} {
    %c0_i32 = arith.constant 0 : i32
    %0 = arith.cmpi eq, %arg1, %c0_i32 : i32
    %1 = arith.extui %0 : i1 to i32
    %c0_i32_0 = arith.constant 0 : i32
    %2 = arith.cmpi ne, %1, %c0_i32_0 : i32
    scf.if %2 {
      %cst_206 = arith.constant 0.000000e+00 : f32
      %875 = vector.broadcast %cst_206 : f32 to vector<1x2x8x128xf32>
      %c0_207 = arith.constant 0 : index
      %c0_208 = arith.constant 0 : index
      %c0_209 = arith.constant 0 : index
      %c0_210 = arith.constant 0 : index
      %876 = vector.load %arg6[%c0_207, %c0_208, %c0_209, %c0_210] : memref<1x2x8x128xf32, #tpu.memory_space<vmem>>, vector<1x2x8x128xf32>
      tpu.vector_store %arg6[%c0_207, %c0_208, %c0_209, %c0_210], %875 {strides = array<i32>} : memref<1x2x8x128xf32, #tpu.memory_space<vmem>>, vector<1x2x8x128xf32>,
      %cst_211 = arith.constant 0.000000e+00 : f32
      %877 = vector.broadcast %cst_211 : f32 to vector<1x2x8x128xf32>
      %c0_212 = arith.constant 0 : index
      %c0_213 = arith.constant 0 : index
      %c0_214 = arith.constant 0 : index
      %c0_215 = arith.constant 0 : index
      %878 = vector.load %arg7[%c0_212, %c0_213, %c0_214, %c0_215] : memref<1x2x8x128xf32, #tpu.memory_space<vmem>>, vector<1x2x8x128xf32>
      tpu.vector_store %arg7[%c0_212, %c0_213, %c0_214, %c0_215], %877 {strides = array<i32>} : memref<1x2x8x128xf32, #tpu.memory_space<vmem>>, vector<1x2x8x128xf32>,
    } else {
    }
    %c0_i32_1 = arith.constant 0 : i32
    %c1_i32 = arith.constant 1 : i32
    %3 = arith.muli %c0_i32_1, %c1_i32 : i32
    %c0_i32_2 = arith.constant 0 : i32
    %4 = arith.addi %c0_i32_2, %3 : i32
    %c8_i32 = arith.constant 8 : i32
    %5 = arith.muli %4, %c8_i32 : i32
    %6 = tpu.assume_multiple %5, 8 : i32
    %c0 = arith.constant 0 : index
    %c0_3 = arith.constant 0 : index
    %7 = arith.index_cast %6 : i32 to index
    %c0_4 = arith.constant 0 : index
    %8 = vector.load %arg2[%c0, %c0_3, %7, %c0_4] : memref<1x3x8x128xf32, #tpu.memory_space<vmem>>, vector<1x1x8x128xf32>
    %9 = vector.shape_cast %8 : vector<1x1x8x128xf32> to vector<8x128xf32>
    %c0_5 = arith.constant 0 : index
    %c1 = arith.constant 1 : index
    %10 = arith.index_cast %6 : i32 to index
    %c0_6 = arith.constant 0 : index
    %11 = vector.load %arg2[%c0_5, %c1, %10, %c0_6] : memref<1x3x8x128xf32, #tpu.memory_space<vmem>>, vector<1x1x8x128xf32>
    %12 = vector.shape_cast %11 : vector<1x1x8x128xf32> to vector<8x128xf32>
    %c0_7 = arith.constant 0 : index
    %c2 = arith.constant 2 : index
    %13 = arith.index_cast %6 : i32 to index
    %c0_8 = arith.constant 0 : index
    %14 = vector.load %arg2[%c0_7, %c2, %13, %c0_8] : memref<1x3x8x128xf32, #tpu.memory_space<vmem>>, vector<1x1x8x128xf32>
    %15 = vector.shape_cast %14 : vector<1x1x8x128xf32> to vector<8x128xf32>
    %c0_9 = arith.constant 0 : index
    %c0_10 = arith.constant 0 : index
    %c0_11 = arith.constant 0 : index
    %c0_12 = arith.constant 0 : index
    %16 = vector.load %arg7[%c0_9, %c0_10, %c0_11, %c0_12] : memref<1x2x8x128xf32, #tpu.memory_space<vmem>>, vector<1x1x8x128xf32>
    %17 = vector.shape_cast %16 : vector<1x1x8x128xf32> to vector<8x128xf32>
    %18 = arith.addf %17, %9 : vector<8x128xf32>
    %c0_13 = arith.constant 0 : index
    %c0_14 = arith.constant 0 : index
    %c0_15 = arith.constant 0 : index
    %c0_16 = arith.constant 0 : index
    %19 = vector.load %arg7[%c0_13, %c0_14, %c0_15, %c0_16] : memref<1x2x8x128xf32, #tpu.memory_space<vmem>>, vector<1x1x8x128xf32>
    %20 = vector.shape_cast %19 : vector<1x1x8x128xf32> to vector<8x128xf32>
    %21 = vector.shape_cast %18 : vector<8x128xf32> to vector<1x1x8x128xf32>
    tpu.vector_store %arg7[%c0_13, %c0_14, %c0_15, %c0_16], %21 {strides = array<i32>} : memref<1x2x8x128xf32, #tpu.memory_space<vmem>>, vector<1x1x8x128xf32>,
    %c0_17 = arith.constant 0 : index
    %c1_18 = arith.constant 1 : index
    %c0_19 = arith.constant 0 : index
    %c0_20 = arith.constant 0 : index
    %22 = vector.load %arg7[%c0_17, %c1_18, %c0_19, %c0_20] : memref<1x2x8x128xf32, #tpu.memory_space<vmem>>, vector<1x1x8x128xf32>
    %23 = vector.shape_cast %22 : vector<1x1x8x128xf32> to vector<8x128xf32>
    %24 = arith.mulf %9, %9 : vector<8x128xf32>
    %25 = arith.addf %23, %24 : vector<8x128xf32>
    %c0_21 = arith.constant 0 : index
    %c1_22 = arith.constant 1 : index
    %c0_23 = arith.constant 0 : index
    %c0_24 = arith.constant 0 : index
    %26 = vector.load %arg7[%c0_21, %c1_22, %c0_23, %c0_24] : memref<1x2x8x128xf32, #tpu.memory_space<vmem>>, vector<1x1x8x128xf32>
    %27 = vector.shape_cast %26 : vector<1x1x8x128xf32> to vector<8x128xf32>
    %28 = vector.shape_cast %25 : vector<8x128xf32> to vector<1x1x8x128xf32>
    tpu.vector_store %arg7[%c0_21, %c1_22, %c0_23, %c0_24], %28 {strides = array<i32>} : memref<1x2x8x128xf32, #tpu.memory_space<vmem>>, vector<1x1x8x128xf32>,
    %cst = arith.constant 0.000000e+00 : f32
    %29 = vector.broadcast %cst : f32 to vector<8x128xf32>
    %cst_25 = arith.constant 0.000000e+00 : f32
    %30 = vector.broadcast %cst_25 : f32 to vector<8x128xf32>
    %cst_26 = arith.constant 0.000000e+00 : f32
    %31 = vector.broadcast %cst_26 : f32 to vector<8x128xf32>
    %c0_27 = arith.constant 0 : index
    %32 = memref.load %arg4[%c0_27] : memref<32xf32, #tpu.memory_space<smem>>
    %33 = vector.broadcast %32 : f32 to vector<8x128xf32>
    %34 = arith.addf %31, %33 : vector<8x128xf32>
    %c0_28 = arith.constant 0 : index
    %35 = memref.load %arg3[%c0_28] : memref<96xf32, #tpu.memory_space<smem>>
    %36 = vector.broadcast %35 : f32 to vector<8x128xf32>
    %37 = arith.mulf %9, %36 : vector<8x128xf32>
    %38 = arith.addf %34, %37 : vector<8x128xf32>
    %c1_29 = arith.constant 1 : index
    %39 = memref.load %arg3[%c1_29] : memref<96xf32, #tpu.memory_space<smem>>
    %40 = vector.broadcast %39 : f32 to vector<8x128xf32>
    %41 = arith.mulf %12, %40 : vector<8x128xf32>
    %42 = arith.addf %38, %41 : vector<8x128xf32>
    %c2_30 = arith.constant 2 : index
    %43 = memref.load %arg3[%c2_30] : memref<96xf32, #tpu.memory_space<smem>>
    %44 = vector.broadcast %43 : f32 to vector<8x128xf32>
    %45 = arith.mulf %15, %44 : vector<8x128xf32>
    %46 = arith.addf %42, %45 : vector<8x128xf32>
    %cst_31 = arith.constant 0.000000e+00 : f32
    %47 = vector.broadcast %cst_31 : f32 to vector<8x128xf32>
    %48 = arith.maximumf %46, %47 : vector<8x128xf32>
    %c0_32 = arith.constant 0 : index
    %49 = memref.load %arg5[%c0_32] : memref<64xf32, #tpu.memory_space<smem>>
    %50 = vector.broadcast %49 : f32 to vector<8x128xf32>
    %51 = arith.mulf %48, %50 : vector<8x128xf32>
    %52 = arith.addf %29, %51 : vector<8x128xf32>
    %c1_33 = arith.constant 1 : index
    %53 = memref.load %arg5[%c1_33] : memref<64xf32, #tpu.memory_space<smem>>
    %54 = vector.broadcast %53 : f32 to vector<8x128xf32>
    %55 = arith.mulf %48, %54 : vector<8x128xf32>
    %56 = arith.addf %30, %55 : vector<8x128xf32>
    %cst_34 = arith.constant 0.000000e+00 : f32
    %57 = vector.broadcast %cst_34 : f32 to vector<8x128xf32>
    %c1_35 = arith.constant 1 : index
    %58 = memref.load %arg4[%c1_35] : memref<32xf32, #tpu.memory_space<smem>>
    %59 = vector.broadcast %58 : f32 to vector<8x128xf32>
    %60 = arith.addf %57, %59 : vector<8x128xf32>
    %c3 = arith.constant 3 : index
    %61 = memref.load %arg3[%c3] : memref<96xf32, #tpu.memory_space<smem>>
    %62 = vector.broadcast %61 : f32 to vector<8x128xf32>
    %63 = arith.mulf %9, %62 : vector<8x128xf32>
    %64 = arith.addf %60, %63 : vector<8x128xf32>
    %c4 = arith.constant 4 : index
    %65 = memref.load %arg3[%c4] : memref<96xf32, #tpu.memory_space<smem>>
    %66 = vector.broadcast %65 : f32 to vector<8x128xf32>
    %67 = arith.mulf %12, %66 : vector<8x128xf32>
    %68 = arith.addf %64, %67 : vector<8x128xf32>
    %c5 = arith.constant 5 : index
    %69 = memref.load %arg3[%c5] : memref<96xf32, #tpu.memory_space<smem>>
    %70 = vector.broadcast %69 : f32 to vector<8x128xf32>
    %71 = arith.mulf %15, %70 : vector<8x128xf32>
    %72 = arith.addf %68, %71 : vector<8x128xf32>
    %cst_36 = arith.constant 0.000000e+00 : f32
    %73 = vector.broadcast %cst_36 : f32 to vector<8x128xf32>
    %74 = arith.maximumf %72, %73 : vector<8x128xf32>
    %c2_37 = arith.constant 2 : index
    %75 = memref.load %arg5[%c2_37] : memref<64xf32, #tpu.memory_space<smem>>
    %76 = vector.broadcast %75 : f32 to vector<8x128xf32>
    %77 = arith.mulf %74, %76 : vector<8x128xf32>
    %78 = arith.addf %52, %77 : vector<8x128xf32>
    %c3_38 = arith.constant 3 : index
    %79 = memref.load %arg5[%c3_38] : memref<64xf32, #tpu.memory_space<smem>>
    %80 = vector.broadcast %79 : f32 to vector<8x128xf32>
    %81 = arith.mulf %74, %80 : vector<8x128xf32>
    %82 = arith.addf %56, %81 : vector<8x128xf32>
    %cst_39 = arith.constant 0.000000e+00 : f32
    %83 = vector.broadcast %cst_39 : f32 to vector<8x128xf32>
    %c2_40 = arith.constant 2 : index
    %84 = memref.load %arg4[%c2_40] : memref<32xf32, #tpu.memory_space<smem>>
    %85 = vector.broadcast %84 : f32 to vector<8x128xf32>
    %86 = arith.addf %83, %85 : vector<8x128xf32>
    %c6 = arith.constant 6 : index
    %87 = memref.load %arg3[%c6] : memref<96xf32, #tpu.memory_space<smem>>
    %88 = vector.broadcast %87 : f32 to vector<8x128xf32>
    %89 = arith.mulf %9, %88 : vector<8x128xf32>
    %90 = arith.addf %86, %89 : vector<8x128xf32>
    %c7 = arith.constant 7 : index
    %91 = memref.load %arg3[%c7] : memref<96xf32, #tpu.memory_space<smem>>
    %92 = vector.broadcast %91 : f32 to vector<8x128xf32>
    %93 = arith.mulf %12, %92 : vector<8x128xf32>
    %94 = arith.addf %90, %93 : vector<8x128xf32>
    %c8 = arith.constant 8 : index
    %95 = memref.load %arg3[%c8] : memref<96xf32, #tpu.memory_space<smem>>
    %96 = vector.broadcast %95 : f32 to vector<8x128xf32>
    %97 = arith.mulf %15, %96 : vector<8x128xf32>
    %98 = arith.addf %94, %97 : vector<8x128xf32>
    %cst_41 = arith.constant 0.000000e+00 : f32
    %99 = vector.broadcast %cst_41 : f32 to vector<8x128xf32>
    %100 = arith.maximumf %98, %99 : vector<8x128xf32>
    %c4_42 = arith.constant 4 : index
    %101 = memref.load %arg5[%c4_42] : memref<64xf32, #tpu.memory_space<smem>>
    %102 = vector.broadcast %101 : f32 to vector<8x128xf32>
    %103 = arith.mulf %100, %102 : vector<8x128xf32>
    %104 = arith.addf %78, %103 : vector<8x128xf32>
    %c5_43 = arith.constant 5 : index
    %105 = memref.load %arg5[%c5_43] : memref<64xf32, #tpu.memory_space<smem>>
    %106 = vector.broadcast %105 : f32 to vector<8x128xf32>
    %107 = arith.mulf %100, %106 : vector<8x128xf32>
    %108 = arith.addf %82, %107 : vector<8x128xf32>
    %cst_44 = arith.constant 0.000000e+00 : f32
    %109 = vector.broadcast %cst_44 : f32 to vector<8x128xf32>
    %c3_45 = arith.constant 3 : index
    %110 = memref.load %arg4[%c3_45] : memref<32xf32, #tpu.memory_space<smem>>
    %111 = vector.broadcast %110 : f32 to vector<8x128xf32>
    %112 = arith.addf %109, %111 : vector<8x128xf32>
    %c9 = arith.constant 9 : index
    %113 = memref.load %arg3[%c9] : memref<96xf32, #tpu.memory_space<smem>>
    %114 = vector.broadcast %113 : f32 to vector<8x128xf32>
    %115 = arith.mulf %9, %114 : vector<8x128xf32>
    %116 = arith.addf %112, %115 : vector<8x128xf32>
    %c10 = arith.constant 10 : index
    %117 = memref.load %arg3[%c10] : memref<96xf32, #tpu.memory_space<smem>>
    %118 = vector.broadcast %117 : f32 to vector<8x128xf32>
    %119 = arith.mulf %12, %118 : vector<8x128xf32>
    %120 = arith.addf %116, %119 : vector<8x128xf32>
    %c11 = arith.constant 11 : index
    %121 = memref.load %arg3[%c11] : memref<96xf32, #tpu.memory_space<smem>>
    %122 = vector.broadcast %121 : f32 to vector<8x128xf32>
    %123 = arith.mulf %15, %122 : vector<8x128xf32>
    %124 = arith.addf %120, %123 : vector<8x128xf32>
    %cst_46 = arith.constant 0.000000e+00 : f32
    %125 = vector.broadcast %cst_46 : f32 to vector<8x128xf32>
    %126 = arith.maximumf %124, %125 : vector<8x128xf32>
    %c6_47 = arith.constant 6 : index
    %127 = memref.load %arg5[%c6_47] : memref<64xf32, #tpu.memory_space<smem>>
    %128 = vector.broadcast %127 : f32 to vector<8x128xf32>
    %129 = arith.mulf %126, %128 : vector<8x128xf32>
    %130 = arith.addf %104, %129 : vector<8x128xf32>
    %c7_48 = arith.constant 7 : index
    %131 = memref.load %arg5[%c7_48] : memref<64xf32, #tpu.memory_space<smem>>
    %132 = vector.broadcast %131 : f32 to vector<8x128xf32>
    %133 = arith.mulf %126, %132 : vector<8x128xf32>
    %134 = arith.addf %108, %133 : vector<8x128xf32>
    %cst_49 = arith.constant 0.000000e+00 : f32
    %135 = vector.broadcast %cst_49 : f32 to vector<8x128xf32>
    %c4_50 = arith.constant 4 : index
    %136 = memref.load %arg4[%c4_50] : memref<32xf32, #tpu.memory_space<smem>>
    %137 = vector.broadcast %136 : f32 to vector<8x128xf32>
    %138 = arith.addf %135, %137 : vector<8x128xf32>
    %c12 = arith.constant 12 : index
    %139 = memref.load %arg3[%c12] : memref<96xf32, #tpu.memory_space<smem>>
    %140 = vector.broadcast %139 : f32 to vector<8x128xf32>
    %141 = arith.mulf %9, %140 : vector<8x128xf32>
    %142 = arith.addf %138, %141 : vector<8x128xf32>
    %c13 = arith.constant 13 : index
    %143 = memref.load %arg3[%c13] : memref<96xf32, #tpu.memory_space<smem>>
    %144 = vector.broadcast %143 : f32 to vector<8x128xf32>
    %145 = arith.mulf %12, %144 : vector<8x128xf32>
    %146 = arith.addf %142, %145 : vector<8x128xf32>
    %c14 = arith.constant 14 : index
    %147 = memref.load %arg3[%c14] : memref<96xf32, #tpu.memory_space<smem>>
    %148 = vector.broadcast %147 : f32 to vector<8x128xf32>
    %149 = arith.mulf %15, %148 : vector<8x128xf32>
    %150 = arith.addf %146, %149 : vector<8x128xf32>
    %cst_51 = arith.constant 0.000000e+00 : f32
    %151 = vector.broadcast %cst_51 : f32 to vector<8x128xf32>
    %152 = arith.maximumf %150, %151 : vector<8x128xf32>
    %c8_52 = arith.constant 8 : index
    %153 = memref.load %arg5[%c8_52] : memref<64xf32, #tpu.memory_space<smem>>
    %154 = vector.broadcast %153 : f32 to vector<8x128xf32>
    %155 = arith.mulf %152, %154 : vector<8x128xf32>
    %156 = arith.addf %130, %155 : vector<8x128xf32>
    %c9_53 = arith.constant 9 : index
    %157 = memref.load %arg5[%c9_53] : memref<64xf32, #tpu.memory_space<smem>>
    %158 = vector.broadcast %157 : f32 to vector<8x128xf32>
    %159 = arith.mulf %152, %158 : vector<8x128xf32>
    %160 = arith.addf %134, %159 : vector<8x128xf32>
    %cst_54 = arith.constant 0.000000e+00 : f32
    %161 = vector.broadcast %cst_54 : f32 to vector<8x128xf32>
    %c5_55 = arith.constant 5 : index
    %162 = memref.load %arg4[%c5_55] : memref<32xf32, #tpu.memory_space<smem>>
    %163 = vector.broadcast %162 : f32 to vector<8x128xf32>
    %164 = arith.addf %161, %163 : vector<8x128xf32>
    %c15 = arith.constant 15 : index
    %165 = memref.load %arg3[%c15] : memref<96xf32, #tpu.memory_space<smem>>
    %166 = vector.broadcast %165 : f32 to vector<8x128xf32>
    %167 = arith.mulf %9, %166 : vector<8x128xf32>
    %168 = arith.addf %164, %167 : vector<8x128xf32>
    %c16 = arith.constant 16 : index
    %169 = memref.load %arg3[%c16] : memref<96xf32, #tpu.memory_space<smem>>
    %170 = vector.broadcast %169 : f32 to vector<8x128xf32>
    %171 = arith.mulf %12, %170 : vector<8x128xf32>
    %172 = arith.addf %168, %171 : vector<8x128xf32>
    %c17 = arith.constant 17 : index
    %173 = memref.load %arg3[%c17] : memref<96xf32, #tpu.memory_space<smem>>
    %174 = vector.broadcast %173 : f32 to vector<8x128xf32>
    %175 = arith.mulf %15, %174 : vector<8x128xf32>
    %176 = arith.addf %172, %175 : vector<8x128xf32>
    %cst_56 = arith.constant 0.000000e+00 : f32
    %177 = vector.broadcast %cst_56 : f32 to vector<8x128xf32>
    %178 = arith.maximumf %176, %177 : vector<8x128xf32>
    %c10_57 = arith.constant 10 : index
    %179 = memref.load %arg5[%c10_57] : memref<64xf32, #tpu.memory_space<smem>>
    %180 = vector.broadcast %179 : f32 to vector<8x128xf32>
    %181 = arith.mulf %178, %180 : vector<8x128xf32>
    %182 = arith.addf %156, %181 : vector<8x128xf32>
    %c11_58 = arith.constant 11 : index
    %183 = memref.load %arg5[%c11_58] : memref<64xf32, #tpu.memory_space<smem>>
    %184 = vector.broadcast %183 : f32 to vector<8x128xf32>
    %185 = arith.mulf %178, %184 : vector<8x128xf32>
    %186 = arith.addf %160, %185 : vector<8x128xf32>
    %cst_59 = arith.constant 0.000000e+00 : f32
    %187 = vector.broadcast %cst_59 : f32 to vector<8x128xf32>
    %c6_60 = arith.constant 6 : index
    %188 = memref.load %arg4[%c6_60] : memref<32xf32, #tpu.memory_space<smem>>
    %189 = vector.broadcast %188 : f32 to vector<8x128xf32>
    %190 = arith.addf %187, %189 : vector<8x128xf32>
    %c18 = arith.constant 18 : index
    %191 = memref.load %arg3[%c18] : memref<96xf32, #tpu.memory_space<smem>>
    %192 = vector.broadcast %191 : f32 to vector<8x128xf32>
    %193 = arith.mulf %9, %192 : vector<8x128xf32>
    %194 = arith.addf %190, %193 : vector<8x128xf32>
    %c19 = arith.constant 19 : index
    %195 = memref.load %arg3[%c19] : memref<96xf32, #tpu.memory_space<smem>>
    %196 = vector.broadcast %195 : f32 to vector<8x128xf32>
    %197 = arith.mulf %12, %196 : vector<8x128xf32>
    %198 = arith.addf %194, %197 : vector<8x128xf32>
    %c20 = arith.constant 20 : index
    %199 = memref.load %arg3[%c20] : memref<96xf32, #tpu.memory_space<smem>>
    %200 = vector.broadcast %199 : f32 to vector<8x128xf32>
    %201 = arith.mulf %15, %200 : vector<8x128xf32>
    %202 = arith.addf %198, %201 : vector<8x128xf32>
    %cst_61 = arith.constant 0.000000e+00 : f32
    %203 = vector.broadcast %cst_61 : f32 to vector<8x128xf32>
    %204 = arith.maximumf %202, %203 : vector<8x128xf32>
    %c12_62 = arith.constant 12 : index
    %205 = memref.load %arg5[%c12_62] : memref<64xf32, #tpu.memory_space<smem>>
    %206 = vector.broadcast %205 : f32 to vector<8x128xf32>
    %207 = arith.mulf %204, %206 : vector<8x128xf32>
    %208 = arith.addf %182, %207 : vector<8x128xf32>
    %c13_63 = arith.constant 13 : index
    %209 = memref.load %arg5[%c13_63] : memref<64xf32, #tpu.memory_space<smem>>
    %210 = vector.broadcast %209 : f32 to vector<8x128xf32>
    %211 = arith.mulf %204, %210 : vector<8x128xf32>
    %212 = arith.addf %186, %211 : vector<8x128xf32>
    %cst_64 = arith.constant 0.000000e+00 : f32
    %213 = vector.broadcast %cst_64 : f32 to vector<8x128xf32>
    %c7_65 = arith.constant 7 : index
    %214 = memref.load %arg4[%c7_65] : memref<32xf32, #tpu.memory_space<smem>>
    %215 = vector.broadcast %214 : f32 to vector<8x128xf32>
    %216 = arith.addf %213, %215 : vector<8x128xf32>
    %c21 = arith.constant 21 : index
    %217 = memref.load %arg3[%c21] : memref<96xf32, #tpu.memory_space<smem>>
    %218 = vector.broadcast %217 : f32 to vector<8x128xf32>
    %219 = arith.mulf %9, %218 : vector<8x128xf32>
    %220 = arith.addf %216, %219 : vector<8x128xf32>
    %c22 = arith.constant 22 : index
    %221 = memref.load %arg3[%c22] : memref<96xf32, #tpu.memory_space<smem>>
    %222 = vector.broadcast %221 : f32 to vector<8x128xf32>
    %223 = arith.mulf %12, %222 : vector<8x128xf32>
    %224 = arith.addf %220, %223 : vector<8x128xf32>
    %c23 = arith.constant 23 : index
    %225 = memref.load %arg3[%c23] : memref<96xf32, #tpu.memory_space<smem>>
    %226 = vector.broadcast %225 : f32 to vector<8x128xf32>
    %227 = arith.mulf %15, %226 : vector<8x128xf32>
    %228 = arith.addf %224, %227 : vector<8x128xf32>
    %cst_66 = arith.constant 0.000000e+00 : f32
    %229 = vector.broadcast %cst_66 : f32 to vector<8x128xf32>
    %230 = arith.maximumf %228, %229 : vector<8x128xf32>
    %c14_67 = arith.constant 14 : index
    %231 = memref.load %arg5[%c14_67] : memref<64xf32, #tpu.memory_space<smem>>
    %232 = vector.broadcast %231 : f32 to vector<8x128xf32>
    %233 = arith.mulf %230, %232 : vector<8x128xf32>
    %234 = arith.addf %208, %233 : vector<8x128xf32>
    %c15_68 = arith.constant 15 : index
    %235 = memref.load %arg5[%c15_68] : memref<64xf32, #tpu.memory_space<smem>>
    %236 = vector.broadcast %235 : f32 to vector<8x128xf32>
    %237 = arith.mulf %230, %236 : vector<8x128xf32>
    %238 = arith.addf %212, %237 : vector<8x128xf32>
    %cst_69 = arith.constant 0.000000e+00 : f32
    %239 = vector.broadcast %cst_69 : f32 to vector<8x128xf32>
    %c8_70 = arith.constant 8 : index
    %240 = memref.load %arg4[%c8_70] : memref<32xf32, #tpu.memory_space<smem>>
    %241 = vector.broadcast %240 : f32 to vector<8x128xf32>
    %242 = arith.addf %239, %241 : vector<8x128xf32>
    %c24 = arith.constant 24 : index
    %243 = memref.load %arg3[%c24] : memref<96xf32, #tpu.memory_space<smem>>
    %244 = vector.broadcast %243 : f32 to vector<8x128xf32>
    %245 = arith.mulf %9, %244 : vector<8x128xf32>
    %246 = arith.addf %242, %245 : vector<8x128xf32>
    %c25 = arith.constant 25 : index
    %247 = memref.load %arg3[%c25] : memref<96xf32, #tpu.memory_space<smem>>
    %248 = vector.broadcast %247 : f32 to vector<8x128xf32>
    %249 = arith.mulf %12, %248 : vector<8x128xf32>
    %250 = arith.addf %246, %249 : vector<8x128xf32>
    %c26 = arith.constant 26 : index
    %251 = memref.load %arg3[%c26] : memref<96xf32, #tpu.memory_space<smem>>
    %252 = vector.broadcast %251 : f32 to vector<8x128xf32>
    %253 = arith.mulf %15, %252 : vector<8x128xf32>
    %254 = arith.addf %250, %253 : vector<8x128xf32>
    %cst_71 = arith.constant 0.000000e+00 : f32
    %255 = vector.broadcast %cst_71 : f32 to vector<8x128xf32>
    %256 = arith.maximumf %254, %255 : vector<8x128xf32>
    %c16_72 = arith.constant 16 : index
    %257 = memref.load %arg5[%c16_72] : memref<64xf32, #tpu.memory_space<smem>>
    %258 = vector.broadcast %257 : f32 to vector<8x128xf32>
    %259 = arith.mulf %256, %258 : vector<8x128xf32>
    %260 = arith.addf %234, %259 : vector<8x128xf32>
    %c17_73 = arith.constant 17 : index
    %261 = memref.load %arg5[%c17_73] : memref<64xf32, #tpu.memory_space<smem>>
    %262 = vector.broadcast %261 : f32 to vector<8x128xf32>
    %263 = arith.mulf %256, %262 : vector<8x128xf32>
    %264 = arith.addf %238, %263 : vector<8x128xf32>
    %cst_74 = arith.constant 0.000000e+00 : f32
    %265 = vector.broadcast %cst_74 : f32 to vector<8x128xf32>
    %c9_75 = arith.constant 9 : index
    %266 = memref.load %arg4[%c9_75] : memref<32xf32, #tpu.memory_space<smem>>
    %267 = vector.broadcast %266 : f32 to vector<8x128xf32>
    %268 = arith.addf %265, %267 : vector<8x128xf32>
    %c27 = arith.constant 27 : index
    %269 = memref.load %arg3[%c27] : memref<96xf32, #tpu.memory_space<smem>>
    %270 = vector.broadcast %269 : f32 to vector<8x128xf32>
    %271 = arith.mulf %9, %270 : vector<8x128xf32>
    %272 = arith.addf %268, %271 : vector<8x128xf32>
    %c28 = arith.constant 28 : index
    %273 = memref.load %arg3[%c28] : memref<96xf32, #tpu.memory_space<smem>>
    %274 = vector.broadcast %273 : f32 to vector<8x128xf32>
    %275 = arith.mulf %12, %274 : vector<8x128xf32>
    %276 = arith.addf %272, %275 : vector<8x128xf32>
    %c29 = arith.constant 29 : index
    %277 = memref.load %arg3[%c29] : memref<96xf32, #tpu.memory_space<smem>>
    %278 = vector.broadcast %277 : f32 to vector<8x128xf32>
    %279 = arith.mulf %15, %278 : vector<8x128xf32>
    %280 = arith.addf %276, %279 : vector<8x128xf32>
    %cst_76 = arith.constant 0.000000e+00 : f32
    %281 = vector.broadcast %cst_76 : f32 to vector<8x128xf32>
    %282 = arith.maximumf %280, %281 : vector<8x128xf32>
    %c18_77 = arith.constant 18 : index
    %283 = memref.load %arg5[%c18_77] : memref<64xf32, #tpu.memory_space<smem>>
    %284 = vector.broadcast %283 : f32 to vector<8x128xf32>
    %285 = arith.mulf %282, %284 : vector<8x128xf32>
    %286 = arith.addf %260, %285 : vector<8x128xf32>
    %c19_78 = arith.constant 19 : index
    %287 = memref.load %arg5[%c19_78] : memref<64xf32, #tpu.memory_space<smem>>
    %288 = vector.broadcast %287 : f32 to vector<8x128xf32>
    %289 = arith.mulf %282, %288 : vector<8x128xf32>
    %290 = arith.addf %264, %289 : vector<8x128xf32>
    %cst_79 = arith.constant 0.000000e+00 : f32
    %291 = vector.broadcast %cst_79 : f32 to vector<8x128xf32>
    %c10_80 = arith.constant 10 : index
    %292 = memref.load %arg4[%c10_80] : memref<32xf32, #tpu.memory_space<smem>>
    %293 = vector.broadcast %292 : f32 to vector<8x128xf32>
    %294 = arith.addf %291, %293 : vector<8x128xf32>
    %c30 = arith.constant 30 : index
    %295 = memref.load %arg3[%c30] : memref<96xf32, #tpu.memory_space<smem>>
    %296 = vector.broadcast %295 : f32 to vector<8x128xf32>
    %297 = arith.mulf %9, %296 : vector<8x128xf32>
    %298 = arith.addf %294, %297 : vector<8x128xf32>
    %c31 = arith.constant 31 : index
    %299 = memref.load %arg3[%c31] : memref<96xf32, #tpu.memory_space<smem>>
    %300 = vector.broadcast %299 : f32 to vector<8x128xf32>
    %301 = arith.mulf %12, %300 : vector<8x128xf32>
    %302 = arith.addf %298, %301 : vector<8x128xf32>
    %c32 = arith.constant 32 : index
    %303 = memref.load %arg3[%c32] : memref<96xf32, #tpu.memory_space<smem>>
    %304 = vector.broadcast %303 : f32 to vector<8x128xf32>
    %305 = arith.mulf %15, %304 : vector<8x128xf32>
    %306 = arith.addf %302, %305 : vector<8x128xf32>
    %cst_81 = arith.constant 0.000000e+00 : f32
    %307 = vector.broadcast %cst_81 : f32 to vector<8x128xf32>
    %308 = arith.maximumf %306, %307 : vector<8x128xf32>
    %c20_82 = arith.constant 20 : index
    %309 = memref.load %arg5[%c20_82] : memref<64xf32, #tpu.memory_space<smem>>
    %310 = vector.broadcast %309 : f32 to vector<8x128xf32>
    %311 = arith.mulf %308, %310 : vector<8x128xf32>
    %312 = arith.addf %286, %311 : vector<8x128xf32>
    %c21_83 = arith.constant 21 : index
    %313 = memref.load %arg5[%c21_83] : memref<64xf32, #tpu.memory_space<smem>>
    %314 = vector.broadcast %313 : f32 to vector<8x128xf32>
    %315 = arith.mulf %308, %314 : vector<8x128xf32>
    %316 = arith.addf %290, %315 : vector<8x128xf32>
    %cst_84 = arith.constant 0.000000e+00 : f32
    %317 = vector.broadcast %cst_84 : f32 to vector<8x128xf32>
    %c11_85 = arith.constant 11 : index
    %318 = memref.load %arg4[%c11_85] : memref<32xf32, #tpu.memory_space<smem>>
    %319 = vector.broadcast %318 : f32 to vector<8x128xf32>
    %320 = arith.addf %317, %319 : vector<8x128xf32>
    %c33 = arith.constant 33 : index
    %321 = memref.load %arg3[%c33] : memref<96xf32, #tpu.memory_space<smem>>
    %322 = vector.broadcast %321 : f32 to vector<8x128xf32>
    %323 = arith.mulf %9, %322 : vector<8x128xf32>
    %324 = arith.addf %320, %323 : vector<8x128xf32>
    %c34 = arith.constant 34 : index
    %325 = memref.load %arg3[%c34] : memref<96xf32, #tpu.memory_space<smem>>
    %326 = vector.broadcast %325 : f32 to vector<8x128xf32>
    %327 = arith.mulf %12, %326 : vector<8x128xf32>
    %328 = arith.addf %324, %327 : vector<8x128xf32>
    %c35 = arith.constant 35 : index
    %329 = memref.load %arg3[%c35] : memref<96xf32, #tpu.memory_space<smem>>
    %330 = vector.broadcast %329 : f32 to vector<8x128xf32>
    %331 = arith.mulf %15, %330 : vector<8x128xf32>
    %332 = arith.addf %328, %331 : vector<8x128xf32>
    %cst_86 = arith.constant 0.000000e+00 : f32
    %333 = vector.broadcast %cst_86 : f32 to vector<8x128xf32>
    %334 = arith.maximumf %332, %333 : vector<8x128xf32>
    %c22_87 = arith.constant 22 : index
    %335 = memref.load %arg5[%c22_87] : memref<64xf32, #tpu.memory_space<smem>>
    %336 = vector.broadcast %335 : f32 to vector<8x128xf32>
    %337 = arith.mulf %334, %336 : vector<8x128xf32>
    %338 = arith.addf %312, %337 : vector<8x128xf32>
    %c23_88 = arith.constant 23 : index
    %339 = memref.load %arg5[%c23_88] : memref<64xf32, #tpu.memory_space<smem>>
    %340 = vector.broadcast %339 : f32 to vector<8x128xf32>
    %341 = arith.mulf %334, %340 : vector<8x128xf32>
    %342 = arith.addf %316, %341 : vector<8x128xf32>
    %cst_89 = arith.constant 0.000000e+00 : f32
    %343 = vector.broadcast %cst_89 : f32 to vector<8x128xf32>
    %c12_90 = arith.constant 12 : index
    %344 = memref.load %arg4[%c12_90] : memref<32xf32, #tpu.memory_space<smem>>
    %345 = vector.broadcast %344 : f32 to vector<8x128xf32>
    %346 = arith.addf %343, %345 : vector<8x128xf32>
    %c36 = arith.constant 36 : index
    %347 = memref.load %arg3[%c36] : memref<96xf32, #tpu.memory_space<smem>>
    %348 = vector.broadcast %347 : f32 to vector<8x128xf32>
    %349 = arith.mulf %9, %348 : vector<8x128xf32>
    %350 = arith.addf %346, %349 : vector<8x128xf32>
    %c37 = arith.constant 37 : index
    %351 = memref.load %arg3[%c37] : memref<96xf32, #tpu.memory_space<smem>>
    %352 = vector.broadcast %351 : f32 to vector<8x128xf32>
    %353 = arith.mulf %12, %352 : vector<8x128xf32>
    %354 = arith.addf %350, %353 : vector<8x128xf32>
    %c38 = arith.constant 38 : index
    %355 = memref.load %arg3[%c38] : memref<96xf32, #tpu.memory_space<smem>>
    %356 = vector.broadcast %355 : f32 to vector<8x128xf32>
    %357 = arith.mulf %15, %356 : vector<8x128xf32>
    %358 = arith.addf %354, %357 : vector<8x128xf32>
    %cst_91 = arith.constant 0.000000e+00 : f32
    %359 = vector.broadcast %cst_91 : f32 to vector<8x128xf32>
    %360 = arith.maximumf %358, %359 : vector<8x128xf32>
    %c24_92 = arith.constant 24 : index
    %361 = memref.load %arg5[%c24_92] : memref<64xf32, #tpu.memory_space<smem>>
    %362 = vector.broadcast %361 : f32 to vector<8x128xf32>
    %363 = arith.mulf %360, %362 : vector<8x128xf32>
    %364 = arith.addf %338, %363 : vector<8x128xf32>
    %c25_93 = arith.constant 25 : index
    %365 = memref.load %arg5[%c25_93] : memref<64xf32, #tpu.memory_space<smem>>
    %366 = vector.broadcast %365 : f32 to vector<8x128xf32>
    %367 = arith.mulf %360, %366 : vector<8x128xf32>
    %368 = arith.addf %342, %367 : vector<8x128xf32>
    %cst_94 = arith.constant 0.000000e+00 : f32
    %369 = vector.broadcast %cst_94 : f32 to vector<8x128xf32>
    %c13_95 = arith.constant 13 : index
    %370 = memref.load %arg4[%c13_95] : memref<32xf32, #tpu.memory_space<smem>>
    %371 = vector.broadcast %370 : f32 to vector<8x128xf32>
    %372 = arith.addf %369, %371 : vector<8x128xf32>
    %c39 = arith.constant 39 : index
    %373 = memref.load %arg3[%c39] : memref<96xf32, #tpu.memory_space<smem>>
    %374 = vector.broadcast %373 : f32 to vector<8x128xf32>
    %375 = arith.mulf %9, %374 : vector<8x128xf32>
    %376 = arith.addf %372, %375 : vector<8x128xf32>
    %c40 = arith.constant 40 : index
    %377 = memref.load %arg3[%c40] : memref<96xf32, #tpu.memory_space<smem>>
    %378 = vector.broadcast %377 : f32 to vector<8x128xf32>
    %379 = arith.mulf %12, %378 : vector<8x128xf32>
    %380 = arith.addf %376, %379 : vector<8x128xf32>
    %c41 = arith.constant 41 : index
    %381 = memref.load %arg3[%c41] : memref<96xf32, #tpu.memory_space<smem>>
    %382 = vector.broadcast %381 : f32 to vector<8x128xf32>
    %383 = arith.mulf %15, %382 : vector<8x128xf32>
    %384 = arith.addf %380, %383 : vector<8x128xf32>
    %cst_96 = arith.constant 0.000000e+00 : f32
    %385 = vector.broadcast %cst_96 : f32 to vector<8x128xf32>
    %386 = arith.maximumf %384, %385 : vector<8x128xf32>
    %c26_97 = arith.constant 26 : index
    %387 = memref.load %arg5[%c26_97] : memref<64xf32, #tpu.memory_space<smem>>
    %388 = vector.broadcast %387 : f32 to vector<8x128xf32>
    %389 = arith.mulf %386, %388 : vector<8x128xf32>
    %390 = arith.addf %364, %389 : vector<8x128xf32>
    %c27_98 = arith.constant 27 : index
    %391 = memref.load %arg5[%c27_98] : memref<64xf32, #tpu.memory_space<smem>>
    %392 = vector.broadcast %391 : f32 to vector<8x128xf32>
    %393 = arith.mulf %386, %392 : vector<8x128xf32>
    %394 = arith.addf %368, %393 : vector<8x128xf32>
    %cst_99 = arith.constant 0.000000e+00 : f32
    %395 = vector.broadcast %cst_99 : f32 to vector<8x128xf32>
    %c14_100 = arith.constant 14 : index
    %396 = memref.load %arg4[%c14_100] : memref<32xf32, #tpu.memory_space<smem>>
    %397 = vector.broadcast %396 : f32 to vector<8x128xf32>
    %398 = arith.addf %395, %397 : vector<8x128xf32>
    %c42 = arith.constant 42 : index
    %399 = memref.load %arg3[%c42] : memref<96xf32, #tpu.memory_space<smem>>
    %400 = vector.broadcast %399 : f32 to vector<8x128xf32>
    %401 = arith.mulf %9, %400 : vector<8x128xf32>
    %402 = arith.addf %398, %401 : vector<8x128xf32>
    %c43 = arith.constant 43 : index
    %403 = memref.load %arg3[%c43] : memref<96xf32, #tpu.memory_space<smem>>
    %404 = vector.broadcast %403 : f32 to vector<8x128xf32>
    %405 = arith.mulf %12, %404 : vector<8x128xf32>
    %406 = arith.addf %402, %405 : vector<8x128xf32>
    %c44 = arith.constant 44 : index
    %407 = memref.load %arg3[%c44] : memref<96xf32, #tpu.memory_space<smem>>
    %408 = vector.broadcast %407 : f32 to vector<8x128xf32>
    %409 = arith.mulf %15, %408 : vector<8x128xf32>
    %410 = arith.addf %406, %409 : vector<8x128xf32>
    %cst_101 = arith.constant 0.000000e+00 : f32
    %411 = vector.broadcast %cst_101 : f32 to vector<8x128xf32>
    %412 = arith.maximumf %410, %411 : vector<8x128xf32>
    %c28_102 = arith.constant 28 : index
    %413 = memref.load %arg5[%c28_102] : memref<64xf32, #tpu.memory_space<smem>>
    %414 = vector.broadcast %413 : f32 to vector<8x128xf32>
    %415 = arith.mulf %412, %414 : vector<8x128xf32>
    %416 = arith.addf %390, %415 : vector<8x128xf32>
    %c29_103 = arith.constant 29 : index
    %417 = memref.load %arg5[%c29_103] : memref<64xf32, #tpu.memory_space<smem>>
    %418 = vector.broadcast %417 : f32 to vector<8x128xf32>
    %419 = arith.mulf %412, %418 : vector<8x128xf32>
    %420 = arith.addf %394, %419 : vector<8x128xf32>
    %cst_104 = arith.constant 0.000000e+00 : f32
    %421 = vector.broadcast %cst_104 : f32 to vector<8x128xf32>
    %c15_105 = arith.constant 15 : index
    %422 = memref.load %arg4[%c15_105] : memref<32xf32, #tpu.memory_space<smem>>
    %423 = vector.broadcast %422 : f32 to vector<8x128xf32>
    %424 = arith.addf %421, %423 : vector<8x128xf32>
    %c45 = arith.constant 45 : index
    %425 = memref.load %arg3[%c45] : memref<96xf32, #tpu.memory_space<smem>>
    %426 = vector.broadcast %425 : f32 to vector<8x128xf32>
    %427 = arith.mulf %9, %426 : vector<8x128xf32>
    %428 = arith.addf %424, %427 : vector<8x128xf32>
    %c46 = arith.constant 46 : index
    %429 = memref.load %arg3[%c46] : memref<96xf32, #tpu.memory_space<smem>>
    %430 = vector.broadcast %429 : f32 to vector<8x128xf32>
    %431 = arith.mulf %12, %430 : vector<8x128xf32>
    %432 = arith.addf %428, %431 : vector<8x128xf32>
    %c47 = arith.constant 47 : index
    %433 = memref.load %arg3[%c47] : memref<96xf32, #tpu.memory_space<smem>>
    %434 = vector.broadcast %433 : f32 to vector<8x128xf32>
    %435 = arith.mulf %15, %434 : vector<8x128xf32>
    %436 = arith.addf %432, %435 : vector<8x128xf32>
    %cst_106 = arith.constant 0.000000e+00 : f32
    %437 = vector.broadcast %cst_106 : f32 to vector<8x128xf32>
    %438 = arith.maximumf %436, %437 : vector<8x128xf32>
    %c30_107 = arith.constant 30 : index
    %439 = memref.load %arg5[%c30_107] : memref<64xf32, #tpu.memory_space<smem>>
    %440 = vector.broadcast %439 : f32 to vector<8x128xf32>
    %441 = arith.mulf %438, %440 : vector<8x128xf32>
    %442 = arith.addf %416, %441 : vector<8x128xf32>
    %c31_108 = arith.constant 31 : index
    %443 = memref.load %arg5[%c31_108] : memref<64xf32, #tpu.memory_space<smem>>
    %444 = vector.broadcast %443 : f32 to vector<8x128xf32>
    %445 = arith.mulf %438, %444 : vector<8x128xf32>
    %446 = arith.addf %420, %445 : vector<8x128xf32>
    %cst_109 = arith.constant 0.000000e+00 : f32
    %447 = vector.broadcast %cst_109 : f32 to vector<8x128xf32>
    %c16_110 = arith.constant 16 : index
    %448 = memref.load %arg4[%c16_110] : memref<32xf32, #tpu.memory_space<smem>>
    %449 = vector.broadcast %448 : f32 to vector<8x128xf32>
    %450 = arith.addf %447, %449 : vector<8x128xf32>
    %c48 = arith.constant 48 : index
    %451 = memref.load %arg3[%c48] : memref<96xf32, #tpu.memory_space<smem>>
    %452 = vector.broadcast %451 : f32 to vector<8x128xf32>
    %453 = arith.mulf %9, %452 : vector<8x128xf32>
    %454 = arith.addf %450, %453 : vector<8x128xf32>
    %c49 = arith.constant 49 : index
    %455 = memref.load %arg3[%c49] : memref<96xf32, #tpu.memory_space<smem>>
    %456 = vector.broadcast %455 : f32 to vector<8x128xf32>
    %457 = arith.mulf %12, %456 : vector<8x128xf32>
    %458 = arith.addf %454, %457 : vector<8x128xf32>
    %c50 = arith.constant 50 : index
    %459 = memref.load %arg3[%c50] : memref<96xf32, #tpu.memory_space<smem>>
    %460 = vector.broadcast %459 : f32 to vector<8x128xf32>
    %461 = arith.mulf %15, %460 : vector<8x128xf32>
    %462 = arith.addf %458, %461 : vector<8x128xf32>
    %cst_111 = arith.constant 0.000000e+00 : f32
    %463 = vector.broadcast %cst_111 : f32 to vector<8x128xf32>
    %464 = arith.maximumf %462, %463 : vector<8x128xf32>
    %c32_112 = arith.constant 32 : index
    %465 = memref.load %arg5[%c32_112] : memref<64xf32, #tpu.memory_space<smem>>
    %466 = vector.broadcast %465 : f32 to vector<8x128xf32>
    %467 = arith.mulf %464, %466 : vector<8x128xf32>
    %468 = arith.addf %442, %467 : vector<8x128xf32>
    %c33_113 = arith.constant 33 : index
    %469 = memref.load %arg5[%c33_113] : memref<64xf32, #tpu.memory_space<smem>>
    %470 = vector.broadcast %469 : f32 to vector<8x128xf32>
    %471 = arith.mulf %464, %470 : vector<8x128xf32>
    %472 = arith.addf %446, %471 : vector<8x128xf32>
    %cst_114 = arith.constant 0.000000e+00 : f32
    %473 = vector.broadcast %cst_114 : f32 to vector<8x128xf32>
    %c17_115 = arith.constant 17 : index
    %474 = memref.load %arg4[%c17_115] : memref<32xf32, #tpu.memory_space<smem>>
    %475 = vector.broadcast %474 : f32 to vector<8x128xf32>
    %476 = arith.addf %473, %475 : vector<8x128xf32>
    %c51 = arith.constant 51 : index
    %477 = memref.load %arg3[%c51] : memref<96xf32, #tpu.memory_space<smem>>
    %478 = vector.broadcast %477 : f32 to vector<8x128xf32>
    %479 = arith.mulf %9, %478 : vector<8x128xf32>
    %480 = arith.addf %476, %479 : vector<8x128xf32>
    %c52 = arith.constant 52 : index
    %481 = memref.load %arg3[%c52] : memref<96xf32, #tpu.memory_space<smem>>
    %482 = vector.broadcast %481 : f32 to vector<8x128xf32>
    %483 = arith.mulf %12, %482 : vector<8x128xf32>
    %484 = arith.addf %480, %483 : vector<8x128xf32>
    %c53 = arith.constant 53 : index
    %485 = memref.load %arg3[%c53] : memref<96xf32, #tpu.memory_space<smem>>
    %486 = vector.broadcast %485 : f32 to vector<8x128xf32>
    %487 = arith.mulf %15, %486 : vector<8x128xf32>
    %488 = arith.addf %484, %487 : vector<8x128xf32>
    %cst_116 = arith.constant 0.000000e+00 : f32
    %489 = vector.broadcast %cst_116 : f32 to vector<8x128xf32>
    %490 = arith.maximumf %488, %489 : vector<8x128xf32>
    %c34_117 = arith.constant 34 : index
    %491 = memref.load %arg5[%c34_117] : memref<64xf32, #tpu.memory_space<smem>>
    %492 = vector.broadcast %491 : f32 to vector<8x128xf32>
    %493 = arith.mulf %490, %492 : vector<8x128xf32>
    %494 = arith.addf %468, %493 : vector<8x128xf32>
    %c35_118 = arith.constant 35 : index
    %495 = memref.load %arg5[%c35_118] : memref<64xf32, #tpu.memory_space<smem>>
    %496 = vector.broadcast %495 : f32 to vector<8x128xf32>
    %497 = arith.mulf %490, %496 : vector<8x128xf32>
    %498 = arith.addf %472, %497 : vector<8x128xf32>
    %cst_119 = arith.constant 0.000000e+00 : f32
    %499 = vector.broadcast %cst_119 : f32 to vector<8x128xf32>
    %c18_120 = arith.constant 18 : index
    %500 = memref.load %arg4[%c18_120] : memref<32xf32, #tpu.memory_space<smem>>
    %501 = vector.broadcast %500 : f32 to vector<8x128xf32>
    %502 = arith.addf %499, %501 : vector<8x128xf32>
    %c54 = arith.constant 54 : index
    %503 = memref.load %arg3[%c54] : memref<96xf32, #tpu.memory_space<smem>>
    %504 = vector.broadcast %503 : f32 to vector<8x128xf32>
    %505 = arith.mulf %9, %504 : vector<8x128xf32>
    %506 = arith.addf %502, %505 : vector<8x128xf32>
    %c55 = arith.constant 55 : index
    %507 = memref.load %arg3[%c55] : memref<96xf32, #tpu.memory_space<smem>>
    %508 = vector.broadcast %507 : f32 to vector<8x128xf32>
    %509 = arith.mulf %12, %508 : vector<8x128xf32>
    %510 = arith.addf %506, %509 : vector<8x128xf32>
    %c56 = arith.constant 56 : index
    %511 = memref.load %arg3[%c56] : memref<96xf32, #tpu.memory_space<smem>>
    %512 = vector.broadcast %511 : f32 to vector<8x128xf32>
    %513 = arith.mulf %15, %512 : vector<8x128xf32>
    %514 = arith.addf %510, %513 : vector<8x128xf32>
    %cst_121 = arith.constant 0.000000e+00 : f32
    %515 = vector.broadcast %cst_121 : f32 to vector<8x128xf32>
    %516 = arith.maximumf %514, %515 : vector<8x128xf32>
    %c36_122 = arith.constant 36 : index
    %517 = memref.load %arg5[%c36_122] : memref<64xf32, #tpu.memory_space<smem>>
    %518 = vector.broadcast %517 : f32 to vector<8x128xf32>
    %519 = arith.mulf %516, %518 : vector<8x128xf32>
    %520 = arith.addf %494, %519 : vector<8x128xf32>
    %c37_123 = arith.constant 37 : index
    %521 = memref.load %arg5[%c37_123] : memref<64xf32, #tpu.memory_space<smem>>
    %522 = vector.broadcast %521 : f32 to vector<8x128xf32>
    %523 = arith.mulf %516, %522 : vector<8x128xf32>
    %524 = arith.addf %498, %523 : vector<8x128xf32>
    %cst_124 = arith.constant 0.000000e+00 : f32
    %525 = vector.broadcast %cst_124 : f32 to vector<8x128xf32>
    %c19_125 = arith.constant 19 : index
    %526 = memref.load %arg4[%c19_125] : memref<32xf32, #tpu.memory_space<smem>>
    %527 = vector.broadcast %526 : f32 to vector<8x128xf32>
    %528 = arith.addf %525, %527 : vector<8x128xf32>
    %c57 = arith.constant 57 : index
    %529 = memref.load %arg3[%c57] : memref<96xf32, #tpu.memory_space<smem>>
    %530 = vector.broadcast %529 : f32 to vector<8x128xf32>
    %531 = arith.mulf %9, %530 : vector<8x128xf32>
    %532 = arith.addf %528, %531 : vector<8x128xf32>
    %c58 = arith.constant 58 : index
    %533 = memref.load %arg3[%c58] : memref<96xf32, #tpu.memory_space<smem>>
    %534 = vector.broadcast %533 : f32 to vector<8x128xf32>
    %535 = arith.mulf %12, %534 : vector<8x128xf32>
    %536 = arith.addf %532, %535 : vector<8x128xf32>
    %c59 = arith.constant 59 : index
    %537 = memref.load %arg3[%c59] : memref<96xf32, #tpu.memory_space<smem>>
    %538 = vector.broadcast %537 : f32 to vector<8x128xf32>
    %539 = arith.mulf %15, %538 : vector<8x128xf32>
    %540 = arith.addf %536, %539 : vector<8x128xf32>
    %cst_126 = arith.constant 0.000000e+00 : f32
    %541 = vector.broadcast %cst_126 : f32 to vector<8x128xf32>
    %542 = arith.maximumf %540, %541 : vector<8x128xf32>
    %c38_127 = arith.constant 38 : index
    %543 = memref.load %arg5[%c38_127] : memref<64xf32, #tpu.memory_space<smem>>
    %544 = vector.broadcast %543 : f32 to vector<8x128xf32>
    %545 = arith.mulf %542, %544 : vector<8x128xf32>
    %546 = arith.addf %520, %545 : vector<8x128xf32>
    %c39_128 = arith.constant 39 : index
    %547 = memref.load %arg5[%c39_128] : memref<64xf32, #tpu.memory_space<smem>>
    %548 = vector.broadcast %547 : f32 to vector<8x128xf32>
    %549 = arith.mulf %542, %548 : vector<8x128xf32>
    %550 = arith.addf %524, %549 : vector<8x128xf32>
    %cst_129 = arith.constant 0.000000e+00 : f32
    %551 = vector.broadcast %cst_129 : f32 to vector<8x128xf32>
    %c20_130 = arith.constant 20 : index
    %552 = memref.load %arg4[%c20_130] : memref<32xf32, #tpu.memory_space<smem>>
    %553 = vector.broadcast %552 : f32 to vector<8x128xf32>
    %554 = arith.addf %551, %553 : vector<8x128xf32>
    %c60 = arith.constant 60 : index
    %555 = memref.load %arg3[%c60] : memref<96xf32, #tpu.memory_space<smem>>
    %556 = vector.broadcast %555 : f32 to vector<8x128xf32>
    %557 = arith.mulf %9, %556 : vector<8x128xf32>
    %558 = arith.addf %554, %557 : vector<8x128xf32>
    %c61 = arith.constant 61 : index
    %559 = memref.load %arg3[%c61] : memref<96xf32, #tpu.memory_space<smem>>
    %560 = vector.broadcast %559 : f32 to vector<8x128xf32>
    %561 = arith.mulf %12, %560 : vector<8x128xf32>
    %562 = arith.addf %558, %561 : vector<8x128xf32>
    %c62 = arith.constant 62 : index
    %563 = memref.load %arg3[%c62] : memref<96xf32, #tpu.memory_space<smem>>
    %564 = vector.broadcast %563 : f32 to vector<8x128xf32>
    %565 = arith.mulf %15, %564 : vector<8x128xf32>
    %566 = arith.addf %562, %565 : vector<8x128xf32>
    %cst_131 = arith.constant 0.000000e+00 : f32
    %567 = vector.broadcast %cst_131 : f32 to vector<8x128xf32>
    %568 = arith.maximumf %566, %567 : vector<8x128xf32>
    %c40_132 = arith.constant 40 : index
    %569 = memref.load %arg5[%c40_132] : memref<64xf32, #tpu.memory_space<smem>>
    %570 = vector.broadcast %569 : f32 to vector<8x128xf32>
    %571 = arith.mulf %568, %570 : vector<8x128xf32>
    %572 = arith.addf %546, %571 : vector<8x128xf32>
    %c41_133 = arith.constant 41 : index
    %573 = memref.load %arg5[%c41_133] : memref<64xf32, #tpu.memory_space<smem>>
    %574 = vector.broadcast %573 : f32 to vector<8x128xf32>
    %575 = arith.mulf %568, %574 : vector<8x128xf32>
    %576 = arith.addf %550, %575 : vector<8x128xf32>
    %cst_134 = arith.constant 0.000000e+00 : f32
    %577 = vector.broadcast %cst_134 : f32 to vector<8x128xf32>
    %c21_135 = arith.constant 21 : index
    %578 = memref.load %arg4[%c21_135] : memref<32xf32, #tpu.memory_space<smem>>
    %579 = vector.broadcast %578 : f32 to vector<8x128xf32>
    %580 = arith.addf %577, %579 : vector<8x128xf32>
    %c63 = arith.constant 63 : index
    %581 = memref.load %arg3[%c63] : memref<96xf32, #tpu.memory_space<smem>>
    %582 = vector.broadcast %581 : f32 to vector<8x128xf32>
    %583 = arith.mulf %9, %582 : vector<8x128xf32>
    %584 = arith.addf %580, %583 : vector<8x128xf32>
    %c64 = arith.constant 64 : index
    %585 = memref.load %arg3[%c64] : memref<96xf32, #tpu.memory_space<smem>>
    %586 = vector.broadcast %585 : f32 to vector<8x128xf32>
    %587 = arith.mulf %12, %586 : vector<8x128xf32>
    %588 = arith.addf %584, %587 : vector<8x128xf32>
    %c65 = arith.constant 65 : index
    %589 = memref.load %arg3[%c65] : memref<96xf32, #tpu.memory_space<smem>>
    %590 = vector.broadcast %589 : f32 to vector<8x128xf32>
    %591 = arith.mulf %15, %590 : vector<8x128xf32>
    %592 = arith.addf %588, %591 : vector<8x128xf32>
    %cst_136 = arith.constant 0.000000e+00 : f32
    %593 = vector.broadcast %cst_136 : f32 to vector<8x128xf32>
    %594 = arith.maximumf %592, %593 : vector<8x128xf32>
    %c42_137 = arith.constant 42 : index
    %595 = memref.load %arg5[%c42_137] : memref<64xf32, #tpu.memory_space<smem>>
    %596 = vector.broadcast %595 : f32 to vector<8x128xf32>
    %597 = arith.mulf %594, %596 : vector<8x128xf32>
    %598 = arith.addf %572, %597 : vector<8x128xf32>
    %c43_138 = arith.constant 43 : index
    %599 = memref.load %arg5[%c43_138] : memref<64xf32, #tpu.memory_space<smem>>
    %600 = vector.broadcast %599 : f32 to vector<8x128xf32>
    %601 = arith.mulf %594, %600 : vector<8x128xf32>
    %602 = arith.addf %576, %601 : vector<8x128xf32>
    %cst_139 = arith.constant 0.000000e+00 : f32
    %603 = vector.broadcast %cst_139 : f32 to vector<8x128xf32>
    %c22_140 = arith.constant 22 : index
    %604 = memref.load %arg4[%c22_140] : memref<32xf32, #tpu.memory_space<smem>>
    %605 = vector.broadcast %604 : f32 to vector<8x128xf32>
    %606 = arith.addf %603, %605 : vector<8x128xf32>
    %c66 = arith.constant 66 : index
    %607 = memref.load %arg3[%c66] : memref<96xf32, #tpu.memory_space<smem>>
    %608 = vector.broadcast %607 : f32 to vector<8x128xf32>
    %609 = arith.mulf %9, %608 : vector<8x128xf32>
    %610 = arith.addf %606, %609 : vector<8x128xf32>
    %c67 = arith.constant 67 : index
    %611 = memref.load %arg3[%c67] : memref<96xf32, #tpu.memory_space<smem>>
    %612 = vector.broadcast %611 : f32 to vector<8x128xf32>
    %613 = arith.mulf %12, %612 : vector<8x128xf32>
    %614 = arith.addf %610, %613 : vector<8x128xf32>
    %c68 = arith.constant 68 : index
    %615 = memref.load %arg3[%c68] : memref<96xf32, #tpu.memory_space<smem>>
    %616 = vector.broadcast %615 : f32 to vector<8x128xf32>
    %617 = arith.mulf %15, %616 : vector<8x128xf32>
    %618 = arith.addf %614, %617 : vector<8x128xf32>
    %cst_141 = arith.constant 0.000000e+00 : f32
    %619 = vector.broadcast %cst_141 : f32 to vector<8x128xf32>
    %620 = arith.maximumf %618, %619 : vector<8x128xf32>
    %c44_142 = arith.constant 44 : index
    %621 = memref.load %arg5[%c44_142] : memref<64xf32, #tpu.memory_space<smem>>
    %622 = vector.broadcast %621 : f32 to vector<8x128xf32>
    %623 = arith.mulf %620, %622 : vector<8x128xf32>
    %624 = arith.addf %598, %623 : vector<8x128xf32>
    %c45_143 = arith.constant 45 : index
    %625 = memref.load %arg5[%c45_143] : memref<64xf32, #tpu.memory_space<smem>>
    %626 = vector.broadcast %625 : f32 to vector<8x128xf32>
    %627 = arith.mulf %620, %626 : vector<8x128xf32>
    %628 = arith.addf %602, %627 : vector<8x128xf32>
    %cst_144 = arith.constant 0.000000e+00 : f32
    %629 = vector.broadcast %cst_144 : f32 to vector<8x128xf32>
    %c23_145 = arith.constant 23 : index
    %630 = memref.load %arg4[%c23_145] : memref<32xf32, #tpu.memory_space<smem>>
    %631 = vector.broadcast %630 : f32 to vector<8x128xf32>
    %632 = arith.addf %629, %631 : vector<8x128xf32>
    %c69 = arith.constant 69 : index
    %633 = memref.load %arg3[%c69] : memref<96xf32, #tpu.memory_space<smem>>
    %634 = vector.broadcast %633 : f32 to vector<8x128xf32>
    %635 = arith.mulf %9, %634 : vector<8x128xf32>
    %636 = arith.addf %632, %635 : vector<8x128xf32>
    %c70 = arith.constant 70 : index
    %637 = memref.load %arg3[%c70] : memref<96xf32, #tpu.memory_space<smem>>
    %638 = vector.broadcast %637 : f32 to vector<8x128xf32>
    %639 = arith.mulf %12, %638 : vector<8x128xf32>
    %640 = arith.addf %636, %639 : vector<8x128xf32>
    %c71 = arith.constant 71 : index
    %641 = memref.load %arg3[%c71] : memref<96xf32, #tpu.memory_space<smem>>
    %642 = vector.broadcast %641 : f32 to vector<8x128xf32>
    %643 = arith.mulf %15, %642 : vector<8x128xf32>
    %644 = arith.addf %640, %643 : vector<8x128xf32>
    %cst_146 = arith.constant 0.000000e+00 : f32
    %645 = vector.broadcast %cst_146 : f32 to vector<8x128xf32>
    %646 = arith.maximumf %644, %645 : vector<8x128xf32>
    %c46_147 = arith.constant 46 : index
    %647 = memref.load %arg5[%c46_147] : memref<64xf32, #tpu.memory_space<smem>>
    %648 = vector.broadcast %647 : f32 to vector<8x128xf32>
    %649 = arith.mulf %646, %648 : vector<8x128xf32>
    %650 = arith.addf %624, %649 : vector<8x128xf32>
    %c47_148 = arith.constant 47 : index
    %651 = memref.load %arg5[%c47_148] : memref<64xf32, #tpu.memory_space<smem>>
    %652 = vector.broadcast %651 : f32 to vector<8x128xf32>
    %653 = arith.mulf %646, %652 : vector<8x128xf32>
    %654 = arith.addf %628, %653 : vector<8x128xf32>
    %cst_149 = arith.constant 0.000000e+00 : f32
    %655 = vector.broadcast %cst_149 : f32 to vector<8x128xf32>
    %c24_150 = arith.constant 24 : index
    %656 = memref.load %arg4[%c24_150] : memref<32xf32, #tpu.memory_space<smem>>
    %657 = vector.broadcast %656 : f32 to vector<8x128xf32>
    %658 = arith.addf %655, %657 : vector<8x128xf32>
    %c72 = arith.constant 72 : index
    %659 = memref.load %arg3[%c72] : memref<96xf32, #tpu.memory_space<smem>>
    %660 = vector.broadcast %659 : f32 to vector<8x128xf32>
    %661 = arith.mulf %9, %660 : vector<8x128xf32>
    %662 = arith.addf %658, %661 : vector<8x128xf32>
    %c73 = arith.constant 73 : index
    %663 = memref.load %arg3[%c73] : memref<96xf32, #tpu.memory_space<smem>>
    %664 = vector.broadcast %663 : f32 to vector<8x128xf32>
    %665 = arith.mulf %12, %664 : vector<8x128xf32>
    %666 = arith.addf %662, %665 : vector<8x128xf32>
    %c74 = arith.constant 74 : index
    %667 = memref.load %arg3[%c74] : memref<96xf32, #tpu.memory_space<smem>>
    %668 = vector.broadcast %667 : f32 to vector<8x128xf32>
    %669 = arith.mulf %15, %668 : vector<8x128xf32>
    %670 = arith.addf %666, %669 : vector<8x128xf32>
    %cst_151 = arith.constant 0.000000e+00 : f32
    %671 = vector.broadcast %cst_151 : f32 to vector<8x128xf32>
    %672 = arith.maximumf %670, %671 : vector<8x128xf32>
    %c48_152 = arith.constant 48 : index
    %673 = memref.load %arg5[%c48_152] : memref<64xf32, #tpu.memory_space<smem>>
    %674 = vector.broadcast %673 : f32 to vector<8x128xf32>
    %675 = arith.mulf %672, %674 : vector<8x128xf32>
    %676 = arith.addf %650, %675 : vector<8x128xf32>
    %c49_153 = arith.constant 49 : index
    %677 = memref.load %arg5[%c49_153] : memref<64xf32, #tpu.memory_space<smem>>
    %678 = vector.broadcast %677 : f32 to vector<8x128xf32>
    %679 = arith.mulf %672, %678 : vector<8x128xf32>
    %680 = arith.addf %654, %679 : vector<8x128xf32>
    %cst_154 = arith.constant 0.000000e+00 : f32
    %681 = vector.broadcast %cst_154 : f32 to vector<8x128xf32>
    %c25_155 = arith.constant 25 : index
    %682 = memref.load %arg4[%c25_155] : memref<32xf32, #tpu.memory_space<smem>>
    %683 = vector.broadcast %682 : f32 to vector<8x128xf32>
    %684 = arith.addf %681, %683 : vector<8x128xf32>
    %c75 = arith.constant 75 : index
    %685 = memref.load %arg3[%c75] : memref<96xf32, #tpu.memory_space<smem>>
    %686 = vector.broadcast %685 : f32 to vector<8x128xf32>
    %687 = arith.mulf %9, %686 : vector<8x128xf32>
    %688 = arith.addf %684, %687 : vector<8x128xf32>
    %c76 = arith.constant 76 : index
    %689 = memref.load %arg3[%c76] : memref<96xf32, #tpu.memory_space<smem>>
    %690 = vector.broadcast %689 : f32 to vector<8x128xf32>
    %691 = arith.mulf %12, %690 : vector<8x128xf32>
    %692 = arith.addf %688, %691 : vector<8x128xf32>
    %c77 = arith.constant 77 : index
    %693 = memref.load %arg3[%c77] : memref<96xf32, #tpu.memory_space<smem>>
    %694 = vector.broadcast %693 : f32 to vector<8x128xf32>
    %695 = arith.mulf %15, %694 : vector<8x128xf32>
    %696 = arith.addf %692, %695 : vector<8x128xf32>
    %cst_156 = arith.constant 0.000000e+00 : f32
    %697 = vector.broadcast %cst_156 : f32 to vector<8x128xf32>
    %698 = arith.maximumf %696, %697 : vector<8x128xf32>
    %c50_157 = arith.constant 50 : index
    %699 = memref.load %arg5[%c50_157] : memref<64xf32, #tpu.memory_space<smem>>
    %700 = vector.broadcast %699 : f32 to vector<8x128xf32>
    %701 = arith.mulf %698, %700 : vector<8x128xf32>
    %702 = arith.addf %676, %701 : vector<8x128xf32>
    %c51_158 = arith.constant 51 : index
    %703 = memref.load %arg5[%c51_158] : memref<64xf32, #tpu.memory_space<smem>>
    %704 = vector.broadcast %703 : f32 to vector<8x128xf32>
    %705 = arith.mulf %698, %704 : vector<8x128xf32>
    %706 = arith.addf %680, %705 : vector<8x128xf32>
    %cst_159 = arith.constant 0.000000e+00 : f32
    %707 = vector.broadcast %cst_159 : f32 to vector<8x128xf32>
    %c26_160 = arith.constant 26 : index
    %708 = memref.load %arg4[%c26_160] : memref<32xf32, #tpu.memory_space<smem>>
    %709 = vector.broadcast %708 : f32 to vector<8x128xf32>
    %710 = arith.addf %707, %709 : vector<8x128xf32>
    %c78 = arith.constant 78 : index
    %711 = memref.load %arg3[%c78] : memref<96xf32, #tpu.memory_space<smem>>
    %712 = vector.broadcast %711 : f32 to vector<8x128xf32>
    %713 = arith.mulf %9, %712 : vector<8x128xf32>
    %714 = arith.addf %710, %713 : vector<8x128xf32>
    %c79 = arith.constant 79 : index
    %715 = memref.load %arg3[%c79] : memref<96xf32, #tpu.memory_space<smem>>
    %716 = vector.broadcast %715 : f32 to vector<8x128xf32>
    %717 = arith.mulf %12, %716 : vector<8x128xf32>
    %718 = arith.addf %714, %717 : vector<8x128xf32>
    %c80 = arith.constant 80 : index
    %719 = memref.load %arg3[%c80] : memref<96xf32, #tpu.memory_space<smem>>
    %720 = vector.broadcast %719 : f32 to vector<8x128xf32>
    %721 = arith.mulf %15, %720 : vector<8x128xf32>
    %722 = arith.addf %718, %721 : vector<8x128xf32>
    %cst_161 = arith.constant 0.000000e+00 : f32
    %723 = vector.broadcast %cst_161 : f32 to vector<8x128xf32>
    %724 = arith.maximumf %722, %723 : vector<8x128xf32>
    %c52_162 = arith.constant 52 : index
    %725 = memref.load %arg5[%c52_162] : memref<64xf32, #tpu.memory_space<smem>>
    %726 = vector.broadcast %725 : f32 to vector<8x128xf32>
    %727 = arith.mulf %724, %726 : vector<8x128xf32>
    %728 = arith.addf %702, %727 : vector<8x128xf32>
    %c53_163 = arith.constant 53 : index
    %729 = memref.load %arg5[%c53_163] : memref<64xf32, #tpu.memory_space<smem>>
    %730 = vector.broadcast %729 : f32 to vector<8x128xf32>
    %731 = arith.mulf %724, %730 : vector<8x128xf32>
    %732 = arith.addf %706, %731 : vector<8x128xf32>
    %cst_164 = arith.constant 0.000000e+00 : f32
    %733 = vector.broadcast %cst_164 : f32 to vector<8x128xf32>
    %c27_165 = arith.constant 27 : index
    %734 = memref.load %arg4[%c27_165] : memref<32xf32, #tpu.memory_space<smem>>
    %735 = vector.broadcast %734 : f32 to vector<8x128xf32>
    %736 = arith.addf %733, %735 : vector<8x128xf32>
    %c81 = arith.constant 81 : index
    %737 = memref.load %arg3[%c81] : memref<96xf32, #tpu.memory_space<smem>>
    %738 = vector.broadcast %737 : f32 to vector<8x128xf32>
    %739 = arith.mulf %9, %738 : vector<8x128xf32>
    %740 = arith.addf %736, %739 : vector<8x128xf32>
    %c82 = arith.constant 82 : index
    %741 = memref.load %arg3[%c82] : memref<96xf32, #tpu.memory_space<smem>>
    %742 = vector.broadcast %741 : f32 to vector<8x128xf32>
    %743 = arith.mulf %12, %742 : vector<8x128xf32>
    %744 = arith.addf %740, %743 : vector<8x128xf32>
    %c83 = arith.constant 83 : index
    %745 = memref.load %arg3[%c83] : memref<96xf32, #tpu.memory_space<smem>>
    %746 = vector.broadcast %745 : f32 to vector<8x128xf32>
    %747 = arith.mulf %15, %746 : vector<8x128xf32>
    %748 = arith.addf %744, %747 : vector<8x128xf32>
    %cst_166 = arith.constant 0.000000e+00 : f32
    %749 = vector.broadcast %cst_166 : f32 to vector<8x128xf32>
    %750 = arith.maximumf %748, %749 : vector<8x128xf32>
    %c54_167 = arith.constant 54 : index
    %751 = memref.load %arg5[%c54_167] : memref<64xf32, #tpu.memory_space<smem>>
    %752 = vector.broadcast %751 : f32 to vector<8x128xf32>
    %753 = arith.mulf %750, %752 : vector<8x128xf32>
    %754 = arith.addf %728, %753 : vector<8x128xf32>
    %c55_168 = arith.constant 55 : index
    %755 = memref.load %arg5[%c55_168] : memref<64xf32, #tpu.memory_space<smem>>
    %756 = vector.broadcast %755 : f32 to vector<8x128xf32>
    %757 = arith.mulf %750, %756 : vector<8x128xf32>
    %758 = arith.addf %732, %757 : vector<8x128xf32>
    %cst_169 = arith.constant 0.000000e+00 : f32
    %759 = vector.broadcast %cst_169 : f32 to vector<8x128xf32>
    %c28_170 = arith.constant 28 : index
    %760 = memref.load %arg4[%c28_170] : memref<32xf32, #tpu.memory_space<smem>>
    %761 = vector.broadcast %760 : f32 to vector<8x128xf32>
    %762 = arith.addf %759, %761 : vector<8x128xf32>
    %c84 = arith.constant 84 : index
    %763 = memref.load %arg3[%c84] : memref<96xf32, #tpu.memory_space<smem>>
    %764 = vector.broadcast %763 : f32 to vector<8x128xf32>
    %765 = arith.mulf %9, %764 : vector<8x128xf32>
    %766 = arith.addf %762, %765 : vector<8x128xf32>
    %c85 = arith.constant 85 : index
    %767 = memref.load %arg3[%c85] : memref<96xf32, #tpu.memory_space<smem>>
    %768 = vector.broadcast %767 : f32 to vector<8x128xf32>
    %769 = arith.mulf %12, %768 : vector<8x128xf32>
    %770 = arith.addf %766, %769 : vector<8x128xf32>
    %c86 = arith.constant 86 : index
    %771 = memref.load %arg3[%c86] : memref<96xf32, #tpu.memory_space<smem>>
    %772 = vector.broadcast %771 : f32 to vector<8x128xf32>
    %773 = arith.mulf %15, %772 : vector<8x128xf32>
    %774 = arith.addf %770, %773 : vector<8x128xf32>
    %cst_171 = arith.constant 0.000000e+00 : f32
    %775 = vector.broadcast %cst_171 : f32 to vector<8x128xf32>
    %776 = arith.maximumf %774, %775 : vector<8x128xf32>
    %c56_172 = arith.constant 56 : index
    %777 = memref.load %arg5[%c56_172] : memref<64xf32, #tpu.memory_space<smem>>
    %778 = vector.broadcast %777 : f32 to vector<8x128xf32>
    %779 = arith.mulf %776, %778 : vector<8x128xf32>
    %780 = arith.addf %754, %779 : vector<8x128xf32>
    %c57_173 = arith.constant 57 : index
    %781 = memref.load %arg5[%c57_173] : memref<64xf32, #tpu.memory_space<smem>>
    %782 = vector.broadcast %781 : f32 to vector<8x128xf32>
    %783 = arith.mulf %776, %782 : vector<8x128xf32>
    %784 = arith.addf %758, %783 : vector<8x128xf32>
    %cst_174 = arith.constant 0.000000e+00 : f32
    %785 = vector.broadcast %cst_174 : f32 to vector<8x128xf32>
    %c29_175 = arith.constant 29 : index
    %786 = memref.load %arg4[%c29_175] : memref<32xf32, #tpu.memory_space<smem>>
    %787 = vector.broadcast %786 : f32 to vector<8x128xf32>
    %788 = arith.addf %785, %787 : vector<8x128xf32>
    %c87 = arith.constant 87 : index
    %789 = memref.load %arg3[%c87] : memref<96xf32, #tpu.memory_space<smem>>
    %790 = vector.broadcast %789 : f32 to vector<8x128xf32>
    %791 = arith.mulf %9, %790 : vector<8x128xf32>
    %792 = arith.addf %788, %791 : vector<8x128xf32>
    %c88 = arith.constant 88 : index
    %793 = memref.load %arg3[%c88] : memref<96xf32, #tpu.memory_space<smem>>
    %794 = vector.broadcast %793 : f32 to vector<8x128xf32>
    %795 = arith.mulf %12, %794 : vector<8x128xf32>
    %796 = arith.addf %792, %795 : vector<8x128xf32>
    %c89 = arith.constant 89 : index
    %797 = memref.load %arg3[%c89] : memref<96xf32, #tpu.memory_space<smem>>
    %798 = vector.broadcast %797 : f32 to vector<8x128xf32>
    %799 = arith.mulf %15, %798 : vector<8x128xf32>
    %800 = arith.addf %796, %799 : vector<8x128xf32>
    %cst_176 = arith.constant 0.000000e+00 : f32
    %801 = vector.broadcast %cst_176 : f32 to vector<8x128xf32>
    %802 = arith.maximumf %800, %801 : vector<8x128xf32>
    %c58_177 = arith.constant 58 : index
    %803 = memref.load %arg5[%c58_177] : memref<64xf32, #tpu.memory_space<smem>>
    %804 = vector.broadcast %803 : f32 to vector<8x128xf32>
    %805 = arith.mulf %802, %804 : vector<8x128xf32>
    %806 = arith.addf %780, %805 : vector<8x128xf32>
    %c59_178 = arith.constant 59 : index
    %807 = memref.load %arg5[%c59_178] : memref<64xf32, #tpu.memory_space<smem>>
    %808 = vector.broadcast %807 : f32 to vector<8x128xf32>
    %809 = arith.mulf %802, %808 : vector<8x128xf32>
    %810 = arith.addf %784, %809 : vector<8x128xf32>
    %cst_179 = arith.constant 0.000000e+00 : f32
    %811 = vector.broadcast %cst_179 : f32 to vector<8x128xf32>
    %c30_180 = arith.constant 30 : index
    %812 = memref.load %arg4[%c30_180] : memref<32xf32, #tpu.memory_space<smem>>
    %813 = vector.broadcast %812 : f32 to vector<8x128xf32>
    %814 = arith.addf %811, %813 : vector<8x128xf32>
    %c90 = arith.constant 90 : index
    %815 = memref.load %arg3[%c90] : memref<96xf32, #tpu.memory_space<smem>>
    %816 = vector.broadcast %815 : f32 to vector<8x128xf32>
    %817 = arith.mulf %9, %816 : vector<8x128xf32>
    %818 = arith.addf %814, %817 : vector<8x128xf32>
    %c91 = arith.constant 91 : index
    %819 = memref.load %arg3[%c91] : memref<96xf32, #tpu.memory_space<smem>>
    %820 = vector.broadcast %819 : f32 to vector<8x128xf32>
    %821 = arith.mulf %12, %820 : vector<8x128xf32>
    %822 = arith.addf %818, %821 : vector<8x128xf32>
    %c92 = arith.constant 92 : index
    %823 = memref.load %arg3[%c92] : memref<96xf32, #tpu.memory_space<smem>>
    %824 = vector.broadcast %823 : f32 to vector<8x128xf32>
    %825 = arith.mulf %15, %824 : vector<8x128xf32>
    %826 = arith.addf %822, %825 : vector<8x128xf32>
    %cst_181 = arith.constant 0.000000e+00 : f32
    %827 = vector.broadcast %cst_181 : f32 to vector<8x128xf32>
    %828 = arith.maximumf %826, %827 : vector<8x128xf32>
    %c60_182 = arith.constant 60 : index
    %829 = memref.load %arg5[%c60_182] : memref<64xf32, #tpu.memory_space<smem>>
    %830 = vector.broadcast %829 : f32 to vector<8x128xf32>
    %831 = arith.mulf %828, %830 : vector<8x128xf32>
    %832 = arith.addf %806, %831 : vector<8x128xf32>
    %c61_183 = arith.constant 61 : index
    %833 = memref.load %arg5[%c61_183] : memref<64xf32, #tpu.memory_space<smem>>
    %834 = vector.broadcast %833 : f32 to vector<8x128xf32>
    %835 = arith.mulf %828, %834 : vector<8x128xf32>
    %836 = arith.addf %810, %835 : vector<8x128xf32>
    %cst_184 = arith.constant 0.000000e+00 : f32
    %837 = vector.broadcast %cst_184 : f32 to vector<8x128xf32>
    %c31_185 = arith.constant 31 : index
    %838 = memref.load %arg4[%c31_185] : memref<32xf32, #tpu.memory_space<smem>>
    %839 = vector.broadcast %838 : f32 to vector<8x128xf32>
    %840 = arith.addf %837, %839 : vector<8x128xf32>
    %c93 = arith.constant 93 : index
    %841 = memref.load %arg3[%c93] : memref<96xf32, #tpu.memory_space<smem>>
    %842 = vector.broadcast %841 : f32 to vector<8x128xf32>
    %843 = arith.mulf %9, %842 : vector<8x128xf32>
    %844 = arith.addf %840, %843 : vector<8x128xf32>
    %c94 = arith.constant 94 : index
    %845 = memref.load %arg3[%c94] : memref<96xf32, #tpu.memory_space<smem>>
    %846 = vector.broadcast %845 : f32 to vector<8x128xf32>
    %847 = arith.mulf %12, %846 : vector<8x128xf32>
    %848 = arith.addf %844, %847 : vector<8x128xf32>
    %c95 = arith.constant 95 : index
    %849 = memref.load %arg3[%c95] : memref<96xf32, #tpu.memory_space<smem>>
    %850 = vector.broadcast %849 : f32 to vector<8x128xf32>
    %851 = arith.mulf %15, %850 : vector<8x128xf32>
    %852 = arith.addf %848, %851 : vector<8x128xf32>
    %cst_186 = arith.constant 0.000000e+00 : f32
    %853 = vector.broadcast %cst_186 : f32 to vector<8x128xf32>
    %854 = arith.maximumf %852, %853 : vector<8x128xf32>
    %c62_187 = arith.constant 62 : index
    %855 = memref.load %arg5[%c62_187] : memref<64xf32, #tpu.memory_space<smem>>
    %856 = vector.broadcast %855 : f32 to vector<8x128xf32>
    %857 = arith.mulf %854, %856 : vector<8x128xf32>
    %858 = arith.addf %832, %857 : vector<8x128xf32>
    %c63_188 = arith.constant 63 : index
    %859 = memref.load %arg5[%c63_188] : memref<64xf32, #tpu.memory_space<smem>>
    %860 = vector.broadcast %859 : f32 to vector<8x128xf32>
    %861 = arith.mulf %854, %860 : vector<8x128xf32>
    %862 = arith.addf %836, %861 : vector<8x128xf32>
    %c0_189 = arith.constant 0 : index
    %c0_190 = arith.constant 0 : index
    %c0_191 = arith.constant 0 : index
    %c0_192 = arith.constant 0 : index
    %863 = vector.load %arg6[%c0_189, %c0_190, %c0_191, %c0_192] : memref<1x2x8x128xf32, #tpu.memory_space<vmem>>, vector<1x1x8x128xf32>
    %864 = vector.shape_cast %863 : vector<1x1x8x128xf32> to vector<8x128xf32>
    %865 = arith.addf %864, %858 : vector<8x128xf32>
    %c0_193 = arith.constant 0 : index
    %c0_194 = arith.constant 0 : index
    %c0_195 = arith.constant 0 : index
    %c0_196 = arith.constant 0 : index
    %866 = vector.load %arg6[%c0_193, %c0_194, %c0_195, %c0_196] : memref<1x2x8x128xf32, #tpu.memory_space<vmem>>, vector<1x1x8x128xf32>
    %867 = vector.shape_cast %866 : vector<1x1x8x128xf32> to vector<8x128xf32>
    %868 = vector.shape_cast %865 : vector<8x128xf32> to vector<1x1x8x128xf32>
    tpu.vector_store %arg6[%c0_193, %c0_194, %c0_195, %c0_196], %868 {strides = array<i32>} : memref<1x2x8x128xf32, #tpu.memory_space<vmem>>, vector<1x1x8x128xf32>,
    %c0_197 = arith.constant 0 : index
    %c1_198 = arith.constant 1 : index
    %c0_199 = arith.constant 0 : index
    %c0_200 = arith.constant 0 : index
    %869 = vector.load %arg6[%c0_197, %c1_198, %c0_199, %c0_200] : memref<1x2x8x128xf32, #tpu.memory_space<vmem>>, vector<1x1x8x128xf32>
    %870 = vector.shape_cast %869 : vector<1x1x8x128xf32> to vector<8x128xf32>
    %871 = arith.addf %870, %862 : vector<8x128xf32>
    %c0_201 = arith.constant 0 : index
    %c1_202 = arith.constant 1 : index
    %c0_203 = arith.constant 0 : index
    %c0_204 = arith.constant 0 : index
    %872 = vector.load %arg6[%c0_201, %c1_202, %c0_203, %c0_204] : memref<1x2x8x128xf32, #tpu.memory_space<vmem>>, vector<1x1x8x128xf32>
    %873 = vector.shape_cast %872 : vector<1x1x8x128xf32> to vector<8x128xf32>
    %874 = vector.shape_cast %871 : vector<8x128xf32> to vector<1x1x8x128xf32>
    tpu.vector_store %arg6[%c0_201, %c1_202, %c0_203, %c0_204], %874 {strides = array<i32>} : memref<1x2x8x128xf32, #tpu.memory_space<vmem>>, vector<1x1x8x128xf32>,
    %c1_i32_205 = arith.constant 1 : i32
    return
  }
  func.func @transform_0(%arg0: i32, %arg1: i32) -> (i32, i32, i32, i32) {
    %c0_i32 = arith.constant 0 : i32
    %c0_i32_0 = arith.constant 0 : i32
    %c0_i32_1 = arith.constant 0 : i32
    return %arg0, %c0_i32, %arg1, %c0_i32_0 : i32, i32, i32, i32
  }
  func.func @transform_1(%arg0: i32, %arg1: i32) -> i32 {
    %c0_i32 = arith.constant 0 : i32
    %c0_i32_0 = arith.constant 0 : i32
    return %c0_i32 : i32
  }
  func.func @transform_2(%arg0: i32, %arg1: i32) -> i32 {
    %c0_i32 = arith.constant 0 : i32
    %c0_i32_0 = arith.constant 0 : i32
    return %c0_i32 : i32
  }
  func.func @transform_3(%arg0: i32, %arg1: i32) -> i32 {
    %c0_i32 = arith.constant 0 : i32
    %c0_i32_0 = arith.constant 0 : i32
    return %c0_i32 : i32
  }
  func.func @transform_4(%arg0: i32, %arg1: i32) -> (i32, i32, i32, i32) {
    %c0_i32 = arith.constant 0 : i32
    %c0_i32_0 = arith.constant 0 : i32
    %c0_i32_1 = arith.constant 0 : i32
    %c0_i32_2 = arith.constant 0 : i32
    return %arg0, %c0_i32, %c0_i32_0, %c0_i32_1 : i32, i32, i32, i32
  }
  func.func @transform_5(%arg0: i32, %arg1: i32) -> (i32, i32, i32, i32) {
    %c0_i32 = arith.constant 0 : i32
    %c0_i32_0 = arith.constant 0 : i32
    %c0_i32_1 = arith.constant 0 : i32
    %c0_i32_2 = arith.constant 0 : i32
    return %arg0, %c0_i32, %c0_i32_0, %c0_i32_1 : i32, i32, i32, i32
  }
}

module attributes {stable_mosaic.version = 11 : i64} {
  func.func @_seg_kernel(%arg0: i32, %arg1: memref<2xf32, #tpu.memory_space<smem>>, %arg2: memref<2x1x8x128xf32, #tpu.memory_space<vmem>>, %arg3: memref<32xf32, #tpu.memory_space<smem>>, %arg4: memref<32xf32, #tpu.memory_space<smem>>, %arg5: memref<96xf32, #tpu.memory_space<smem>>, %arg6: memref<3xf32, #tpu.memory_space<smem>>, %arg7: memref<3x8x128xf32, #tpu.memory_space<vmem>>) attributes {dimension_semantics = [#tpu.dimension_semantics<parallel>], iteration_bounds = array<i64: 1>, scalar_prefetch = 0 : i64, scratch_operands = 0 : i64, tpu.core_type = #tpu.core_type<tc>, window_params = [{transform_indices = @transform_0, window_bounds = array<i64: 2>}, {transform_indices = @transform_1, window_bounds = array<i64: 2, 1, 8, 128>}, {transform_indices = @transform_2, window_bounds = array<i64: 32>}, {transform_indices = @transform_3, window_bounds = array<i64: 32>}, {transform_indices = @transform_4, window_bounds = array<i64: 96>}, {transform_indices = @transform_5, window_bounds = array<i64: 3>}, {transform_indices = @transform_6, window_bounds = array<i64: 3, 8, 128>}]} {
    %c0 = arith.constant 0 : index
    %0 = memref.load %arg1[%c0] : memref<2xf32, #tpu.memory_space<smem>>
    %c1 = arith.constant 1 : index
    %1 = memref.load %arg1[%c1] : memref<2xf32, #tpu.memory_space<smem>>
    %c0_i32 = arith.constant 0 : i32
    %c1_i32 = arith.constant 1 : i32
    %2 = arith.muli %c0_i32, %c1_i32 : i32
    %c0_i32_0 = arith.constant 0 : i32
    %3 = arith.addi %c0_i32_0, %2 : i32
    %c8_i32 = arith.constant 8 : i32
    %4 = arith.muli %3, %c8_i32 : i32
    %5 = tpu.assume_multiple %4, 8 : i32
    %cst = arith.constant 0.000000e+00 : f32
    %6 = vector.broadcast %cst : f32 to vector<8x128xf32>
    %c0_1 = arith.constant 0 : index
    %7 = memref.load %arg6[%c0_1] : memref<3xf32, #tpu.memory_space<smem>>
    %8 = vector.broadcast %7 : f32 to vector<8x128xf32>
    %9 = arith.addf %6, %8 : vector<8x128xf32>
    %cst_2 = arith.constant 0.000000e+00 : f32
    %10 = vector.broadcast %cst_2 : f32 to vector<8x128xf32>
    %c1_3 = arith.constant 1 : index
    %11 = memref.load %arg6[%c1_3] : memref<3xf32, #tpu.memory_space<smem>>
    %12 = vector.broadcast %11 : f32 to vector<8x128xf32>
    %13 = arith.addf %10, %12 : vector<8x128xf32>
    %cst_4 = arith.constant 0.000000e+00 : f32
    %14 = vector.broadcast %cst_4 : f32 to vector<8x128xf32>
    %c2 = arith.constant 2 : index
    %15 = memref.load %arg6[%c2] : memref<3xf32, #tpu.memory_space<smem>>
    %16 = vector.broadcast %15 : f32 to vector<8x128xf32>
    %17 = arith.addf %14, %16 : vector<8x128xf32>
    %c0_5 = arith.constant 0 : index
    %c0_6 = arith.constant 0 : index
    %18 = arith.index_cast %5 : i32 to index
    %c0_7 = arith.constant 0 : index
    %19 = vector.load %arg2[%c0_5, %c0_6, %18, %c0_7] : memref<2x1x8x128xf32, #tpu.memory_space<vmem>>, vector<1x1x8x128xf32>
    %20 = vector.shape_cast %19 : vector<1x1x8x128xf32> to vector<8x128xf32>
    %21 = vector.broadcast %0 : f32 to vector<8x128xf32>
    %22 = arith.subf %20, %21 : vector<8x128xf32>
    %23 = vector.broadcast %1 : f32 to vector<8x128xf32>
    %24 = arith.mulf %22, %23 : vector<8x128xf32>
    %c0_8 = arith.constant 0 : index
    %25 = memref.load %arg3[%c0_8] : memref<32xf32, #tpu.memory_space<smem>>
    %26 = vector.broadcast %25 : f32 to vector<8x128xf32>
    %27 = arith.mulf %24, %26 : vector<8x128xf32>
    %c0_9 = arith.constant 0 : index
    %28 = memref.load %arg4[%c0_9] : memref<32xf32, #tpu.memory_space<smem>>
    %29 = vector.broadcast %28 : f32 to vector<8x128xf32>
    %30 = arith.addf %27, %29 : vector<8x128xf32>
    %cst_10 = arith.constant 0.000000e+00 : f32
    %31 = vector.broadcast %cst_10 : f32 to vector<8x128xf32>
    %32 = arith.maximumf %30, %31 : vector<8x128xf32>
    %c0_11 = arith.constant 0 : index
    %33 = memref.load %arg5[%c0_11] : memref<96xf32, #tpu.memory_space<smem>>
    %34 = vector.broadcast %33 : f32 to vector<8x128xf32>
    %35 = arith.mulf %32, %34 : vector<8x128xf32>
    %36 = arith.addf %9, %35 : vector<8x128xf32>
    %c1_12 = arith.constant 1 : index
    %37 = memref.load %arg5[%c1_12] : memref<96xf32, #tpu.memory_space<smem>>
    %38 = vector.broadcast %37 : f32 to vector<8x128xf32>
    %39 = arith.mulf %32, %38 : vector<8x128xf32>
    %40 = arith.addf %13, %39 : vector<8x128xf32>
    %c2_13 = arith.constant 2 : index
    %41 = memref.load %arg5[%c2_13] : memref<96xf32, #tpu.memory_space<smem>>
    %42 = vector.broadcast %41 : f32 to vector<8x128xf32>
    %43 = arith.mulf %32, %42 : vector<8x128xf32>
    %44 = arith.addf %17, %43 : vector<8x128xf32>
    %c1_14 = arith.constant 1 : index
    %45 = memref.load %arg3[%c1_14] : memref<32xf32, #tpu.memory_space<smem>>
    %46 = vector.broadcast %45 : f32 to vector<8x128xf32>
    %47 = arith.mulf %24, %46 : vector<8x128xf32>
    %c1_15 = arith.constant 1 : index
    %48 = memref.load %arg4[%c1_15] : memref<32xf32, #tpu.memory_space<smem>>
    %49 = vector.broadcast %48 : f32 to vector<8x128xf32>
    %50 = arith.addf %47, %49 : vector<8x128xf32>
    %cst_16 = arith.constant 0.000000e+00 : f32
    %51 = vector.broadcast %cst_16 : f32 to vector<8x128xf32>
    %52 = arith.maximumf %50, %51 : vector<8x128xf32>
    %c3 = arith.constant 3 : index
    %53 = memref.load %arg5[%c3] : memref<96xf32, #tpu.memory_space<smem>>
    %54 = vector.broadcast %53 : f32 to vector<8x128xf32>
    %55 = arith.mulf %52, %54 : vector<8x128xf32>
    %56 = arith.addf %36, %55 : vector<8x128xf32>
    %c4 = arith.constant 4 : index
    %57 = memref.load %arg5[%c4] : memref<96xf32, #tpu.memory_space<smem>>
    %58 = vector.broadcast %57 : f32 to vector<8x128xf32>
    %59 = arith.mulf %52, %58 : vector<8x128xf32>
    %60 = arith.addf %40, %59 : vector<8x128xf32>
    %c5 = arith.constant 5 : index
    %61 = memref.load %arg5[%c5] : memref<96xf32, #tpu.memory_space<smem>>
    %62 = vector.broadcast %61 : f32 to vector<8x128xf32>
    %63 = arith.mulf %52, %62 : vector<8x128xf32>
    %64 = arith.addf %44, %63 : vector<8x128xf32>
    %c2_17 = arith.constant 2 : index
    %65 = memref.load %arg3[%c2_17] : memref<32xf32, #tpu.memory_space<smem>>
    %66 = vector.broadcast %65 : f32 to vector<8x128xf32>
    %67 = arith.mulf %24, %66 : vector<8x128xf32>
    %c2_18 = arith.constant 2 : index
    %68 = memref.load %arg4[%c2_18] : memref<32xf32, #tpu.memory_space<smem>>
    %69 = vector.broadcast %68 : f32 to vector<8x128xf32>
    %70 = arith.addf %67, %69 : vector<8x128xf32>
    %cst_19 = arith.constant 0.000000e+00 : f32
    %71 = vector.broadcast %cst_19 : f32 to vector<8x128xf32>
    %72 = arith.maximumf %70, %71 : vector<8x128xf32>
    %c6 = arith.constant 6 : index
    %73 = memref.load %arg5[%c6] : memref<96xf32, #tpu.memory_space<smem>>
    %74 = vector.broadcast %73 : f32 to vector<8x128xf32>
    %75 = arith.mulf %72, %74 : vector<8x128xf32>
    %76 = arith.addf %56, %75 : vector<8x128xf32>
    %c7 = arith.constant 7 : index
    %77 = memref.load %arg5[%c7] : memref<96xf32, #tpu.memory_space<smem>>
    %78 = vector.broadcast %77 : f32 to vector<8x128xf32>
    %79 = arith.mulf %72, %78 : vector<8x128xf32>
    %80 = arith.addf %60, %79 : vector<8x128xf32>
    %c8 = arith.constant 8 : index
    %81 = memref.load %arg5[%c8] : memref<96xf32, #tpu.memory_space<smem>>
    %82 = vector.broadcast %81 : f32 to vector<8x128xf32>
    %83 = arith.mulf %72, %82 : vector<8x128xf32>
    %84 = arith.addf %64, %83 : vector<8x128xf32>
    %c3_20 = arith.constant 3 : index
    %85 = memref.load %arg3[%c3_20] : memref<32xf32, #tpu.memory_space<smem>>
    %86 = vector.broadcast %85 : f32 to vector<8x128xf32>
    %87 = arith.mulf %24, %86 : vector<8x128xf32>
    %c3_21 = arith.constant 3 : index
    %88 = memref.load %arg4[%c3_21] : memref<32xf32, #tpu.memory_space<smem>>
    %89 = vector.broadcast %88 : f32 to vector<8x128xf32>
    %90 = arith.addf %87, %89 : vector<8x128xf32>
    %cst_22 = arith.constant 0.000000e+00 : f32
    %91 = vector.broadcast %cst_22 : f32 to vector<8x128xf32>
    %92 = arith.maximumf %90, %91 : vector<8x128xf32>
    %c9 = arith.constant 9 : index
    %93 = memref.load %arg5[%c9] : memref<96xf32, #tpu.memory_space<smem>>
    %94 = vector.broadcast %93 : f32 to vector<8x128xf32>
    %95 = arith.mulf %92, %94 : vector<8x128xf32>
    %96 = arith.addf %76, %95 : vector<8x128xf32>
    %c10 = arith.constant 10 : index
    %97 = memref.load %arg5[%c10] : memref<96xf32, #tpu.memory_space<smem>>
    %98 = vector.broadcast %97 : f32 to vector<8x128xf32>
    %99 = arith.mulf %92, %98 : vector<8x128xf32>
    %100 = arith.addf %80, %99 : vector<8x128xf32>
    %c11 = arith.constant 11 : index
    %101 = memref.load %arg5[%c11] : memref<96xf32, #tpu.memory_space<smem>>
    %102 = vector.broadcast %101 : f32 to vector<8x128xf32>
    %103 = arith.mulf %92, %102 : vector<8x128xf32>
    %104 = arith.addf %84, %103 : vector<8x128xf32>
    %c4_23 = arith.constant 4 : index
    %105 = memref.load %arg3[%c4_23] : memref<32xf32, #tpu.memory_space<smem>>
    %106 = vector.broadcast %105 : f32 to vector<8x128xf32>
    %107 = arith.mulf %24, %106 : vector<8x128xf32>
    %c4_24 = arith.constant 4 : index
    %108 = memref.load %arg4[%c4_24] : memref<32xf32, #tpu.memory_space<smem>>
    %109 = vector.broadcast %108 : f32 to vector<8x128xf32>
    %110 = arith.addf %107, %109 : vector<8x128xf32>
    %cst_25 = arith.constant 0.000000e+00 : f32
    %111 = vector.broadcast %cst_25 : f32 to vector<8x128xf32>
    %112 = arith.maximumf %110, %111 : vector<8x128xf32>
    %c12 = arith.constant 12 : index
    %113 = memref.load %arg5[%c12] : memref<96xf32, #tpu.memory_space<smem>>
    %114 = vector.broadcast %113 : f32 to vector<8x128xf32>
    %115 = arith.mulf %112, %114 : vector<8x128xf32>
    %116 = arith.addf %96, %115 : vector<8x128xf32>
    %c13 = arith.constant 13 : index
    %117 = memref.load %arg5[%c13] : memref<96xf32, #tpu.memory_space<smem>>
    %118 = vector.broadcast %117 : f32 to vector<8x128xf32>
    %119 = arith.mulf %112, %118 : vector<8x128xf32>
    %120 = arith.addf %100, %119 : vector<8x128xf32>
    %c14 = arith.constant 14 : index
    %121 = memref.load %arg5[%c14] : memref<96xf32, #tpu.memory_space<smem>>
    %122 = vector.broadcast %121 : f32 to vector<8x128xf32>
    %123 = arith.mulf %112, %122 : vector<8x128xf32>
    %124 = arith.addf %104, %123 : vector<8x128xf32>
    %c5_26 = arith.constant 5 : index
    %125 = memref.load %arg3[%c5_26] : memref<32xf32, #tpu.memory_space<smem>>
    %126 = vector.broadcast %125 : f32 to vector<8x128xf32>
    %127 = arith.mulf %24, %126 : vector<8x128xf32>
    %c5_27 = arith.constant 5 : index
    %128 = memref.load %arg4[%c5_27] : memref<32xf32, #tpu.memory_space<smem>>
    %129 = vector.broadcast %128 : f32 to vector<8x128xf32>
    %130 = arith.addf %127, %129 : vector<8x128xf32>
    %cst_28 = arith.constant 0.000000e+00 : f32
    %131 = vector.broadcast %cst_28 : f32 to vector<8x128xf32>
    %132 = arith.maximumf %130, %131 : vector<8x128xf32>
    %c15 = arith.constant 15 : index
    %133 = memref.load %arg5[%c15] : memref<96xf32, #tpu.memory_space<smem>>
    %134 = vector.broadcast %133 : f32 to vector<8x128xf32>
    %135 = arith.mulf %132, %134 : vector<8x128xf32>
    %136 = arith.addf %116, %135 : vector<8x128xf32>
    %c16 = arith.constant 16 : index
    %137 = memref.load %arg5[%c16] : memref<96xf32, #tpu.memory_space<smem>>
    %138 = vector.broadcast %137 : f32 to vector<8x128xf32>
    %139 = arith.mulf %132, %138 : vector<8x128xf32>
    %140 = arith.addf %120, %139 : vector<8x128xf32>
    %c17 = arith.constant 17 : index
    %141 = memref.load %arg5[%c17] : memref<96xf32, #tpu.memory_space<smem>>
    %142 = vector.broadcast %141 : f32 to vector<8x128xf32>
    %143 = arith.mulf %132, %142 : vector<8x128xf32>
    %144 = arith.addf %124, %143 : vector<8x128xf32>
    %c6_29 = arith.constant 6 : index
    %145 = memref.load %arg3[%c6_29] : memref<32xf32, #tpu.memory_space<smem>>
    %146 = vector.broadcast %145 : f32 to vector<8x128xf32>
    %147 = arith.mulf %24, %146 : vector<8x128xf32>
    %c6_30 = arith.constant 6 : index
    %148 = memref.load %arg4[%c6_30] : memref<32xf32, #tpu.memory_space<smem>>
    %149 = vector.broadcast %148 : f32 to vector<8x128xf32>
    %150 = arith.addf %147, %149 : vector<8x128xf32>
    %cst_31 = arith.constant 0.000000e+00 : f32
    %151 = vector.broadcast %cst_31 : f32 to vector<8x128xf32>
    %152 = arith.maximumf %150, %151 : vector<8x128xf32>
    %c18 = arith.constant 18 : index
    %153 = memref.load %arg5[%c18] : memref<96xf32, #tpu.memory_space<smem>>
    %154 = vector.broadcast %153 : f32 to vector<8x128xf32>
    %155 = arith.mulf %152, %154 : vector<8x128xf32>
    %156 = arith.addf %136, %155 : vector<8x128xf32>
    %c19 = arith.constant 19 : index
    %157 = memref.load %arg5[%c19] : memref<96xf32, #tpu.memory_space<smem>>
    %158 = vector.broadcast %157 : f32 to vector<8x128xf32>
    %159 = arith.mulf %152, %158 : vector<8x128xf32>
    %160 = arith.addf %140, %159 : vector<8x128xf32>
    %c20 = arith.constant 20 : index
    %161 = memref.load %arg5[%c20] : memref<96xf32, #tpu.memory_space<smem>>
    %162 = vector.broadcast %161 : f32 to vector<8x128xf32>
    %163 = arith.mulf %152, %162 : vector<8x128xf32>
    %164 = arith.addf %144, %163 : vector<8x128xf32>
    %c7_32 = arith.constant 7 : index
    %165 = memref.load %arg3[%c7_32] : memref<32xf32, #tpu.memory_space<smem>>
    %166 = vector.broadcast %165 : f32 to vector<8x128xf32>
    %167 = arith.mulf %24, %166 : vector<8x128xf32>
    %c7_33 = arith.constant 7 : index
    %168 = memref.load %arg4[%c7_33] : memref<32xf32, #tpu.memory_space<smem>>
    %169 = vector.broadcast %168 : f32 to vector<8x128xf32>
    %170 = arith.addf %167, %169 : vector<8x128xf32>
    %cst_34 = arith.constant 0.000000e+00 : f32
    %171 = vector.broadcast %cst_34 : f32 to vector<8x128xf32>
    %172 = arith.maximumf %170, %171 : vector<8x128xf32>
    %c21 = arith.constant 21 : index
    %173 = memref.load %arg5[%c21] : memref<96xf32, #tpu.memory_space<smem>>
    %174 = vector.broadcast %173 : f32 to vector<8x128xf32>
    %175 = arith.mulf %172, %174 : vector<8x128xf32>
    %176 = arith.addf %156, %175 : vector<8x128xf32>
    %c22 = arith.constant 22 : index
    %177 = memref.load %arg5[%c22] : memref<96xf32, #tpu.memory_space<smem>>
    %178 = vector.broadcast %177 : f32 to vector<8x128xf32>
    %179 = arith.mulf %172, %178 : vector<8x128xf32>
    %180 = arith.addf %160, %179 : vector<8x128xf32>
    %c23 = arith.constant 23 : index
    %181 = memref.load %arg5[%c23] : memref<96xf32, #tpu.memory_space<smem>>
    %182 = vector.broadcast %181 : f32 to vector<8x128xf32>
    %183 = arith.mulf %172, %182 : vector<8x128xf32>
    %184 = arith.addf %164, %183 : vector<8x128xf32>
    %c8_35 = arith.constant 8 : index
    %185 = memref.load %arg3[%c8_35] : memref<32xf32, #tpu.memory_space<smem>>
    %186 = vector.broadcast %185 : f32 to vector<8x128xf32>
    %187 = arith.mulf %24, %186 : vector<8x128xf32>
    %c8_36 = arith.constant 8 : index
    %188 = memref.load %arg4[%c8_36] : memref<32xf32, #tpu.memory_space<smem>>
    %189 = vector.broadcast %188 : f32 to vector<8x128xf32>
    %190 = arith.addf %187, %189 : vector<8x128xf32>
    %cst_37 = arith.constant 0.000000e+00 : f32
    %191 = vector.broadcast %cst_37 : f32 to vector<8x128xf32>
    %192 = arith.maximumf %190, %191 : vector<8x128xf32>
    %c24 = arith.constant 24 : index
    %193 = memref.load %arg5[%c24] : memref<96xf32, #tpu.memory_space<smem>>
    %194 = vector.broadcast %193 : f32 to vector<8x128xf32>
    %195 = arith.mulf %192, %194 : vector<8x128xf32>
    %196 = arith.addf %176, %195 : vector<8x128xf32>
    %c25 = arith.constant 25 : index
    %197 = memref.load %arg5[%c25] : memref<96xf32, #tpu.memory_space<smem>>
    %198 = vector.broadcast %197 : f32 to vector<8x128xf32>
    %199 = arith.mulf %192, %198 : vector<8x128xf32>
    %200 = arith.addf %180, %199 : vector<8x128xf32>
    %c26 = arith.constant 26 : index
    %201 = memref.load %arg5[%c26] : memref<96xf32, #tpu.memory_space<smem>>
    %202 = vector.broadcast %201 : f32 to vector<8x128xf32>
    %203 = arith.mulf %192, %202 : vector<8x128xf32>
    %204 = arith.addf %184, %203 : vector<8x128xf32>
    %c9_38 = arith.constant 9 : index
    %205 = memref.load %arg3[%c9_38] : memref<32xf32, #tpu.memory_space<smem>>
    %206 = vector.broadcast %205 : f32 to vector<8x128xf32>
    %207 = arith.mulf %24, %206 : vector<8x128xf32>
    %c9_39 = arith.constant 9 : index
    %208 = memref.load %arg4[%c9_39] : memref<32xf32, #tpu.memory_space<smem>>
    %209 = vector.broadcast %208 : f32 to vector<8x128xf32>
    %210 = arith.addf %207, %209 : vector<8x128xf32>
    %cst_40 = arith.constant 0.000000e+00 : f32
    %211 = vector.broadcast %cst_40 : f32 to vector<8x128xf32>
    %212 = arith.maximumf %210, %211 : vector<8x128xf32>
    %c27 = arith.constant 27 : index
    %213 = memref.load %arg5[%c27] : memref<96xf32, #tpu.memory_space<smem>>
    %214 = vector.broadcast %213 : f32 to vector<8x128xf32>
    %215 = arith.mulf %212, %214 : vector<8x128xf32>
    %216 = arith.addf %196, %215 : vector<8x128xf32>
    %c28 = arith.constant 28 : index
    %217 = memref.load %arg5[%c28] : memref<96xf32, #tpu.memory_space<smem>>
    %218 = vector.broadcast %217 : f32 to vector<8x128xf32>
    %219 = arith.mulf %212, %218 : vector<8x128xf32>
    %220 = arith.addf %200, %219 : vector<8x128xf32>
    %c29 = arith.constant 29 : index
    %221 = memref.load %arg5[%c29] : memref<96xf32, #tpu.memory_space<smem>>
    %222 = vector.broadcast %221 : f32 to vector<8x128xf32>
    %223 = arith.mulf %212, %222 : vector<8x128xf32>
    %224 = arith.addf %204, %223 : vector<8x128xf32>
    %c10_41 = arith.constant 10 : index
    %225 = memref.load %arg3[%c10_41] : memref<32xf32, #tpu.memory_space<smem>>
    %226 = vector.broadcast %225 : f32 to vector<8x128xf32>
    %227 = arith.mulf %24, %226 : vector<8x128xf32>
    %c10_42 = arith.constant 10 : index
    %228 = memref.load %arg4[%c10_42] : memref<32xf32, #tpu.memory_space<smem>>
    %229 = vector.broadcast %228 : f32 to vector<8x128xf32>
    %230 = arith.addf %227, %229 : vector<8x128xf32>
    %cst_43 = arith.constant 0.000000e+00 : f32
    %231 = vector.broadcast %cst_43 : f32 to vector<8x128xf32>
    %232 = arith.maximumf %230, %231 : vector<8x128xf32>
    %c30 = arith.constant 30 : index
    %233 = memref.load %arg5[%c30] : memref<96xf32, #tpu.memory_space<smem>>
    %234 = vector.broadcast %233 : f32 to vector<8x128xf32>
    %235 = arith.mulf %232, %234 : vector<8x128xf32>
    %236 = arith.addf %216, %235 : vector<8x128xf32>
    %c31 = arith.constant 31 : index
    %237 = memref.load %arg5[%c31] : memref<96xf32, #tpu.memory_space<smem>>
    %238 = vector.broadcast %237 : f32 to vector<8x128xf32>
    %239 = arith.mulf %232, %238 : vector<8x128xf32>
    %240 = arith.addf %220, %239 : vector<8x128xf32>
    %c32 = arith.constant 32 : index
    %241 = memref.load %arg5[%c32] : memref<96xf32, #tpu.memory_space<smem>>
    %242 = vector.broadcast %241 : f32 to vector<8x128xf32>
    %243 = arith.mulf %232, %242 : vector<8x128xf32>
    %244 = arith.addf %224, %243 : vector<8x128xf32>
    %c11_44 = arith.constant 11 : index
    %245 = memref.load %arg3[%c11_44] : memref<32xf32, #tpu.memory_space<smem>>
    %246 = vector.broadcast %245 : f32 to vector<8x128xf32>
    %247 = arith.mulf %24, %246 : vector<8x128xf32>
    %c11_45 = arith.constant 11 : index
    %248 = memref.load %arg4[%c11_45] : memref<32xf32, #tpu.memory_space<smem>>
    %249 = vector.broadcast %248 : f32 to vector<8x128xf32>
    %250 = arith.addf %247, %249 : vector<8x128xf32>
    %cst_46 = arith.constant 0.000000e+00 : f32
    %251 = vector.broadcast %cst_46 : f32 to vector<8x128xf32>
    %252 = arith.maximumf %250, %251 : vector<8x128xf32>
    %c33 = arith.constant 33 : index
    %253 = memref.load %arg5[%c33] : memref<96xf32, #tpu.memory_space<smem>>
    %254 = vector.broadcast %253 : f32 to vector<8x128xf32>
    %255 = arith.mulf %252, %254 : vector<8x128xf32>
    %256 = arith.addf %236, %255 : vector<8x128xf32>
    %c34 = arith.constant 34 : index
    %257 = memref.load %arg5[%c34] : memref<96xf32, #tpu.memory_space<smem>>
    %258 = vector.broadcast %257 : f32 to vector<8x128xf32>
    %259 = arith.mulf %252, %258 : vector<8x128xf32>
    %260 = arith.addf %240, %259 : vector<8x128xf32>
    %c35 = arith.constant 35 : index
    %261 = memref.load %arg5[%c35] : memref<96xf32, #tpu.memory_space<smem>>
    %262 = vector.broadcast %261 : f32 to vector<8x128xf32>
    %263 = arith.mulf %252, %262 : vector<8x128xf32>
    %264 = arith.addf %244, %263 : vector<8x128xf32>
    %c12_47 = arith.constant 12 : index
    %265 = memref.load %arg3[%c12_47] : memref<32xf32, #tpu.memory_space<smem>>
    %266 = vector.broadcast %265 : f32 to vector<8x128xf32>
    %267 = arith.mulf %24, %266 : vector<8x128xf32>
    %c12_48 = arith.constant 12 : index
    %268 = memref.load %arg4[%c12_48] : memref<32xf32, #tpu.memory_space<smem>>
    %269 = vector.broadcast %268 : f32 to vector<8x128xf32>
    %270 = arith.addf %267, %269 : vector<8x128xf32>
    %cst_49 = arith.constant 0.000000e+00 : f32
    %271 = vector.broadcast %cst_49 : f32 to vector<8x128xf32>
    %272 = arith.maximumf %270, %271 : vector<8x128xf32>
    %c36 = arith.constant 36 : index
    %273 = memref.load %arg5[%c36] : memref<96xf32, #tpu.memory_space<smem>>
    %274 = vector.broadcast %273 : f32 to vector<8x128xf32>
    %275 = arith.mulf %272, %274 : vector<8x128xf32>
    %276 = arith.addf %256, %275 : vector<8x128xf32>
    %c37 = arith.constant 37 : index
    %277 = memref.load %arg5[%c37] : memref<96xf32, #tpu.memory_space<smem>>
    %278 = vector.broadcast %277 : f32 to vector<8x128xf32>
    %279 = arith.mulf %272, %278 : vector<8x128xf32>
    %280 = arith.addf %260, %279 : vector<8x128xf32>
    %c38 = arith.constant 38 : index
    %281 = memref.load %arg5[%c38] : memref<96xf32, #tpu.memory_space<smem>>
    %282 = vector.broadcast %281 : f32 to vector<8x128xf32>
    %283 = arith.mulf %272, %282 : vector<8x128xf32>
    %284 = arith.addf %264, %283 : vector<8x128xf32>
    %c13_50 = arith.constant 13 : index
    %285 = memref.load %arg3[%c13_50] : memref<32xf32, #tpu.memory_space<smem>>
    %286 = vector.broadcast %285 : f32 to vector<8x128xf32>
    %287 = arith.mulf %24, %286 : vector<8x128xf32>
    %c13_51 = arith.constant 13 : index
    %288 = memref.load %arg4[%c13_51] : memref<32xf32, #tpu.memory_space<smem>>
    %289 = vector.broadcast %288 : f32 to vector<8x128xf32>
    %290 = arith.addf %287, %289 : vector<8x128xf32>
    %cst_52 = arith.constant 0.000000e+00 : f32
    %291 = vector.broadcast %cst_52 : f32 to vector<8x128xf32>
    %292 = arith.maximumf %290, %291 : vector<8x128xf32>
    %c39 = arith.constant 39 : index
    %293 = memref.load %arg5[%c39] : memref<96xf32, #tpu.memory_space<smem>>
    %294 = vector.broadcast %293 : f32 to vector<8x128xf32>
    %295 = arith.mulf %292, %294 : vector<8x128xf32>
    %296 = arith.addf %276, %295 : vector<8x128xf32>
    %c40 = arith.constant 40 : index
    %297 = memref.load %arg5[%c40] : memref<96xf32, #tpu.memory_space<smem>>
    %298 = vector.broadcast %297 : f32 to vector<8x128xf32>
    %299 = arith.mulf %292, %298 : vector<8x128xf32>
    %300 = arith.addf %280, %299 : vector<8x128xf32>
    %c41 = arith.constant 41 : index
    %301 = memref.load %arg5[%c41] : memref<96xf32, #tpu.memory_space<smem>>
    %302 = vector.broadcast %301 : f32 to vector<8x128xf32>
    %303 = arith.mulf %292, %302 : vector<8x128xf32>
    %304 = arith.addf %284, %303 : vector<8x128xf32>
    %c14_53 = arith.constant 14 : index
    %305 = memref.load %arg3[%c14_53] : memref<32xf32, #tpu.memory_space<smem>>
    %306 = vector.broadcast %305 : f32 to vector<8x128xf32>
    %307 = arith.mulf %24, %306 : vector<8x128xf32>
    %c14_54 = arith.constant 14 : index
    %308 = memref.load %arg4[%c14_54] : memref<32xf32, #tpu.memory_space<smem>>
    %309 = vector.broadcast %308 : f32 to vector<8x128xf32>
    %310 = arith.addf %307, %309 : vector<8x128xf32>
    %cst_55 = arith.constant 0.000000e+00 : f32
    %311 = vector.broadcast %cst_55 : f32 to vector<8x128xf32>
    %312 = arith.maximumf %310, %311 : vector<8x128xf32>
    %c42 = arith.constant 42 : index
    %313 = memref.load %arg5[%c42] : memref<96xf32, #tpu.memory_space<smem>>
    %314 = vector.broadcast %313 : f32 to vector<8x128xf32>
    %315 = arith.mulf %312, %314 : vector<8x128xf32>
    %316 = arith.addf %296, %315 : vector<8x128xf32>
    %c43 = arith.constant 43 : index
    %317 = memref.load %arg5[%c43] : memref<96xf32, #tpu.memory_space<smem>>
    %318 = vector.broadcast %317 : f32 to vector<8x128xf32>
    %319 = arith.mulf %312, %318 : vector<8x128xf32>
    %320 = arith.addf %300, %319 : vector<8x128xf32>
    %c44 = arith.constant 44 : index
    %321 = memref.load %arg5[%c44] : memref<96xf32, #tpu.memory_space<smem>>
    %322 = vector.broadcast %321 : f32 to vector<8x128xf32>
    %323 = arith.mulf %312, %322 : vector<8x128xf32>
    %324 = arith.addf %304, %323 : vector<8x128xf32>
    %c15_56 = arith.constant 15 : index
    %325 = memref.load %arg3[%c15_56] : memref<32xf32, #tpu.memory_space<smem>>
    %326 = vector.broadcast %325 : f32 to vector<8x128xf32>
    %327 = arith.mulf %24, %326 : vector<8x128xf32>
    %c15_57 = arith.constant 15 : index
    %328 = memref.load %arg4[%c15_57] : memref<32xf32, #tpu.memory_space<smem>>
    %329 = vector.broadcast %328 : f32 to vector<8x128xf32>
    %330 = arith.addf %327, %329 : vector<8x128xf32>
    %cst_58 = arith.constant 0.000000e+00 : f32
    %331 = vector.broadcast %cst_58 : f32 to vector<8x128xf32>
    %332 = arith.maximumf %330, %331 : vector<8x128xf32>
    %c45 = arith.constant 45 : index
    %333 = memref.load %arg5[%c45] : memref<96xf32, #tpu.memory_space<smem>>
    %334 = vector.broadcast %333 : f32 to vector<8x128xf32>
    %335 = arith.mulf %332, %334 : vector<8x128xf32>
    %336 = arith.addf %316, %335 : vector<8x128xf32>
    %c46 = arith.constant 46 : index
    %337 = memref.load %arg5[%c46] : memref<96xf32, #tpu.memory_space<smem>>
    %338 = vector.broadcast %337 : f32 to vector<8x128xf32>
    %339 = arith.mulf %332, %338 : vector<8x128xf32>
    %340 = arith.addf %320, %339 : vector<8x128xf32>
    %c47 = arith.constant 47 : index
    %341 = memref.load %arg5[%c47] : memref<96xf32, #tpu.memory_space<smem>>
    %342 = vector.broadcast %341 : f32 to vector<8x128xf32>
    %343 = arith.mulf %332, %342 : vector<8x128xf32>
    %344 = arith.addf %324, %343 : vector<8x128xf32>
    %c16_59 = arith.constant 16 : index
    %345 = memref.load %arg3[%c16_59] : memref<32xf32, #tpu.memory_space<smem>>
    %346 = vector.broadcast %345 : f32 to vector<8x128xf32>
    %347 = arith.mulf %24, %346 : vector<8x128xf32>
    %c16_60 = arith.constant 16 : index
    %348 = memref.load %arg4[%c16_60] : memref<32xf32, #tpu.memory_space<smem>>
    %349 = vector.broadcast %348 : f32 to vector<8x128xf32>
    %350 = arith.addf %347, %349 : vector<8x128xf32>
    %cst_61 = arith.constant 0.000000e+00 : f32
    %351 = vector.broadcast %cst_61 : f32 to vector<8x128xf32>
    %352 = arith.maximumf %350, %351 : vector<8x128xf32>
    %c48 = arith.constant 48 : index
    %353 = memref.load %arg5[%c48] : memref<96xf32, #tpu.memory_space<smem>>
    %354 = vector.broadcast %353 : f32 to vector<8x128xf32>
    %355 = arith.mulf %352, %354 : vector<8x128xf32>
    %356 = arith.addf %336, %355 : vector<8x128xf32>
    %c49 = arith.constant 49 : index
    %357 = memref.load %arg5[%c49] : memref<96xf32, #tpu.memory_space<smem>>
    %358 = vector.broadcast %357 : f32 to vector<8x128xf32>
    %359 = arith.mulf %352, %358 : vector<8x128xf32>
    %360 = arith.addf %340, %359 : vector<8x128xf32>
    %c50 = arith.constant 50 : index
    %361 = memref.load %arg5[%c50] : memref<96xf32, #tpu.memory_space<smem>>
    %362 = vector.broadcast %361 : f32 to vector<8x128xf32>
    %363 = arith.mulf %352, %362 : vector<8x128xf32>
    %364 = arith.addf %344, %363 : vector<8x128xf32>
    %c17_62 = arith.constant 17 : index
    %365 = memref.load %arg3[%c17_62] : memref<32xf32, #tpu.memory_space<smem>>
    %366 = vector.broadcast %365 : f32 to vector<8x128xf32>
    %367 = arith.mulf %24, %366 : vector<8x128xf32>
    %c17_63 = arith.constant 17 : index
    %368 = memref.load %arg4[%c17_63] : memref<32xf32, #tpu.memory_space<smem>>
    %369 = vector.broadcast %368 : f32 to vector<8x128xf32>
    %370 = arith.addf %367, %369 : vector<8x128xf32>
    %cst_64 = arith.constant 0.000000e+00 : f32
    %371 = vector.broadcast %cst_64 : f32 to vector<8x128xf32>
    %372 = arith.maximumf %370, %371 : vector<8x128xf32>
    %c51 = arith.constant 51 : index
    %373 = memref.load %arg5[%c51] : memref<96xf32, #tpu.memory_space<smem>>
    %374 = vector.broadcast %373 : f32 to vector<8x128xf32>
    %375 = arith.mulf %372, %374 : vector<8x128xf32>
    %376 = arith.addf %356, %375 : vector<8x128xf32>
    %c52 = arith.constant 52 : index
    %377 = memref.load %arg5[%c52] : memref<96xf32, #tpu.memory_space<smem>>
    %378 = vector.broadcast %377 : f32 to vector<8x128xf32>
    %379 = arith.mulf %372, %378 : vector<8x128xf32>
    %380 = arith.addf %360, %379 : vector<8x128xf32>
    %c53 = arith.constant 53 : index
    %381 = memref.load %arg5[%c53] : memref<96xf32, #tpu.memory_space<smem>>
    %382 = vector.broadcast %381 : f32 to vector<8x128xf32>
    %383 = arith.mulf %372, %382 : vector<8x128xf32>
    %384 = arith.addf %364, %383 : vector<8x128xf32>
    %c18_65 = arith.constant 18 : index
    %385 = memref.load %arg3[%c18_65] : memref<32xf32, #tpu.memory_space<smem>>
    %386 = vector.broadcast %385 : f32 to vector<8x128xf32>
    %387 = arith.mulf %24, %386 : vector<8x128xf32>
    %c18_66 = arith.constant 18 : index
    %388 = memref.load %arg4[%c18_66] : memref<32xf32, #tpu.memory_space<smem>>
    %389 = vector.broadcast %388 : f32 to vector<8x128xf32>
    %390 = arith.addf %387, %389 : vector<8x128xf32>
    %cst_67 = arith.constant 0.000000e+00 : f32
    %391 = vector.broadcast %cst_67 : f32 to vector<8x128xf32>
    %392 = arith.maximumf %390, %391 : vector<8x128xf32>
    %c54 = arith.constant 54 : index
    %393 = memref.load %arg5[%c54] : memref<96xf32, #tpu.memory_space<smem>>
    %394 = vector.broadcast %393 : f32 to vector<8x128xf32>
    %395 = arith.mulf %392, %394 : vector<8x128xf32>
    %396 = arith.addf %376, %395 : vector<8x128xf32>
    %c55 = arith.constant 55 : index
    %397 = memref.load %arg5[%c55] : memref<96xf32, #tpu.memory_space<smem>>
    %398 = vector.broadcast %397 : f32 to vector<8x128xf32>
    %399 = arith.mulf %392, %398 : vector<8x128xf32>
    %400 = arith.addf %380, %399 : vector<8x128xf32>
    %c56 = arith.constant 56 : index
    %401 = memref.load %arg5[%c56] : memref<96xf32, #tpu.memory_space<smem>>
    %402 = vector.broadcast %401 : f32 to vector<8x128xf32>
    %403 = arith.mulf %392, %402 : vector<8x128xf32>
    %404 = arith.addf %384, %403 : vector<8x128xf32>
    %c19_68 = arith.constant 19 : index
    %405 = memref.load %arg3[%c19_68] : memref<32xf32, #tpu.memory_space<smem>>
    %406 = vector.broadcast %405 : f32 to vector<8x128xf32>
    %407 = arith.mulf %24, %406 : vector<8x128xf32>
    %c19_69 = arith.constant 19 : index
    %408 = memref.load %arg4[%c19_69] : memref<32xf32, #tpu.memory_space<smem>>
    %409 = vector.broadcast %408 : f32 to vector<8x128xf32>
    %410 = arith.addf %407, %409 : vector<8x128xf32>
    %cst_70 = arith.constant 0.000000e+00 : f32
    %411 = vector.broadcast %cst_70 : f32 to vector<8x128xf32>
    %412 = arith.maximumf %410, %411 : vector<8x128xf32>
    %c57 = arith.constant 57 : index
    %413 = memref.load %arg5[%c57] : memref<96xf32, #tpu.memory_space<smem>>
    %414 = vector.broadcast %413 : f32 to vector<8x128xf32>
    %415 = arith.mulf %412, %414 : vector<8x128xf32>
    %416 = arith.addf %396, %415 : vector<8x128xf32>
    %c58 = arith.constant 58 : index
    %417 = memref.load %arg5[%c58] : memref<96xf32, #tpu.memory_space<smem>>
    %418 = vector.broadcast %417 : f32 to vector<8x128xf32>
    %419 = arith.mulf %412, %418 : vector<8x128xf32>
    %420 = arith.addf %400, %419 : vector<8x128xf32>
    %c59 = arith.constant 59 : index
    %421 = memref.load %arg5[%c59] : memref<96xf32, #tpu.memory_space<smem>>
    %422 = vector.broadcast %421 : f32 to vector<8x128xf32>
    %423 = arith.mulf %412, %422 : vector<8x128xf32>
    %424 = arith.addf %404, %423 : vector<8x128xf32>
    %c20_71 = arith.constant 20 : index
    %425 = memref.load %arg3[%c20_71] : memref<32xf32, #tpu.memory_space<smem>>
    %426 = vector.broadcast %425 : f32 to vector<8x128xf32>
    %427 = arith.mulf %24, %426 : vector<8x128xf32>
    %c20_72 = arith.constant 20 : index
    %428 = memref.load %arg4[%c20_72] : memref<32xf32, #tpu.memory_space<smem>>
    %429 = vector.broadcast %428 : f32 to vector<8x128xf32>
    %430 = arith.addf %427, %429 : vector<8x128xf32>
    %cst_73 = arith.constant 0.000000e+00 : f32
    %431 = vector.broadcast %cst_73 : f32 to vector<8x128xf32>
    %432 = arith.maximumf %430, %431 : vector<8x128xf32>
    %c60 = arith.constant 60 : index
    %433 = memref.load %arg5[%c60] : memref<96xf32, #tpu.memory_space<smem>>
    %434 = vector.broadcast %433 : f32 to vector<8x128xf32>
    %435 = arith.mulf %432, %434 : vector<8x128xf32>
    %436 = arith.addf %416, %435 : vector<8x128xf32>
    %c61 = arith.constant 61 : index
    %437 = memref.load %arg5[%c61] : memref<96xf32, #tpu.memory_space<smem>>
    %438 = vector.broadcast %437 : f32 to vector<8x128xf32>
    %439 = arith.mulf %432, %438 : vector<8x128xf32>
    %440 = arith.addf %420, %439 : vector<8x128xf32>
    %c62 = arith.constant 62 : index
    %441 = memref.load %arg5[%c62] : memref<96xf32, #tpu.memory_space<smem>>
    %442 = vector.broadcast %441 : f32 to vector<8x128xf32>
    %443 = arith.mulf %432, %442 : vector<8x128xf32>
    %444 = arith.addf %424, %443 : vector<8x128xf32>
    %c21_74 = arith.constant 21 : index
    %445 = memref.load %arg3[%c21_74] : memref<32xf32, #tpu.memory_space<smem>>
    %446 = vector.broadcast %445 : f32 to vector<8x128xf32>
    %447 = arith.mulf %24, %446 : vector<8x128xf32>
    %c21_75 = arith.constant 21 : index
    %448 = memref.load %arg4[%c21_75] : memref<32xf32, #tpu.memory_space<smem>>
    %449 = vector.broadcast %448 : f32 to vector<8x128xf32>
    %450 = arith.addf %447, %449 : vector<8x128xf32>
    %cst_76 = arith.constant 0.000000e+00 : f32
    %451 = vector.broadcast %cst_76 : f32 to vector<8x128xf32>
    %452 = arith.maximumf %450, %451 : vector<8x128xf32>
    %c63 = arith.constant 63 : index
    %453 = memref.load %arg5[%c63] : memref<96xf32, #tpu.memory_space<smem>>
    %454 = vector.broadcast %453 : f32 to vector<8x128xf32>
    %455 = arith.mulf %452, %454 : vector<8x128xf32>
    %456 = arith.addf %436, %455 : vector<8x128xf32>
    %c64 = arith.constant 64 : index
    %457 = memref.load %arg5[%c64] : memref<96xf32, #tpu.memory_space<smem>>
    %458 = vector.broadcast %457 : f32 to vector<8x128xf32>
    %459 = arith.mulf %452, %458 : vector<8x128xf32>
    %460 = arith.addf %440, %459 : vector<8x128xf32>
    %c65 = arith.constant 65 : index
    %461 = memref.load %arg5[%c65] : memref<96xf32, #tpu.memory_space<smem>>
    %462 = vector.broadcast %461 : f32 to vector<8x128xf32>
    %463 = arith.mulf %452, %462 : vector<8x128xf32>
    %464 = arith.addf %444, %463 : vector<8x128xf32>
    %c22_77 = arith.constant 22 : index
    %465 = memref.load %arg3[%c22_77] : memref<32xf32, #tpu.memory_space<smem>>
    %466 = vector.broadcast %465 : f32 to vector<8x128xf32>
    %467 = arith.mulf %24, %466 : vector<8x128xf32>
    %c22_78 = arith.constant 22 : index
    %468 = memref.load %arg4[%c22_78] : memref<32xf32, #tpu.memory_space<smem>>
    %469 = vector.broadcast %468 : f32 to vector<8x128xf32>
    %470 = arith.addf %467, %469 : vector<8x128xf32>
    %cst_79 = arith.constant 0.000000e+00 : f32
    %471 = vector.broadcast %cst_79 : f32 to vector<8x128xf32>
    %472 = arith.maximumf %470, %471 : vector<8x128xf32>
    %c66 = arith.constant 66 : index
    %473 = memref.load %arg5[%c66] : memref<96xf32, #tpu.memory_space<smem>>
    %474 = vector.broadcast %473 : f32 to vector<8x128xf32>
    %475 = arith.mulf %472, %474 : vector<8x128xf32>
    %476 = arith.addf %456, %475 : vector<8x128xf32>
    %c67 = arith.constant 67 : index
    %477 = memref.load %arg5[%c67] : memref<96xf32, #tpu.memory_space<smem>>
    %478 = vector.broadcast %477 : f32 to vector<8x128xf32>
    %479 = arith.mulf %472, %478 : vector<8x128xf32>
    %480 = arith.addf %460, %479 : vector<8x128xf32>
    %c68 = arith.constant 68 : index
    %481 = memref.load %arg5[%c68] : memref<96xf32, #tpu.memory_space<smem>>
    %482 = vector.broadcast %481 : f32 to vector<8x128xf32>
    %483 = arith.mulf %472, %482 : vector<8x128xf32>
    %484 = arith.addf %464, %483 : vector<8x128xf32>
    %c23_80 = arith.constant 23 : index
    %485 = memref.load %arg3[%c23_80] : memref<32xf32, #tpu.memory_space<smem>>
    %486 = vector.broadcast %485 : f32 to vector<8x128xf32>
    %487 = arith.mulf %24, %486 : vector<8x128xf32>
    %c23_81 = arith.constant 23 : index
    %488 = memref.load %arg4[%c23_81] : memref<32xf32, #tpu.memory_space<smem>>
    %489 = vector.broadcast %488 : f32 to vector<8x128xf32>
    %490 = arith.addf %487, %489 : vector<8x128xf32>
    %cst_82 = arith.constant 0.000000e+00 : f32
    %491 = vector.broadcast %cst_82 : f32 to vector<8x128xf32>
    %492 = arith.maximumf %490, %491 : vector<8x128xf32>
    %c69 = arith.constant 69 : index
    %493 = memref.load %arg5[%c69] : memref<96xf32, #tpu.memory_space<smem>>
    %494 = vector.broadcast %493 : f32 to vector<8x128xf32>
    %495 = arith.mulf %492, %494 : vector<8x128xf32>
    %496 = arith.addf %476, %495 : vector<8x128xf32>
    %c70 = arith.constant 70 : index
    %497 = memref.load %arg5[%c70] : memref<96xf32, #tpu.memory_space<smem>>
    %498 = vector.broadcast %497 : f32 to vector<8x128xf32>
    %499 = arith.mulf %492, %498 : vector<8x128xf32>
    %500 = arith.addf %480, %499 : vector<8x128xf32>
    %c71 = arith.constant 71 : index
    %501 = memref.load %arg5[%c71] : memref<96xf32, #tpu.memory_space<smem>>
    %502 = vector.broadcast %501 : f32 to vector<8x128xf32>
    %503 = arith.mulf %492, %502 : vector<8x128xf32>
    %504 = arith.addf %484, %503 : vector<8x128xf32>
    %c24_83 = arith.constant 24 : index
    %505 = memref.load %arg3[%c24_83] : memref<32xf32, #tpu.memory_space<smem>>
    %506 = vector.broadcast %505 : f32 to vector<8x128xf32>
    %507 = arith.mulf %24, %506 : vector<8x128xf32>
    %c24_84 = arith.constant 24 : index
    %508 = memref.load %arg4[%c24_84] : memref<32xf32, #tpu.memory_space<smem>>
    %509 = vector.broadcast %508 : f32 to vector<8x128xf32>
    %510 = arith.addf %507, %509 : vector<8x128xf32>
    %cst_85 = arith.constant 0.000000e+00 : f32
    %511 = vector.broadcast %cst_85 : f32 to vector<8x128xf32>
    %512 = arith.maximumf %510, %511 : vector<8x128xf32>
    %c72 = arith.constant 72 : index
    %513 = memref.load %arg5[%c72] : memref<96xf32, #tpu.memory_space<smem>>
    %514 = vector.broadcast %513 : f32 to vector<8x128xf32>
    %515 = arith.mulf %512, %514 : vector<8x128xf32>
    %516 = arith.addf %496, %515 : vector<8x128xf32>
    %c73 = arith.constant 73 : index
    %517 = memref.load %arg5[%c73] : memref<96xf32, #tpu.memory_space<smem>>
    %518 = vector.broadcast %517 : f32 to vector<8x128xf32>
    %519 = arith.mulf %512, %518 : vector<8x128xf32>
    %520 = arith.addf %500, %519 : vector<8x128xf32>
    %c74 = arith.constant 74 : index
    %521 = memref.load %arg5[%c74] : memref<96xf32, #tpu.memory_space<smem>>
    %522 = vector.broadcast %521 : f32 to vector<8x128xf32>
    %523 = arith.mulf %512, %522 : vector<8x128xf32>
    %524 = arith.addf %504, %523 : vector<8x128xf32>
    %c25_86 = arith.constant 25 : index
    %525 = memref.load %arg3[%c25_86] : memref<32xf32, #tpu.memory_space<smem>>
    %526 = vector.broadcast %525 : f32 to vector<8x128xf32>
    %527 = arith.mulf %24, %526 : vector<8x128xf32>
    %c25_87 = arith.constant 25 : index
    %528 = memref.load %arg4[%c25_87] : memref<32xf32, #tpu.memory_space<smem>>
    %529 = vector.broadcast %528 : f32 to vector<8x128xf32>
    %530 = arith.addf %527, %529 : vector<8x128xf32>
    %cst_88 = arith.constant 0.000000e+00 : f32
    %531 = vector.broadcast %cst_88 : f32 to vector<8x128xf32>
    %532 = arith.maximumf %530, %531 : vector<8x128xf32>
    %c75 = arith.constant 75 : index
    %533 = memref.load %arg5[%c75] : memref<96xf32, #tpu.memory_space<smem>>
    %534 = vector.broadcast %533 : f32 to vector<8x128xf32>
    %535 = arith.mulf %532, %534 : vector<8x128xf32>
    %536 = arith.addf %516, %535 : vector<8x128xf32>
    %c76 = arith.constant 76 : index
    %537 = memref.load %arg5[%c76] : memref<96xf32, #tpu.memory_space<smem>>
    %538 = vector.broadcast %537 : f32 to vector<8x128xf32>
    %539 = arith.mulf %532, %538 : vector<8x128xf32>
    %540 = arith.addf %520, %539 : vector<8x128xf32>
    %c77 = arith.constant 77 : index
    %541 = memref.load %arg5[%c77] : memref<96xf32, #tpu.memory_space<smem>>
    %542 = vector.broadcast %541 : f32 to vector<8x128xf32>
    %543 = arith.mulf %532, %542 : vector<8x128xf32>
    %544 = arith.addf %524, %543 : vector<8x128xf32>
    %c26_89 = arith.constant 26 : index
    %545 = memref.load %arg3[%c26_89] : memref<32xf32, #tpu.memory_space<smem>>
    %546 = vector.broadcast %545 : f32 to vector<8x128xf32>
    %547 = arith.mulf %24, %546 : vector<8x128xf32>
    %c26_90 = arith.constant 26 : index
    %548 = memref.load %arg4[%c26_90] : memref<32xf32, #tpu.memory_space<smem>>
    %549 = vector.broadcast %548 : f32 to vector<8x128xf32>
    %550 = arith.addf %547, %549 : vector<8x128xf32>
    %cst_91 = arith.constant 0.000000e+00 : f32
    %551 = vector.broadcast %cst_91 : f32 to vector<8x128xf32>
    %552 = arith.maximumf %550, %551 : vector<8x128xf32>
    %c78 = arith.constant 78 : index
    %553 = memref.load %arg5[%c78] : memref<96xf32, #tpu.memory_space<smem>>
    %554 = vector.broadcast %553 : f32 to vector<8x128xf32>
    %555 = arith.mulf %552, %554 : vector<8x128xf32>
    %556 = arith.addf %536, %555 : vector<8x128xf32>
    %c79 = arith.constant 79 : index
    %557 = memref.load %arg5[%c79] : memref<96xf32, #tpu.memory_space<smem>>
    %558 = vector.broadcast %557 : f32 to vector<8x128xf32>
    %559 = arith.mulf %552, %558 : vector<8x128xf32>
    %560 = arith.addf %540, %559 : vector<8x128xf32>
    %c80 = arith.constant 80 : index
    %561 = memref.load %arg5[%c80] : memref<96xf32, #tpu.memory_space<smem>>
    %562 = vector.broadcast %561 : f32 to vector<8x128xf32>
    %563 = arith.mulf %552, %562 : vector<8x128xf32>
    %564 = arith.addf %544, %563 : vector<8x128xf32>
    %c27_92 = arith.constant 27 : index
    %565 = memref.load %arg3[%c27_92] : memref<32xf32, #tpu.memory_space<smem>>
    %566 = vector.broadcast %565 : f32 to vector<8x128xf32>
    %567 = arith.mulf %24, %566 : vector<8x128xf32>
    %c27_93 = arith.constant 27 : index
    %568 = memref.load %arg4[%c27_93] : memref<32xf32, #tpu.memory_space<smem>>
    %569 = vector.broadcast %568 : f32 to vector<8x128xf32>
    %570 = arith.addf %567, %569 : vector<8x128xf32>
    %cst_94 = arith.constant 0.000000e+00 : f32
    %571 = vector.broadcast %cst_94 : f32 to vector<8x128xf32>
    %572 = arith.maximumf %570, %571 : vector<8x128xf32>
    %c81 = arith.constant 81 : index
    %573 = memref.load %arg5[%c81] : memref<96xf32, #tpu.memory_space<smem>>
    %574 = vector.broadcast %573 : f32 to vector<8x128xf32>
    %575 = arith.mulf %572, %574 : vector<8x128xf32>
    %576 = arith.addf %556, %575 : vector<8x128xf32>
    %c82 = arith.constant 82 : index
    %577 = memref.load %arg5[%c82] : memref<96xf32, #tpu.memory_space<smem>>
    %578 = vector.broadcast %577 : f32 to vector<8x128xf32>
    %579 = arith.mulf %572, %578 : vector<8x128xf32>
    %580 = arith.addf %560, %579 : vector<8x128xf32>
    %c83 = arith.constant 83 : index
    %581 = memref.load %arg5[%c83] : memref<96xf32, #tpu.memory_space<smem>>
    %582 = vector.broadcast %581 : f32 to vector<8x128xf32>
    %583 = arith.mulf %572, %582 : vector<8x128xf32>
    %584 = arith.addf %564, %583 : vector<8x128xf32>
    %c28_95 = arith.constant 28 : index
    %585 = memref.load %arg3[%c28_95] : memref<32xf32, #tpu.memory_space<smem>>
    %586 = vector.broadcast %585 : f32 to vector<8x128xf32>
    %587 = arith.mulf %24, %586 : vector<8x128xf32>
    %c28_96 = arith.constant 28 : index
    %588 = memref.load %arg4[%c28_96] : memref<32xf32, #tpu.memory_space<smem>>
    %589 = vector.broadcast %588 : f32 to vector<8x128xf32>
    %590 = arith.addf %587, %589 : vector<8x128xf32>
    %cst_97 = arith.constant 0.000000e+00 : f32
    %591 = vector.broadcast %cst_97 : f32 to vector<8x128xf32>
    %592 = arith.maximumf %590, %591 : vector<8x128xf32>
    %c84 = arith.constant 84 : index
    %593 = memref.load %arg5[%c84] : memref<96xf32, #tpu.memory_space<smem>>
    %594 = vector.broadcast %593 : f32 to vector<8x128xf32>
    %595 = arith.mulf %592, %594 : vector<8x128xf32>
    %596 = arith.addf %576, %595 : vector<8x128xf32>
    %c85 = arith.constant 85 : index
    %597 = memref.load %arg5[%c85] : memref<96xf32, #tpu.memory_space<smem>>
    %598 = vector.broadcast %597 : f32 to vector<8x128xf32>
    %599 = arith.mulf %592, %598 : vector<8x128xf32>
    %600 = arith.addf %580, %599 : vector<8x128xf32>
    %c86 = arith.constant 86 : index
    %601 = memref.load %arg5[%c86] : memref<96xf32, #tpu.memory_space<smem>>
    %602 = vector.broadcast %601 : f32 to vector<8x128xf32>
    %603 = arith.mulf %592, %602 : vector<8x128xf32>
    %604 = arith.addf %584, %603 : vector<8x128xf32>
    %c29_98 = arith.constant 29 : index
    %605 = memref.load %arg3[%c29_98] : memref<32xf32, #tpu.memory_space<smem>>
    %606 = vector.broadcast %605 : f32 to vector<8x128xf32>
    %607 = arith.mulf %24, %606 : vector<8x128xf32>
    %c29_99 = arith.constant 29 : index
    %608 = memref.load %arg4[%c29_99] : memref<32xf32, #tpu.memory_space<smem>>
    %609 = vector.broadcast %608 : f32 to vector<8x128xf32>
    %610 = arith.addf %607, %609 : vector<8x128xf32>
    %cst_100 = arith.constant 0.000000e+00 : f32
    %611 = vector.broadcast %cst_100 : f32 to vector<8x128xf32>
    %612 = arith.maximumf %610, %611 : vector<8x128xf32>
    %c87 = arith.constant 87 : index
    %613 = memref.load %arg5[%c87] : memref<96xf32, #tpu.memory_space<smem>>
    %614 = vector.broadcast %613 : f32 to vector<8x128xf32>
    %615 = arith.mulf %612, %614 : vector<8x128xf32>
    %616 = arith.addf %596, %615 : vector<8x128xf32>
    %c88 = arith.constant 88 : index
    %617 = memref.load %arg5[%c88] : memref<96xf32, #tpu.memory_space<smem>>
    %618 = vector.broadcast %617 : f32 to vector<8x128xf32>
    %619 = arith.mulf %612, %618 : vector<8x128xf32>
    %620 = arith.addf %600, %619 : vector<8x128xf32>
    %c89 = arith.constant 89 : index
    %621 = memref.load %arg5[%c89] : memref<96xf32, #tpu.memory_space<smem>>
    %622 = vector.broadcast %621 : f32 to vector<8x128xf32>
    %623 = arith.mulf %612, %622 : vector<8x128xf32>
    %624 = arith.addf %604, %623 : vector<8x128xf32>
    %c30_101 = arith.constant 30 : index
    %625 = memref.load %arg3[%c30_101] : memref<32xf32, #tpu.memory_space<smem>>
    %626 = vector.broadcast %625 : f32 to vector<8x128xf32>
    %627 = arith.mulf %24, %626 : vector<8x128xf32>
    %c30_102 = arith.constant 30 : index
    %628 = memref.load %arg4[%c30_102] : memref<32xf32, #tpu.memory_space<smem>>
    %629 = vector.broadcast %628 : f32 to vector<8x128xf32>
    %630 = arith.addf %627, %629 : vector<8x128xf32>
    %cst_103 = arith.constant 0.000000e+00 : f32
    %631 = vector.broadcast %cst_103 : f32 to vector<8x128xf32>
    %632 = arith.maximumf %630, %631 : vector<8x128xf32>
    %c90 = arith.constant 90 : index
    %633 = memref.load %arg5[%c90] : memref<96xf32, #tpu.memory_space<smem>>
    %634 = vector.broadcast %633 : f32 to vector<8x128xf32>
    %635 = arith.mulf %632, %634 : vector<8x128xf32>
    %636 = arith.addf %616, %635 : vector<8x128xf32>
    %c91 = arith.constant 91 : index
    %637 = memref.load %arg5[%c91] : memref<96xf32, #tpu.memory_space<smem>>
    %638 = vector.broadcast %637 : f32 to vector<8x128xf32>
    %639 = arith.mulf %632, %638 : vector<8x128xf32>
    %640 = arith.addf %620, %639 : vector<8x128xf32>
    %c92 = arith.constant 92 : index
    %641 = memref.load %arg5[%c92] : memref<96xf32, #tpu.memory_space<smem>>
    %642 = vector.broadcast %641 : f32 to vector<8x128xf32>
    %643 = arith.mulf %632, %642 : vector<8x128xf32>
    %644 = arith.addf %624, %643 : vector<8x128xf32>
    %c31_104 = arith.constant 31 : index
    %645 = memref.load %arg3[%c31_104] : memref<32xf32, #tpu.memory_space<smem>>
    %646 = vector.broadcast %645 : f32 to vector<8x128xf32>
    %647 = arith.mulf %24, %646 : vector<8x128xf32>
    %c31_105 = arith.constant 31 : index
    %648 = memref.load %arg4[%c31_105] : memref<32xf32, #tpu.memory_space<smem>>
    %649 = vector.broadcast %648 : f32 to vector<8x128xf32>
    %650 = arith.addf %647, %649 : vector<8x128xf32>
    %cst_106 = arith.constant 0.000000e+00 : f32
    %651 = vector.broadcast %cst_106 : f32 to vector<8x128xf32>
    %652 = arith.maximumf %650, %651 : vector<8x128xf32>
    %c93 = arith.constant 93 : index
    %653 = memref.load %arg5[%c93] : memref<96xf32, #tpu.memory_space<smem>>
    %654 = vector.broadcast %653 : f32 to vector<8x128xf32>
    %655 = arith.mulf %652, %654 : vector<8x128xf32>
    %656 = arith.addf %636, %655 : vector<8x128xf32>
    %c94 = arith.constant 94 : index
    %657 = memref.load %arg5[%c94] : memref<96xf32, #tpu.memory_space<smem>>
    %658 = vector.broadcast %657 : f32 to vector<8x128xf32>
    %659 = arith.mulf %652, %658 : vector<8x128xf32>
    %660 = arith.addf %640, %659 : vector<8x128xf32>
    %c95 = arith.constant 95 : index
    %661 = memref.load %arg5[%c95] : memref<96xf32, #tpu.memory_space<smem>>
    %662 = vector.broadcast %661 : f32 to vector<8x128xf32>
    %663 = arith.mulf %652, %662 : vector<8x128xf32>
    %664 = arith.addf %644, %663 : vector<8x128xf32>
    %c1_107 = arith.constant 1 : index
    %c0_108 = arith.constant 0 : index
    %665 = arith.index_cast %5 : i32 to index
    %c0_109 = arith.constant 0 : index
    %666 = vector.load %arg2[%c1_107, %c0_108, %665, %c0_109] : memref<2x1x8x128xf32, #tpu.memory_space<vmem>>, vector<1x1x8x128xf32>
    %667 = vector.shape_cast %666 : vector<1x1x8x128xf32> to vector<8x128xf32>
    %668 = vector.broadcast %0 : f32 to vector<8x128xf32>
    %669 = arith.subf %667, %668 : vector<8x128xf32>
    %670 = vector.broadcast %1 : f32 to vector<8x128xf32>
    %671 = arith.mulf %669, %670 : vector<8x128xf32>
    %c0_110 = arith.constant 0 : index
    %672 = memref.load %arg3[%c0_110] : memref<32xf32, #tpu.memory_space<smem>>
    %673 = vector.broadcast %672 : f32 to vector<8x128xf32>
    %674 = arith.mulf %671, %673 : vector<8x128xf32>
    %c0_111 = arith.constant 0 : index
    %675 = memref.load %arg4[%c0_111] : memref<32xf32, #tpu.memory_space<smem>>
    %676 = vector.broadcast %675 : f32 to vector<8x128xf32>
    %677 = arith.addf %674, %676 : vector<8x128xf32>
    %cst_112 = arith.constant 0.000000e+00 : f32
    %678 = vector.broadcast %cst_112 : f32 to vector<8x128xf32>
    %679 = arith.maximumf %677, %678 : vector<8x128xf32>
    %c0_113 = arith.constant 0 : index
    %680 = memref.load %arg5[%c0_113] : memref<96xf32, #tpu.memory_space<smem>>
    %681 = vector.broadcast %680 : f32 to vector<8x128xf32>
    %682 = arith.mulf %679, %681 : vector<8x128xf32>
    %683 = arith.addf %656, %682 : vector<8x128xf32>
    %c1_114 = arith.constant 1 : index
    %684 = memref.load %arg5[%c1_114] : memref<96xf32, #tpu.memory_space<smem>>
    %685 = vector.broadcast %684 : f32 to vector<8x128xf32>
    %686 = arith.mulf %679, %685 : vector<8x128xf32>
    %687 = arith.addf %660, %686 : vector<8x128xf32>
    %c2_115 = arith.constant 2 : index
    %688 = memref.load %arg5[%c2_115] : memref<96xf32, #tpu.memory_space<smem>>
    %689 = vector.broadcast %688 : f32 to vector<8x128xf32>
    %690 = arith.mulf %679, %689 : vector<8x128xf32>
    %691 = arith.addf %664, %690 : vector<8x128xf32>
    %c1_116 = arith.constant 1 : index
    %692 = memref.load %arg3[%c1_116] : memref<32xf32, #tpu.memory_space<smem>>
    %693 = vector.broadcast %692 : f32 to vector<8x128xf32>
    %694 = arith.mulf %671, %693 : vector<8x128xf32>
    %c1_117 = arith.constant 1 : index
    %695 = memref.load %arg4[%c1_117] : memref<32xf32, #tpu.memory_space<smem>>
    %696 = vector.broadcast %695 : f32 to vector<8x128xf32>
    %697 = arith.addf %694, %696 : vector<8x128xf32>
    %cst_118 = arith.constant 0.000000e+00 : f32
    %698 = vector.broadcast %cst_118 : f32 to vector<8x128xf32>
    %699 = arith.maximumf %697, %698 : vector<8x128xf32>
    %c3_119 = arith.constant 3 : index
    %700 = memref.load %arg5[%c3_119] : memref<96xf32, #tpu.memory_space<smem>>
    %701 = vector.broadcast %700 : f32 to vector<8x128xf32>
    %702 = arith.mulf %699, %701 : vector<8x128xf32>
    %703 = arith.addf %683, %702 : vector<8x128xf32>
    %c4_120 = arith.constant 4 : index
    %704 = memref.load %arg5[%c4_120] : memref<96xf32, #tpu.memory_space<smem>>
    %705 = vector.broadcast %704 : f32 to vector<8x128xf32>
    %706 = arith.mulf %699, %705 : vector<8x128xf32>
    %707 = arith.addf %687, %706 : vector<8x128xf32>
    %c5_121 = arith.constant 5 : index
    %708 = memref.load %arg5[%c5_121] : memref<96xf32, #tpu.memory_space<smem>>
    %709 = vector.broadcast %708 : f32 to vector<8x128xf32>
    %710 = arith.mulf %699, %709 : vector<8x128xf32>
    %711 = arith.addf %691, %710 : vector<8x128xf32>
    %c2_122 = arith.constant 2 : index
    %712 = memref.load %arg3[%c2_122] : memref<32xf32, #tpu.memory_space<smem>>
    %713 = vector.broadcast %712 : f32 to vector<8x128xf32>
    %714 = arith.mulf %671, %713 : vector<8x128xf32>
    %c2_123 = arith.constant 2 : index
    %715 = memref.load %arg4[%c2_123] : memref<32xf32, #tpu.memory_space<smem>>
    %716 = vector.broadcast %715 : f32 to vector<8x128xf32>
    %717 = arith.addf %714, %716 : vector<8x128xf32>
    %cst_124 = arith.constant 0.000000e+00 : f32
    %718 = vector.broadcast %cst_124 : f32 to vector<8x128xf32>
    %719 = arith.maximumf %717, %718 : vector<8x128xf32>
    %c6_125 = arith.constant 6 : index
    %720 = memref.load %arg5[%c6_125] : memref<96xf32, #tpu.memory_space<smem>>
    %721 = vector.broadcast %720 : f32 to vector<8x128xf32>
    %722 = arith.mulf %719, %721 : vector<8x128xf32>
    %723 = arith.addf %703, %722 : vector<8x128xf32>
    %c7_126 = arith.constant 7 : index
    %724 = memref.load %arg5[%c7_126] : memref<96xf32, #tpu.memory_space<smem>>
    %725 = vector.broadcast %724 : f32 to vector<8x128xf32>
    %726 = arith.mulf %719, %725 : vector<8x128xf32>
    %727 = arith.addf %707, %726 : vector<8x128xf32>
    %c8_127 = arith.constant 8 : index
    %728 = memref.load %arg5[%c8_127] : memref<96xf32, #tpu.memory_space<smem>>
    %729 = vector.broadcast %728 : f32 to vector<8x128xf32>
    %730 = arith.mulf %719, %729 : vector<8x128xf32>
    %731 = arith.addf %711, %730 : vector<8x128xf32>
    %c3_128 = arith.constant 3 : index
    %732 = memref.load %arg3[%c3_128] : memref<32xf32, #tpu.memory_space<smem>>
    %733 = vector.broadcast %732 : f32 to vector<8x128xf32>
    %734 = arith.mulf %671, %733 : vector<8x128xf32>
    %c3_129 = arith.constant 3 : index
    %735 = memref.load %arg4[%c3_129] : memref<32xf32, #tpu.memory_space<smem>>
    %736 = vector.broadcast %735 : f32 to vector<8x128xf32>
    %737 = arith.addf %734, %736 : vector<8x128xf32>
    %cst_130 = arith.constant 0.000000e+00 : f32
    %738 = vector.broadcast %cst_130 : f32 to vector<8x128xf32>
    %739 = arith.maximumf %737, %738 : vector<8x128xf32>
    %c9_131 = arith.constant 9 : index
    %740 = memref.load %arg5[%c9_131] : memref<96xf32, #tpu.memory_space<smem>>
    %741 = vector.broadcast %740 : f32 to vector<8x128xf32>
    %742 = arith.mulf %739, %741 : vector<8x128xf32>
    %743 = arith.addf %723, %742 : vector<8x128xf32>
    %c10_132 = arith.constant 10 : index
    %744 = memref.load %arg5[%c10_132] : memref<96xf32, #tpu.memory_space<smem>>
    %745 = vector.broadcast %744 : f32 to vector<8x128xf32>
    %746 = arith.mulf %739, %745 : vector<8x128xf32>
    %747 = arith.addf %727, %746 : vector<8x128xf32>
    %c11_133 = arith.constant 11 : index
    %748 = memref.load %arg5[%c11_133] : memref<96xf32, #tpu.memory_space<smem>>
    %749 = vector.broadcast %748 : f32 to vector<8x128xf32>
    %750 = arith.mulf %739, %749 : vector<8x128xf32>
    %751 = arith.addf %731, %750 : vector<8x128xf32>
    %c4_134 = arith.constant 4 : index
    %752 = memref.load %arg3[%c4_134] : memref<32xf32, #tpu.memory_space<smem>>
    %753 = vector.broadcast %752 : f32 to vector<8x128xf32>
    %754 = arith.mulf %671, %753 : vector<8x128xf32>
    %c4_135 = arith.constant 4 : index
    %755 = memref.load %arg4[%c4_135] : memref<32xf32, #tpu.memory_space<smem>>
    %756 = vector.broadcast %755 : f32 to vector<8x128xf32>
    %757 = arith.addf %754, %756 : vector<8x128xf32>
    %cst_136 = arith.constant 0.000000e+00 : f32
    %758 = vector.broadcast %cst_136 : f32 to vector<8x128xf32>
    %759 = arith.maximumf %757, %758 : vector<8x128xf32>
    %c12_137 = arith.constant 12 : index
    %760 = memref.load %arg5[%c12_137] : memref<96xf32, #tpu.memory_space<smem>>
    %761 = vector.broadcast %760 : f32 to vector<8x128xf32>
    %762 = arith.mulf %759, %761 : vector<8x128xf32>
    %763 = arith.addf %743, %762 : vector<8x128xf32>
    %c13_138 = arith.constant 13 : index
    %764 = memref.load %arg5[%c13_138] : memref<96xf32, #tpu.memory_space<smem>>
    %765 = vector.broadcast %764 : f32 to vector<8x128xf32>
    %766 = arith.mulf %759, %765 : vector<8x128xf32>
    %767 = arith.addf %747, %766 : vector<8x128xf32>
    %c14_139 = arith.constant 14 : index
    %768 = memref.load %arg5[%c14_139] : memref<96xf32, #tpu.memory_space<smem>>
    %769 = vector.broadcast %768 : f32 to vector<8x128xf32>
    %770 = arith.mulf %759, %769 : vector<8x128xf32>
    %771 = arith.addf %751, %770 : vector<8x128xf32>
    %c5_140 = arith.constant 5 : index
    %772 = memref.load %arg3[%c5_140] : memref<32xf32, #tpu.memory_space<smem>>
    %773 = vector.broadcast %772 : f32 to vector<8x128xf32>
    %774 = arith.mulf %671, %773 : vector<8x128xf32>
    %c5_141 = arith.constant 5 : index
    %775 = memref.load %arg4[%c5_141] : memref<32xf32, #tpu.memory_space<smem>>
    %776 = vector.broadcast %775 : f32 to vector<8x128xf32>
    %777 = arith.addf %774, %776 : vector<8x128xf32>
    %cst_142 = arith.constant 0.000000e+00 : f32
    %778 = vector.broadcast %cst_142 : f32 to vector<8x128xf32>
    %779 = arith.maximumf %777, %778 : vector<8x128xf32>
    %c15_143 = arith.constant 15 : index
    %780 = memref.load %arg5[%c15_143] : memref<96xf32, #tpu.memory_space<smem>>
    %781 = vector.broadcast %780 : f32 to vector<8x128xf32>
    %782 = arith.mulf %779, %781 : vector<8x128xf32>
    %783 = arith.addf %763, %782 : vector<8x128xf32>
    %c16_144 = arith.constant 16 : index
    %784 = memref.load %arg5[%c16_144] : memref<96xf32, #tpu.memory_space<smem>>
    %785 = vector.broadcast %784 : f32 to vector<8x128xf32>
    %786 = arith.mulf %779, %785 : vector<8x128xf32>
    %787 = arith.addf %767, %786 : vector<8x128xf32>
    %c17_145 = arith.constant 17 : index
    %788 = memref.load %arg5[%c17_145] : memref<96xf32, #tpu.memory_space<smem>>
    %789 = vector.broadcast %788 : f32 to vector<8x128xf32>
    %790 = arith.mulf %779, %789 : vector<8x128xf32>
    %791 = arith.addf %771, %790 : vector<8x128xf32>
    %c6_146 = arith.constant 6 : index
    %792 = memref.load %arg3[%c6_146] : memref<32xf32, #tpu.memory_space<smem>>
    %793 = vector.broadcast %792 : f32 to vector<8x128xf32>
    %794 = arith.mulf %671, %793 : vector<8x128xf32>
    %c6_147 = arith.constant 6 : index
    %795 = memref.load %arg4[%c6_147] : memref<32xf32, #tpu.memory_space<smem>>
    %796 = vector.broadcast %795 : f32 to vector<8x128xf32>
    %797 = arith.addf %794, %796 : vector<8x128xf32>
    %cst_148 = arith.constant 0.000000e+00 : f32
    %798 = vector.broadcast %cst_148 : f32 to vector<8x128xf32>
    %799 = arith.maximumf %797, %798 : vector<8x128xf32>
    %c18_149 = arith.constant 18 : index
    %800 = memref.load %arg5[%c18_149] : memref<96xf32, #tpu.memory_space<smem>>
    %801 = vector.broadcast %800 : f32 to vector<8x128xf32>
    %802 = arith.mulf %799, %801 : vector<8x128xf32>
    %803 = arith.addf %783, %802 : vector<8x128xf32>
    %c19_150 = arith.constant 19 : index
    %804 = memref.load %arg5[%c19_150] : memref<96xf32, #tpu.memory_space<smem>>
    %805 = vector.broadcast %804 : f32 to vector<8x128xf32>
    %806 = arith.mulf %799, %805 : vector<8x128xf32>
    %807 = arith.addf %787, %806 : vector<8x128xf32>
    %c20_151 = arith.constant 20 : index
    %808 = memref.load %arg5[%c20_151] : memref<96xf32, #tpu.memory_space<smem>>
    %809 = vector.broadcast %808 : f32 to vector<8x128xf32>
    %810 = arith.mulf %799, %809 : vector<8x128xf32>
    %811 = arith.addf %791, %810 : vector<8x128xf32>
    %c7_152 = arith.constant 7 : index
    %812 = memref.load %arg3[%c7_152] : memref<32xf32, #tpu.memory_space<smem>>
    %813 = vector.broadcast %812 : f32 to vector<8x128xf32>
    %814 = arith.mulf %671, %813 : vector<8x128xf32>
    %c7_153 = arith.constant 7 : index
    %815 = memref.load %arg4[%c7_153] : memref<32xf32, #tpu.memory_space<smem>>
    %816 = vector.broadcast %815 : f32 to vector<8x128xf32>
    %817 = arith.addf %814, %816 : vector<8x128xf32>
    %cst_154 = arith.constant 0.000000e+00 : f32
    %818 = vector.broadcast %cst_154 : f32 to vector<8x128xf32>
    %819 = arith.maximumf %817, %818 : vector<8x128xf32>
    %c21_155 = arith.constant 21 : index
    %820 = memref.load %arg5[%c21_155] : memref<96xf32, #tpu.memory_space<smem>>
    %821 = vector.broadcast %820 : f32 to vector<8x128xf32>
    %822 = arith.mulf %819, %821 : vector<8x128xf32>
    %823 = arith.addf %803, %822 : vector<8x128xf32>
    %c22_156 = arith.constant 22 : index
    %824 = memref.load %arg5[%c22_156] : memref<96xf32, #tpu.memory_space<smem>>
    %825 = vector.broadcast %824 : f32 to vector<8x128xf32>
    %826 = arith.mulf %819, %825 : vector<8x128xf32>
    %827 = arith.addf %807, %826 : vector<8x128xf32>
    %c23_157 = arith.constant 23 : index
    %828 = memref.load %arg5[%c23_157] : memref<96xf32, #tpu.memory_space<smem>>
    %829 = vector.broadcast %828 : f32 to vector<8x128xf32>
    %830 = arith.mulf %819, %829 : vector<8x128xf32>
    %831 = arith.addf %811, %830 : vector<8x128xf32>
    %c8_158 = arith.constant 8 : index
    %832 = memref.load %arg3[%c8_158] : memref<32xf32, #tpu.memory_space<smem>>
    %833 = vector.broadcast %832 : f32 to vector<8x128xf32>
    %834 = arith.mulf %671, %833 : vector<8x128xf32>
    %c8_159 = arith.constant 8 : index
    %835 = memref.load %arg4[%c8_159] : memref<32xf32, #tpu.memory_space<smem>>
    %836 = vector.broadcast %835 : f32 to vector<8x128xf32>
    %837 = arith.addf %834, %836 : vector<8x128xf32>
    %cst_160 = arith.constant 0.000000e+00 : f32
    %838 = vector.broadcast %cst_160 : f32 to vector<8x128xf32>
    %839 = arith.maximumf %837, %838 : vector<8x128xf32>
    %c24_161 = arith.constant 24 : index
    %840 = memref.load %arg5[%c24_161] : memref<96xf32, #tpu.memory_space<smem>>
    %841 = vector.broadcast %840 : f32 to vector<8x128xf32>
    %842 = arith.mulf %839, %841 : vector<8x128xf32>
    %843 = arith.addf %823, %842 : vector<8x128xf32>
    %c25_162 = arith.constant 25 : index
    %844 = memref.load %arg5[%c25_162] : memref<96xf32, #tpu.memory_space<smem>>
    %845 = vector.broadcast %844 : f32 to vector<8x128xf32>
    %846 = arith.mulf %839, %845 : vector<8x128xf32>
    %847 = arith.addf %827, %846 : vector<8x128xf32>
    %c26_163 = arith.constant 26 : index
    %848 = memref.load %arg5[%c26_163] : memref<96xf32, #tpu.memory_space<smem>>
    %849 = vector.broadcast %848 : f32 to vector<8x128xf32>
    %850 = arith.mulf %839, %849 : vector<8x128xf32>
    %851 = arith.addf %831, %850 : vector<8x128xf32>
    %c9_164 = arith.constant 9 : index
    %852 = memref.load %arg3[%c9_164] : memref<32xf32, #tpu.memory_space<smem>>
    %853 = vector.broadcast %852 : f32 to vector<8x128xf32>
    %854 = arith.mulf %671, %853 : vector<8x128xf32>
    %c9_165 = arith.constant 9 : index
    %855 = memref.load %arg4[%c9_165] : memref<32xf32, #tpu.memory_space<smem>>
    %856 = vector.broadcast %855 : f32 to vector<8x128xf32>
    %857 = arith.addf %854, %856 : vector<8x128xf32>
    %cst_166 = arith.constant 0.000000e+00 : f32
    %858 = vector.broadcast %cst_166 : f32 to vector<8x128xf32>
    %859 = arith.maximumf %857, %858 : vector<8x128xf32>
    %c27_167 = arith.constant 27 : index
    %860 = memref.load %arg5[%c27_167] : memref<96xf32, #tpu.memory_space<smem>>
    %861 = vector.broadcast %860 : f32 to vector<8x128xf32>
    %862 = arith.mulf %859, %861 : vector<8x128xf32>
    %863 = arith.addf %843, %862 : vector<8x128xf32>
    %c28_168 = arith.constant 28 : index
    %864 = memref.load %arg5[%c28_168] : memref<96xf32, #tpu.memory_space<smem>>
    %865 = vector.broadcast %864 : f32 to vector<8x128xf32>
    %866 = arith.mulf %859, %865 : vector<8x128xf32>
    %867 = arith.addf %847, %866 : vector<8x128xf32>
    %c29_169 = arith.constant 29 : index
    %868 = memref.load %arg5[%c29_169] : memref<96xf32, #tpu.memory_space<smem>>
    %869 = vector.broadcast %868 : f32 to vector<8x128xf32>
    %870 = arith.mulf %859, %869 : vector<8x128xf32>
    %871 = arith.addf %851, %870 : vector<8x128xf32>
    %c10_170 = arith.constant 10 : index
    %872 = memref.load %arg3[%c10_170] : memref<32xf32, #tpu.memory_space<smem>>
    %873 = vector.broadcast %872 : f32 to vector<8x128xf32>
    %874 = arith.mulf %671, %873 : vector<8x128xf32>
    %c10_171 = arith.constant 10 : index
    %875 = memref.load %arg4[%c10_171] : memref<32xf32, #tpu.memory_space<smem>>
    %876 = vector.broadcast %875 : f32 to vector<8x128xf32>
    %877 = arith.addf %874, %876 : vector<8x128xf32>
    %cst_172 = arith.constant 0.000000e+00 : f32
    %878 = vector.broadcast %cst_172 : f32 to vector<8x128xf32>
    %879 = arith.maximumf %877, %878 : vector<8x128xf32>
    %c30_173 = arith.constant 30 : index
    %880 = memref.load %arg5[%c30_173] : memref<96xf32, #tpu.memory_space<smem>>
    %881 = vector.broadcast %880 : f32 to vector<8x128xf32>
    %882 = arith.mulf %879, %881 : vector<8x128xf32>
    %883 = arith.addf %863, %882 : vector<8x128xf32>
    %c31_174 = arith.constant 31 : index
    %884 = memref.load %arg5[%c31_174] : memref<96xf32, #tpu.memory_space<smem>>
    %885 = vector.broadcast %884 : f32 to vector<8x128xf32>
    %886 = arith.mulf %879, %885 : vector<8x128xf32>
    %887 = arith.addf %867, %886 : vector<8x128xf32>
    %c32_175 = arith.constant 32 : index
    %888 = memref.load %arg5[%c32_175] : memref<96xf32, #tpu.memory_space<smem>>
    %889 = vector.broadcast %888 : f32 to vector<8x128xf32>
    %890 = arith.mulf %879, %889 : vector<8x128xf32>
    %891 = arith.addf %871, %890 : vector<8x128xf32>
    %c11_176 = arith.constant 11 : index
    %892 = memref.load %arg3[%c11_176] : memref<32xf32, #tpu.memory_space<smem>>
    %893 = vector.broadcast %892 : f32 to vector<8x128xf32>
    %894 = arith.mulf %671, %893 : vector<8x128xf32>
    %c11_177 = arith.constant 11 : index
    %895 = memref.load %arg4[%c11_177] : memref<32xf32, #tpu.memory_space<smem>>
    %896 = vector.broadcast %895 : f32 to vector<8x128xf32>
    %897 = arith.addf %894, %896 : vector<8x128xf32>
    %cst_178 = arith.constant 0.000000e+00 : f32
    %898 = vector.broadcast %cst_178 : f32 to vector<8x128xf32>
    %899 = arith.maximumf %897, %898 : vector<8x128xf32>
    %c33_179 = arith.constant 33 : index
    %900 = memref.load %arg5[%c33_179] : memref<96xf32, #tpu.memory_space<smem>>
    %901 = vector.broadcast %900 : f32 to vector<8x128xf32>
    %902 = arith.mulf %899, %901 : vector<8x128xf32>
    %903 = arith.addf %883, %902 : vector<8x128xf32>
    %c34_180 = arith.constant 34 : index
    %904 = memref.load %arg5[%c34_180] : memref<96xf32, #tpu.memory_space<smem>>
    %905 = vector.broadcast %904 : f32 to vector<8x128xf32>
    %906 = arith.mulf %899, %905 : vector<8x128xf32>
    %907 = arith.addf %887, %906 : vector<8x128xf32>
    %c35_181 = arith.constant 35 : index
    %908 = memref.load %arg5[%c35_181] : memref<96xf32, #tpu.memory_space<smem>>
    %909 = vector.broadcast %908 : f32 to vector<8x128xf32>
    %910 = arith.mulf %899, %909 : vector<8x128xf32>
    %911 = arith.addf %891, %910 : vector<8x128xf32>
    %c12_182 = arith.constant 12 : index
    %912 = memref.load %arg3[%c12_182] : memref<32xf32, #tpu.memory_space<smem>>
    %913 = vector.broadcast %912 : f32 to vector<8x128xf32>
    %914 = arith.mulf %671, %913 : vector<8x128xf32>
    %c12_183 = arith.constant 12 : index
    %915 = memref.load %arg4[%c12_183] : memref<32xf32, #tpu.memory_space<smem>>
    %916 = vector.broadcast %915 : f32 to vector<8x128xf32>
    %917 = arith.addf %914, %916 : vector<8x128xf32>
    %cst_184 = arith.constant 0.000000e+00 : f32
    %918 = vector.broadcast %cst_184 : f32 to vector<8x128xf32>
    %919 = arith.maximumf %917, %918 : vector<8x128xf32>
    %c36_185 = arith.constant 36 : index
    %920 = memref.load %arg5[%c36_185] : memref<96xf32, #tpu.memory_space<smem>>
    %921 = vector.broadcast %920 : f32 to vector<8x128xf32>
    %922 = arith.mulf %919, %921 : vector<8x128xf32>
    %923 = arith.addf %903, %922 : vector<8x128xf32>
    %c37_186 = arith.constant 37 : index
    %924 = memref.load %arg5[%c37_186] : memref<96xf32, #tpu.memory_space<smem>>
    %925 = vector.broadcast %924 : f32 to vector<8x128xf32>
    %926 = arith.mulf %919, %925 : vector<8x128xf32>
    %927 = arith.addf %907, %926 : vector<8x128xf32>
    %c38_187 = arith.constant 38 : index
    %928 = memref.load %arg5[%c38_187] : memref<96xf32, #tpu.memory_space<smem>>
    %929 = vector.broadcast %928 : f32 to vector<8x128xf32>
    %930 = arith.mulf %919, %929 : vector<8x128xf32>
    %931 = arith.addf %911, %930 : vector<8x128xf32>
    %c13_188 = arith.constant 13 : index
    %932 = memref.load %arg3[%c13_188] : memref<32xf32, #tpu.memory_space<smem>>
    %933 = vector.broadcast %932 : f32 to vector<8x128xf32>
    %934 = arith.mulf %671, %933 : vector<8x128xf32>
    %c13_189 = arith.constant 13 : index
    %935 = memref.load %arg4[%c13_189] : memref<32xf32, #tpu.memory_space<smem>>
    %936 = vector.broadcast %935 : f32 to vector<8x128xf32>
    %937 = arith.addf %934, %936 : vector<8x128xf32>
    %cst_190 = arith.constant 0.000000e+00 : f32
    %938 = vector.broadcast %cst_190 : f32 to vector<8x128xf32>
    %939 = arith.maximumf %937, %938 : vector<8x128xf32>
    %c39_191 = arith.constant 39 : index
    %940 = memref.load %arg5[%c39_191] : memref<96xf32, #tpu.memory_space<smem>>
    %941 = vector.broadcast %940 : f32 to vector<8x128xf32>
    %942 = arith.mulf %939, %941 : vector<8x128xf32>
    %943 = arith.addf %923, %942 : vector<8x128xf32>
    %c40_192 = arith.constant 40 : index
    %944 = memref.load %arg5[%c40_192] : memref<96xf32, #tpu.memory_space<smem>>
    %945 = vector.broadcast %944 : f32 to vector<8x128xf32>
    %946 = arith.mulf %939, %945 : vector<8x128xf32>
    %947 = arith.addf %927, %946 : vector<8x128xf32>
    %c41_193 = arith.constant 41 : index
    %948 = memref.load %arg5[%c41_193] : memref<96xf32, #tpu.memory_space<smem>>
    %949 = vector.broadcast %948 : f32 to vector<8x128xf32>
    %950 = arith.mulf %939, %949 : vector<8x128xf32>
    %951 = arith.addf %931, %950 : vector<8x128xf32>
    %c14_194 = arith.constant 14 : index
    %952 = memref.load %arg3[%c14_194] : memref<32xf32, #tpu.memory_space<smem>>
    %953 = vector.broadcast %952 : f32 to vector<8x128xf32>
    %954 = arith.mulf %671, %953 : vector<8x128xf32>
    %c14_195 = arith.constant 14 : index
    %955 = memref.load %arg4[%c14_195] : memref<32xf32, #tpu.memory_space<smem>>
    %956 = vector.broadcast %955 : f32 to vector<8x128xf32>
    %957 = arith.addf %954, %956 : vector<8x128xf32>
    %cst_196 = arith.constant 0.000000e+00 : f32
    %958 = vector.broadcast %cst_196 : f32 to vector<8x128xf32>
    %959 = arith.maximumf %957, %958 : vector<8x128xf32>
    %c42_197 = arith.constant 42 : index
    %960 = memref.load %arg5[%c42_197] : memref<96xf32, #tpu.memory_space<smem>>
    %961 = vector.broadcast %960 : f32 to vector<8x128xf32>
    %962 = arith.mulf %959, %961 : vector<8x128xf32>
    %963 = arith.addf %943, %962 : vector<8x128xf32>
    %c43_198 = arith.constant 43 : index
    %964 = memref.load %arg5[%c43_198] : memref<96xf32, #tpu.memory_space<smem>>
    %965 = vector.broadcast %964 : f32 to vector<8x128xf32>
    %966 = arith.mulf %959, %965 : vector<8x128xf32>
    %967 = arith.addf %947, %966 : vector<8x128xf32>
    %c44_199 = arith.constant 44 : index
    %968 = memref.load %arg5[%c44_199] : memref<96xf32, #tpu.memory_space<smem>>
    %969 = vector.broadcast %968 : f32 to vector<8x128xf32>
    %970 = arith.mulf %959, %969 : vector<8x128xf32>
    %971 = arith.addf %951, %970 : vector<8x128xf32>
    %c15_200 = arith.constant 15 : index
    %972 = memref.load %arg3[%c15_200] : memref<32xf32, #tpu.memory_space<smem>>
    %973 = vector.broadcast %972 : f32 to vector<8x128xf32>
    %974 = arith.mulf %671, %973 : vector<8x128xf32>
    %c15_201 = arith.constant 15 : index
    %975 = memref.load %arg4[%c15_201] : memref<32xf32, #tpu.memory_space<smem>>
    %976 = vector.broadcast %975 : f32 to vector<8x128xf32>
    %977 = arith.addf %974, %976 : vector<8x128xf32>
    %cst_202 = arith.constant 0.000000e+00 : f32
    %978 = vector.broadcast %cst_202 : f32 to vector<8x128xf32>
    %979 = arith.maximumf %977, %978 : vector<8x128xf32>
    %c45_203 = arith.constant 45 : index
    %980 = memref.load %arg5[%c45_203] : memref<96xf32, #tpu.memory_space<smem>>
    %981 = vector.broadcast %980 : f32 to vector<8x128xf32>
    %982 = arith.mulf %979, %981 : vector<8x128xf32>
    %983 = arith.addf %963, %982 : vector<8x128xf32>
    %c46_204 = arith.constant 46 : index
    %984 = memref.load %arg5[%c46_204] : memref<96xf32, #tpu.memory_space<smem>>
    %985 = vector.broadcast %984 : f32 to vector<8x128xf32>
    %986 = arith.mulf %979, %985 : vector<8x128xf32>
    %987 = arith.addf %967, %986 : vector<8x128xf32>
    %c47_205 = arith.constant 47 : index
    %988 = memref.load %arg5[%c47_205] : memref<96xf32, #tpu.memory_space<smem>>
    %989 = vector.broadcast %988 : f32 to vector<8x128xf32>
    %990 = arith.mulf %979, %989 : vector<8x128xf32>
    %991 = arith.addf %971, %990 : vector<8x128xf32>
    %c16_206 = arith.constant 16 : index
    %992 = memref.load %arg3[%c16_206] : memref<32xf32, #tpu.memory_space<smem>>
    %993 = vector.broadcast %992 : f32 to vector<8x128xf32>
    %994 = arith.mulf %671, %993 : vector<8x128xf32>
    %c16_207 = arith.constant 16 : index
    %995 = memref.load %arg4[%c16_207] : memref<32xf32, #tpu.memory_space<smem>>
    %996 = vector.broadcast %995 : f32 to vector<8x128xf32>
    %997 = arith.addf %994, %996 : vector<8x128xf32>
    %cst_208 = arith.constant 0.000000e+00 : f32
    %998 = vector.broadcast %cst_208 : f32 to vector<8x128xf32>
    %999 = arith.maximumf %997, %998 : vector<8x128xf32>
    %c48_209 = arith.constant 48 : index
    %1000 = memref.load %arg5[%c48_209] : memref<96xf32, #tpu.memory_space<smem>>
    %1001 = vector.broadcast %1000 : f32 to vector<8x128xf32>
    %1002 = arith.mulf %999, %1001 : vector<8x128xf32>
    %1003 = arith.addf %983, %1002 : vector<8x128xf32>
    %c49_210 = arith.constant 49 : index
    %1004 = memref.load %arg5[%c49_210] : memref<96xf32, #tpu.memory_space<smem>>
    %1005 = vector.broadcast %1004 : f32 to vector<8x128xf32>
    %1006 = arith.mulf %999, %1005 : vector<8x128xf32>
    %1007 = arith.addf %987, %1006 : vector<8x128xf32>
    %c50_211 = arith.constant 50 : index
    %1008 = memref.load %arg5[%c50_211] : memref<96xf32, #tpu.memory_space<smem>>
    %1009 = vector.broadcast %1008 : f32 to vector<8x128xf32>
    %1010 = arith.mulf %999, %1009 : vector<8x128xf32>
    %1011 = arith.addf %991, %1010 : vector<8x128xf32>
    %c17_212 = arith.constant 17 : index
    %1012 = memref.load %arg3[%c17_212] : memref<32xf32, #tpu.memory_space<smem>>
    %1013 = vector.broadcast %1012 : f32 to vector<8x128xf32>
    %1014 = arith.mulf %671, %1013 : vector<8x128xf32>
    %c17_213 = arith.constant 17 : index
    %1015 = memref.load %arg4[%c17_213] : memref<32xf32, #tpu.memory_space<smem>>
    %1016 = vector.broadcast %1015 : f32 to vector<8x128xf32>
    %1017 = arith.addf %1014, %1016 : vector<8x128xf32>
    %cst_214 = arith.constant 0.000000e+00 : f32
    %1018 = vector.broadcast %cst_214 : f32 to vector<8x128xf32>
    %1019 = arith.maximumf %1017, %1018 : vector<8x128xf32>
    %c51_215 = arith.constant 51 : index
    %1020 = memref.load %arg5[%c51_215] : memref<96xf32, #tpu.memory_space<smem>>
    %1021 = vector.broadcast %1020 : f32 to vector<8x128xf32>
    %1022 = arith.mulf %1019, %1021 : vector<8x128xf32>
    %1023 = arith.addf %1003, %1022 : vector<8x128xf32>
    %c52_216 = arith.constant 52 : index
    %1024 = memref.load %arg5[%c52_216] : memref<96xf32, #tpu.memory_space<smem>>
    %1025 = vector.broadcast %1024 : f32 to vector<8x128xf32>
    %1026 = arith.mulf %1019, %1025 : vector<8x128xf32>
    %1027 = arith.addf %1007, %1026 : vector<8x128xf32>
    %c53_217 = arith.constant 53 : index
    %1028 = memref.load %arg5[%c53_217] : memref<96xf32, #tpu.memory_space<smem>>
    %1029 = vector.broadcast %1028 : f32 to vector<8x128xf32>
    %1030 = arith.mulf %1019, %1029 : vector<8x128xf32>
    %1031 = arith.addf %1011, %1030 : vector<8x128xf32>
    %c18_218 = arith.constant 18 : index
    %1032 = memref.load %arg3[%c18_218] : memref<32xf32, #tpu.memory_space<smem>>
    %1033 = vector.broadcast %1032 : f32 to vector<8x128xf32>
    %1034 = arith.mulf %671, %1033 : vector<8x128xf32>
    %c18_219 = arith.constant 18 : index
    %1035 = memref.load %arg4[%c18_219] : memref<32xf32, #tpu.memory_space<smem>>
    %1036 = vector.broadcast %1035 : f32 to vector<8x128xf32>
    %1037 = arith.addf %1034, %1036 : vector<8x128xf32>
    %cst_220 = arith.constant 0.000000e+00 : f32
    %1038 = vector.broadcast %cst_220 : f32 to vector<8x128xf32>
    %1039 = arith.maximumf %1037, %1038 : vector<8x128xf32>
    %c54_221 = arith.constant 54 : index
    %1040 = memref.load %arg5[%c54_221] : memref<96xf32, #tpu.memory_space<smem>>
    %1041 = vector.broadcast %1040 : f32 to vector<8x128xf32>
    %1042 = arith.mulf %1039, %1041 : vector<8x128xf32>
    %1043 = arith.addf %1023, %1042 : vector<8x128xf32>
    %c55_222 = arith.constant 55 : index
    %1044 = memref.load %arg5[%c55_222] : memref<96xf32, #tpu.memory_space<smem>>
    %1045 = vector.broadcast %1044 : f32 to vector<8x128xf32>
    %1046 = arith.mulf %1039, %1045 : vector<8x128xf32>
    %1047 = arith.addf %1027, %1046 : vector<8x128xf32>
    %c56_223 = arith.constant 56 : index
    %1048 = memref.load %arg5[%c56_223] : memref<96xf32, #tpu.memory_space<smem>>
    %1049 = vector.broadcast %1048 : f32 to vector<8x128xf32>
    %1050 = arith.mulf %1039, %1049 : vector<8x128xf32>
    %1051 = arith.addf %1031, %1050 : vector<8x128xf32>
    %c19_224 = arith.constant 19 : index
    %1052 = memref.load %arg3[%c19_224] : memref<32xf32, #tpu.memory_space<smem>>
    %1053 = vector.broadcast %1052 : f32 to vector<8x128xf32>
    %1054 = arith.mulf %671, %1053 : vector<8x128xf32>
    %c19_225 = arith.constant 19 : index
    %1055 = memref.load %arg4[%c19_225] : memref<32xf32, #tpu.memory_space<smem>>
    %1056 = vector.broadcast %1055 : f32 to vector<8x128xf32>
    %1057 = arith.addf %1054, %1056 : vector<8x128xf32>
    %cst_226 = arith.constant 0.000000e+00 : f32
    %1058 = vector.broadcast %cst_226 : f32 to vector<8x128xf32>
    %1059 = arith.maximumf %1057, %1058 : vector<8x128xf32>
    %c57_227 = arith.constant 57 : index
    %1060 = memref.load %arg5[%c57_227] : memref<96xf32, #tpu.memory_space<smem>>
    %1061 = vector.broadcast %1060 : f32 to vector<8x128xf32>
    %1062 = arith.mulf %1059, %1061 : vector<8x128xf32>
    %1063 = arith.addf %1043, %1062 : vector<8x128xf32>
    %c58_228 = arith.constant 58 : index
    %1064 = memref.load %arg5[%c58_228] : memref<96xf32, #tpu.memory_space<smem>>
    %1065 = vector.broadcast %1064 : f32 to vector<8x128xf32>
    %1066 = arith.mulf %1059, %1065 : vector<8x128xf32>
    %1067 = arith.addf %1047, %1066 : vector<8x128xf32>
    %c59_229 = arith.constant 59 : index
    %1068 = memref.load %arg5[%c59_229] : memref<96xf32, #tpu.memory_space<smem>>
    %1069 = vector.broadcast %1068 : f32 to vector<8x128xf32>
    %1070 = arith.mulf %1059, %1069 : vector<8x128xf32>
    %1071 = arith.addf %1051, %1070 : vector<8x128xf32>
    %c20_230 = arith.constant 20 : index
    %1072 = memref.load %arg3[%c20_230] : memref<32xf32, #tpu.memory_space<smem>>
    %1073 = vector.broadcast %1072 : f32 to vector<8x128xf32>
    %1074 = arith.mulf %671, %1073 : vector<8x128xf32>
    %c20_231 = arith.constant 20 : index
    %1075 = memref.load %arg4[%c20_231] : memref<32xf32, #tpu.memory_space<smem>>
    %1076 = vector.broadcast %1075 : f32 to vector<8x128xf32>
    %1077 = arith.addf %1074, %1076 : vector<8x128xf32>
    %cst_232 = arith.constant 0.000000e+00 : f32
    %1078 = vector.broadcast %cst_232 : f32 to vector<8x128xf32>
    %1079 = arith.maximumf %1077, %1078 : vector<8x128xf32>
    %c60_233 = arith.constant 60 : index
    %1080 = memref.load %arg5[%c60_233] : memref<96xf32, #tpu.memory_space<smem>>
    %1081 = vector.broadcast %1080 : f32 to vector<8x128xf32>
    %1082 = arith.mulf %1079, %1081 : vector<8x128xf32>
    %1083 = arith.addf %1063, %1082 : vector<8x128xf32>
    %c61_234 = arith.constant 61 : index
    %1084 = memref.load %arg5[%c61_234] : memref<96xf32, #tpu.memory_space<smem>>
    %1085 = vector.broadcast %1084 : f32 to vector<8x128xf32>
    %1086 = arith.mulf %1079, %1085 : vector<8x128xf32>
    %1087 = arith.addf %1067, %1086 : vector<8x128xf32>
    %c62_235 = arith.constant 62 : index
    %1088 = memref.load %arg5[%c62_235] : memref<96xf32, #tpu.memory_space<smem>>
    %1089 = vector.broadcast %1088 : f32 to vector<8x128xf32>
    %1090 = arith.mulf %1079, %1089 : vector<8x128xf32>
    %1091 = arith.addf %1071, %1090 : vector<8x128xf32>
    %c21_236 = arith.constant 21 : index
    %1092 = memref.load %arg3[%c21_236] : memref<32xf32, #tpu.memory_space<smem>>
    %1093 = vector.broadcast %1092 : f32 to vector<8x128xf32>
    %1094 = arith.mulf %671, %1093 : vector<8x128xf32>
    %c21_237 = arith.constant 21 : index
    %1095 = memref.load %arg4[%c21_237] : memref<32xf32, #tpu.memory_space<smem>>
    %1096 = vector.broadcast %1095 : f32 to vector<8x128xf32>
    %1097 = arith.addf %1094, %1096 : vector<8x128xf32>
    %cst_238 = arith.constant 0.000000e+00 : f32
    %1098 = vector.broadcast %cst_238 : f32 to vector<8x128xf32>
    %1099 = arith.maximumf %1097, %1098 : vector<8x128xf32>
    %c63_239 = arith.constant 63 : index
    %1100 = memref.load %arg5[%c63_239] : memref<96xf32, #tpu.memory_space<smem>>
    %1101 = vector.broadcast %1100 : f32 to vector<8x128xf32>
    %1102 = arith.mulf %1099, %1101 : vector<8x128xf32>
    %1103 = arith.addf %1083, %1102 : vector<8x128xf32>
    %c64_240 = arith.constant 64 : index
    %1104 = memref.load %arg5[%c64_240] : memref<96xf32, #tpu.memory_space<smem>>
    %1105 = vector.broadcast %1104 : f32 to vector<8x128xf32>
    %1106 = arith.mulf %1099, %1105 : vector<8x128xf32>
    %1107 = arith.addf %1087, %1106 : vector<8x128xf32>
    %c65_241 = arith.constant 65 : index
    %1108 = memref.load %arg5[%c65_241] : memref<96xf32, #tpu.memory_space<smem>>
    %1109 = vector.broadcast %1108 : f32 to vector<8x128xf32>
    %1110 = arith.mulf %1099, %1109 : vector<8x128xf32>
    %1111 = arith.addf %1091, %1110 : vector<8x128xf32>
    %c22_242 = arith.constant 22 : index
    %1112 = memref.load %arg3[%c22_242] : memref<32xf32, #tpu.memory_space<smem>>
    %1113 = vector.broadcast %1112 : f32 to vector<8x128xf32>
    %1114 = arith.mulf %671, %1113 : vector<8x128xf32>
    %c22_243 = arith.constant 22 : index
    %1115 = memref.load %arg4[%c22_243] : memref<32xf32, #tpu.memory_space<smem>>
    %1116 = vector.broadcast %1115 : f32 to vector<8x128xf32>
    %1117 = arith.addf %1114, %1116 : vector<8x128xf32>
    %cst_244 = arith.constant 0.000000e+00 : f32
    %1118 = vector.broadcast %cst_244 : f32 to vector<8x128xf32>
    %1119 = arith.maximumf %1117, %1118 : vector<8x128xf32>
    %c66_245 = arith.constant 66 : index
    %1120 = memref.load %arg5[%c66_245] : memref<96xf32, #tpu.memory_space<smem>>
    %1121 = vector.broadcast %1120 : f32 to vector<8x128xf32>
    %1122 = arith.mulf %1119, %1121 : vector<8x128xf32>
    %1123 = arith.addf %1103, %1122 : vector<8x128xf32>
    %c67_246 = arith.constant 67 : index
    %1124 = memref.load %arg5[%c67_246] : memref<96xf32, #tpu.memory_space<smem>>
    %1125 = vector.broadcast %1124 : f32 to vector<8x128xf32>
    %1126 = arith.mulf %1119, %1125 : vector<8x128xf32>
    %1127 = arith.addf %1107, %1126 : vector<8x128xf32>
    %c68_247 = arith.constant 68 : index
    %1128 = memref.load %arg5[%c68_247] : memref<96xf32, #tpu.memory_space<smem>>
    %1129 = vector.broadcast %1128 : f32 to vector<8x128xf32>
    %1130 = arith.mulf %1119, %1129 : vector<8x128xf32>
    %1131 = arith.addf %1111, %1130 : vector<8x128xf32>
    %c23_248 = arith.constant 23 : index
    %1132 = memref.load %arg3[%c23_248] : memref<32xf32, #tpu.memory_space<smem>>
    %1133 = vector.broadcast %1132 : f32 to vector<8x128xf32>
    %1134 = arith.mulf %671, %1133 : vector<8x128xf32>
    %c23_249 = arith.constant 23 : index
    %1135 = memref.load %arg4[%c23_249] : memref<32xf32, #tpu.memory_space<smem>>
    %1136 = vector.broadcast %1135 : f32 to vector<8x128xf32>
    %1137 = arith.addf %1134, %1136 : vector<8x128xf32>
    %cst_250 = arith.constant 0.000000e+00 : f32
    %1138 = vector.broadcast %cst_250 : f32 to vector<8x128xf32>
    %1139 = arith.maximumf %1137, %1138 : vector<8x128xf32>
    %c69_251 = arith.constant 69 : index
    %1140 = memref.load %arg5[%c69_251] : memref<96xf32, #tpu.memory_space<smem>>
    %1141 = vector.broadcast %1140 : f32 to vector<8x128xf32>
    %1142 = arith.mulf %1139, %1141 : vector<8x128xf32>
    %1143 = arith.addf %1123, %1142 : vector<8x128xf32>
    %c70_252 = arith.constant 70 : index
    %1144 = memref.load %arg5[%c70_252] : memref<96xf32, #tpu.memory_space<smem>>
    %1145 = vector.broadcast %1144 : f32 to vector<8x128xf32>
    %1146 = arith.mulf %1139, %1145 : vector<8x128xf32>
    %1147 = arith.addf %1127, %1146 : vector<8x128xf32>
    %c71_253 = arith.constant 71 : index
    %1148 = memref.load %arg5[%c71_253] : memref<96xf32, #tpu.memory_space<smem>>
    %1149 = vector.broadcast %1148 : f32 to vector<8x128xf32>
    %1150 = arith.mulf %1139, %1149 : vector<8x128xf32>
    %1151 = arith.addf %1131, %1150 : vector<8x128xf32>
    %c24_254 = arith.constant 24 : index
    %1152 = memref.load %arg3[%c24_254] : memref<32xf32, #tpu.memory_space<smem>>
    %1153 = vector.broadcast %1152 : f32 to vector<8x128xf32>
    %1154 = arith.mulf %671, %1153 : vector<8x128xf32>
    %c24_255 = arith.constant 24 : index
    %1155 = memref.load %arg4[%c24_255] : memref<32xf32, #tpu.memory_space<smem>>
    %1156 = vector.broadcast %1155 : f32 to vector<8x128xf32>
    %1157 = arith.addf %1154, %1156 : vector<8x128xf32>
    %cst_256 = arith.constant 0.000000e+00 : f32
    %1158 = vector.broadcast %cst_256 : f32 to vector<8x128xf32>
    %1159 = arith.maximumf %1157, %1158 : vector<8x128xf32>
    %c72_257 = arith.constant 72 : index
    %1160 = memref.load %arg5[%c72_257] : memref<96xf32, #tpu.memory_space<smem>>
    %1161 = vector.broadcast %1160 : f32 to vector<8x128xf32>
    %1162 = arith.mulf %1159, %1161 : vector<8x128xf32>
    %1163 = arith.addf %1143, %1162 : vector<8x128xf32>
    %c73_258 = arith.constant 73 : index
    %1164 = memref.load %arg5[%c73_258] : memref<96xf32, #tpu.memory_space<smem>>
    %1165 = vector.broadcast %1164 : f32 to vector<8x128xf32>
    %1166 = arith.mulf %1159, %1165 : vector<8x128xf32>
    %1167 = arith.addf %1147, %1166 : vector<8x128xf32>
    %c74_259 = arith.constant 74 : index
    %1168 = memref.load %arg5[%c74_259] : memref<96xf32, #tpu.memory_space<smem>>
    %1169 = vector.broadcast %1168 : f32 to vector<8x128xf32>
    %1170 = arith.mulf %1159, %1169 : vector<8x128xf32>
    %1171 = arith.addf %1151, %1170 : vector<8x128xf32>
    %c25_260 = arith.constant 25 : index
    %1172 = memref.load %arg3[%c25_260] : memref<32xf32, #tpu.memory_space<smem>>
    %1173 = vector.broadcast %1172 : f32 to vector<8x128xf32>
    %1174 = arith.mulf %671, %1173 : vector<8x128xf32>
    %c25_261 = arith.constant 25 : index
    %1175 = memref.load %arg4[%c25_261] : memref<32xf32, #tpu.memory_space<smem>>
    %1176 = vector.broadcast %1175 : f32 to vector<8x128xf32>
    %1177 = arith.addf %1174, %1176 : vector<8x128xf32>
    %cst_262 = arith.constant 0.000000e+00 : f32
    %1178 = vector.broadcast %cst_262 : f32 to vector<8x128xf32>
    %1179 = arith.maximumf %1177, %1178 : vector<8x128xf32>
    %c75_263 = arith.constant 75 : index
    %1180 = memref.load %arg5[%c75_263] : memref<96xf32, #tpu.memory_space<smem>>
    %1181 = vector.broadcast %1180 : f32 to vector<8x128xf32>
    %1182 = arith.mulf %1179, %1181 : vector<8x128xf32>
    %1183 = arith.addf %1163, %1182 : vector<8x128xf32>
    %c76_264 = arith.constant 76 : index
    %1184 = memref.load %arg5[%c76_264] : memref<96xf32, #tpu.memory_space<smem>>
    %1185 = vector.broadcast %1184 : f32 to vector<8x128xf32>
    %1186 = arith.mulf %1179, %1185 : vector<8x128xf32>
    %1187 = arith.addf %1167, %1186 : vector<8x128xf32>
    %c77_265 = arith.constant 77 : index
    %1188 = memref.load %arg5[%c77_265] : memref<96xf32, #tpu.memory_space<smem>>
    %1189 = vector.broadcast %1188 : f32 to vector<8x128xf32>
    %1190 = arith.mulf %1179, %1189 : vector<8x128xf32>
    %1191 = arith.addf %1171, %1190 : vector<8x128xf32>
    %c26_266 = arith.constant 26 : index
    %1192 = memref.load %arg3[%c26_266] : memref<32xf32, #tpu.memory_space<smem>>
    %1193 = vector.broadcast %1192 : f32 to vector<8x128xf32>
    %1194 = arith.mulf %671, %1193 : vector<8x128xf32>
    %c26_267 = arith.constant 26 : index
    %1195 = memref.load %arg4[%c26_267] : memref<32xf32, #tpu.memory_space<smem>>
    %1196 = vector.broadcast %1195 : f32 to vector<8x128xf32>
    %1197 = arith.addf %1194, %1196 : vector<8x128xf32>
    %cst_268 = arith.constant 0.000000e+00 : f32
    %1198 = vector.broadcast %cst_268 : f32 to vector<8x128xf32>
    %1199 = arith.maximumf %1197, %1198 : vector<8x128xf32>
    %c78_269 = arith.constant 78 : index
    %1200 = memref.load %arg5[%c78_269] : memref<96xf32, #tpu.memory_space<smem>>
    %1201 = vector.broadcast %1200 : f32 to vector<8x128xf32>
    %1202 = arith.mulf %1199, %1201 : vector<8x128xf32>
    %1203 = arith.addf %1183, %1202 : vector<8x128xf32>
    %c79_270 = arith.constant 79 : index
    %1204 = memref.load %arg5[%c79_270] : memref<96xf32, #tpu.memory_space<smem>>
    %1205 = vector.broadcast %1204 : f32 to vector<8x128xf32>
    %1206 = arith.mulf %1199, %1205 : vector<8x128xf32>
    %1207 = arith.addf %1187, %1206 : vector<8x128xf32>
    %c80_271 = arith.constant 80 : index
    %1208 = memref.load %arg5[%c80_271] : memref<96xf32, #tpu.memory_space<smem>>
    %1209 = vector.broadcast %1208 : f32 to vector<8x128xf32>
    %1210 = arith.mulf %1199, %1209 : vector<8x128xf32>
    %1211 = arith.addf %1191, %1210 : vector<8x128xf32>
    %c27_272 = arith.constant 27 : index
    %1212 = memref.load %arg3[%c27_272] : memref<32xf32, #tpu.memory_space<smem>>
    %1213 = vector.broadcast %1212 : f32 to vector<8x128xf32>
    %1214 = arith.mulf %671, %1213 : vector<8x128xf32>
    %c27_273 = arith.constant 27 : index
    %1215 = memref.load %arg4[%c27_273] : memref<32xf32, #tpu.memory_space<smem>>
    %1216 = vector.broadcast %1215 : f32 to vector<8x128xf32>
    %1217 = arith.addf %1214, %1216 : vector<8x128xf32>
    %cst_274 = arith.constant 0.000000e+00 : f32
    %1218 = vector.broadcast %cst_274 : f32 to vector<8x128xf32>
    %1219 = arith.maximumf %1217, %1218 : vector<8x128xf32>
    %c81_275 = arith.constant 81 : index
    %1220 = memref.load %arg5[%c81_275] : memref<96xf32, #tpu.memory_space<smem>>
    %1221 = vector.broadcast %1220 : f32 to vector<8x128xf32>
    %1222 = arith.mulf %1219, %1221 : vector<8x128xf32>
    %1223 = arith.addf %1203, %1222 : vector<8x128xf32>
    %c82_276 = arith.constant 82 : index
    %1224 = memref.load %arg5[%c82_276] : memref<96xf32, #tpu.memory_space<smem>>
    %1225 = vector.broadcast %1224 : f32 to vector<8x128xf32>
    %1226 = arith.mulf %1219, %1225 : vector<8x128xf32>
    %1227 = arith.addf %1207, %1226 : vector<8x128xf32>
    %c83_277 = arith.constant 83 : index
    %1228 = memref.load %arg5[%c83_277] : memref<96xf32, #tpu.memory_space<smem>>
    %1229 = vector.broadcast %1228 : f32 to vector<8x128xf32>
    %1230 = arith.mulf %1219, %1229 : vector<8x128xf32>
    %1231 = arith.addf %1211, %1230 : vector<8x128xf32>
    %c28_278 = arith.constant 28 : index
    %1232 = memref.load %arg3[%c28_278] : memref<32xf32, #tpu.memory_space<smem>>
    %1233 = vector.broadcast %1232 : f32 to vector<8x128xf32>
    %1234 = arith.mulf %671, %1233 : vector<8x128xf32>
    %c28_279 = arith.constant 28 : index
    %1235 = memref.load %arg4[%c28_279] : memref<32xf32, #tpu.memory_space<smem>>
    %1236 = vector.broadcast %1235 : f32 to vector<8x128xf32>
    %1237 = arith.addf %1234, %1236 : vector<8x128xf32>
    %cst_280 = arith.constant 0.000000e+00 : f32
    %1238 = vector.broadcast %cst_280 : f32 to vector<8x128xf32>
    %1239 = arith.maximumf %1237, %1238 : vector<8x128xf32>
    %c84_281 = arith.constant 84 : index
    %1240 = memref.load %arg5[%c84_281] : memref<96xf32, #tpu.memory_space<smem>>
    %1241 = vector.broadcast %1240 : f32 to vector<8x128xf32>
    %1242 = arith.mulf %1239, %1241 : vector<8x128xf32>
    %1243 = arith.addf %1223, %1242 : vector<8x128xf32>
    %c85_282 = arith.constant 85 : index
    %1244 = memref.load %arg5[%c85_282] : memref<96xf32, #tpu.memory_space<smem>>
    %1245 = vector.broadcast %1244 : f32 to vector<8x128xf32>
    %1246 = arith.mulf %1239, %1245 : vector<8x128xf32>
    %1247 = arith.addf %1227, %1246 : vector<8x128xf32>
    %c86_283 = arith.constant 86 : index
    %1248 = memref.load %arg5[%c86_283] : memref<96xf32, #tpu.memory_space<smem>>
    %1249 = vector.broadcast %1248 : f32 to vector<8x128xf32>
    %1250 = arith.mulf %1239, %1249 : vector<8x128xf32>
    %1251 = arith.addf %1231, %1250 : vector<8x128xf32>
    %c29_284 = arith.constant 29 : index
    %1252 = memref.load %arg3[%c29_284] : memref<32xf32, #tpu.memory_space<smem>>
    %1253 = vector.broadcast %1252 : f32 to vector<8x128xf32>
    %1254 = arith.mulf %671, %1253 : vector<8x128xf32>
    %c29_285 = arith.constant 29 : index
    %1255 = memref.load %arg4[%c29_285] : memref<32xf32, #tpu.memory_space<smem>>
    %1256 = vector.broadcast %1255 : f32 to vector<8x128xf32>
    %1257 = arith.addf %1254, %1256 : vector<8x128xf32>
    %cst_286 = arith.constant 0.000000e+00 : f32
    %1258 = vector.broadcast %cst_286 : f32 to vector<8x128xf32>
    %1259 = arith.maximumf %1257, %1258 : vector<8x128xf32>
    %c87_287 = arith.constant 87 : index
    %1260 = memref.load %arg5[%c87_287] : memref<96xf32, #tpu.memory_space<smem>>
    %1261 = vector.broadcast %1260 : f32 to vector<8x128xf32>
    %1262 = arith.mulf %1259, %1261 : vector<8x128xf32>
    %1263 = arith.addf %1243, %1262 : vector<8x128xf32>
    %c88_288 = arith.constant 88 : index
    %1264 = memref.load %arg5[%c88_288] : memref<96xf32, #tpu.memory_space<smem>>
    %1265 = vector.broadcast %1264 : f32 to vector<8x128xf32>
    %1266 = arith.mulf %1259, %1265 : vector<8x128xf32>
    %1267 = arith.addf %1247, %1266 : vector<8x128xf32>
    %c89_289 = arith.constant 89 : index
    %1268 = memref.load %arg5[%c89_289] : memref<96xf32, #tpu.memory_space<smem>>
    %1269 = vector.broadcast %1268 : f32 to vector<8x128xf32>
    %1270 = arith.mulf %1259, %1269 : vector<8x128xf32>
    %1271 = arith.addf %1251, %1270 : vector<8x128xf32>
    %c30_290 = arith.constant 30 : index
    %1272 = memref.load %arg3[%c30_290] : memref<32xf32, #tpu.memory_space<smem>>
    %1273 = vector.broadcast %1272 : f32 to vector<8x128xf32>
    %1274 = arith.mulf %671, %1273 : vector<8x128xf32>
    %c30_291 = arith.constant 30 : index
    %1275 = memref.load %arg4[%c30_291] : memref<32xf32, #tpu.memory_space<smem>>
    %1276 = vector.broadcast %1275 : f32 to vector<8x128xf32>
    %1277 = arith.addf %1274, %1276 : vector<8x128xf32>
    %cst_292 = arith.constant 0.000000e+00 : f32
    %1278 = vector.broadcast %cst_292 : f32 to vector<8x128xf32>
    %1279 = arith.maximumf %1277, %1278 : vector<8x128xf32>
    %c90_293 = arith.constant 90 : index
    %1280 = memref.load %arg5[%c90_293] : memref<96xf32, #tpu.memory_space<smem>>
    %1281 = vector.broadcast %1280 : f32 to vector<8x128xf32>
    %1282 = arith.mulf %1279, %1281 : vector<8x128xf32>
    %1283 = arith.addf %1263, %1282 : vector<8x128xf32>
    %c91_294 = arith.constant 91 : index
    %1284 = memref.load %arg5[%c91_294] : memref<96xf32, #tpu.memory_space<smem>>
    %1285 = vector.broadcast %1284 : f32 to vector<8x128xf32>
    %1286 = arith.mulf %1279, %1285 : vector<8x128xf32>
    %1287 = arith.addf %1267, %1286 : vector<8x128xf32>
    %c92_295 = arith.constant 92 : index
    %1288 = memref.load %arg5[%c92_295] : memref<96xf32, #tpu.memory_space<smem>>
    %1289 = vector.broadcast %1288 : f32 to vector<8x128xf32>
    %1290 = arith.mulf %1279, %1289 : vector<8x128xf32>
    %1291 = arith.addf %1271, %1290 : vector<8x128xf32>
    %c31_296 = arith.constant 31 : index
    %1292 = memref.load %arg3[%c31_296] : memref<32xf32, #tpu.memory_space<smem>>
    %1293 = vector.broadcast %1292 : f32 to vector<8x128xf32>
    %1294 = arith.mulf %671, %1293 : vector<8x128xf32>
    %c31_297 = arith.constant 31 : index
    %1295 = memref.load %arg4[%c31_297] : memref<32xf32, #tpu.memory_space<smem>>
    %1296 = vector.broadcast %1295 : f32 to vector<8x128xf32>
    %1297 = arith.addf %1294, %1296 : vector<8x128xf32>
    %cst_298 = arith.constant 0.000000e+00 : f32
    %1298 = vector.broadcast %cst_298 : f32 to vector<8x128xf32>
    %1299 = arith.maximumf %1297, %1298 : vector<8x128xf32>
    %c93_299 = arith.constant 93 : index
    %1300 = memref.load %arg5[%c93_299] : memref<96xf32, #tpu.memory_space<smem>>
    %1301 = vector.broadcast %1300 : f32 to vector<8x128xf32>
    %1302 = arith.mulf %1299, %1301 : vector<8x128xf32>
    %1303 = arith.addf %1283, %1302 : vector<8x128xf32>
    %c94_300 = arith.constant 94 : index
    %1304 = memref.load %arg5[%c94_300] : memref<96xf32, #tpu.memory_space<smem>>
    %1305 = vector.broadcast %1304 : f32 to vector<8x128xf32>
    %1306 = arith.mulf %1299, %1305 : vector<8x128xf32>
    %1307 = arith.addf %1287, %1306 : vector<8x128xf32>
    %c95_301 = arith.constant 95 : index
    %1308 = memref.load %arg5[%c95_301] : memref<96xf32, #tpu.memory_space<smem>>
    %1309 = vector.broadcast %1308 : f32 to vector<8x128xf32>
    %1310 = arith.mulf %1299, %1309 : vector<8x128xf32>
    %1311 = arith.addf %1291, %1310 : vector<8x128xf32>
    %c0_302 = arith.constant 0 : index
    %1312 = arith.index_cast %5 : i32 to index
    %c0_303 = arith.constant 0 : index
    %1313 = vector.load %arg7[%c0_302, %1312, %c0_303] : memref<3x8x128xf32, #tpu.memory_space<vmem>>, vector<1x8x128xf32>
    %1314 = vector.shape_cast %1313 : vector<1x8x128xf32> to vector<8x128xf32>
    %1315 = vector.shape_cast %1303 : vector<8x128xf32> to vector<1x8x128xf32>
    tpu.vector_store %arg7[%c0_302, %1312, %c0_303], %1315 {strides = array<i32>} : memref<3x8x128xf32, #tpu.memory_space<vmem>>, vector<1x8x128xf32>,
    %c1_304 = arith.constant 1 : index
    %1316 = arith.index_cast %5 : i32 to index
    %c0_305 = arith.constant 0 : index
    %1317 = vector.load %arg7[%c1_304, %1316, %c0_305] : memref<3x8x128xf32, #tpu.memory_space<vmem>>, vector<1x8x128xf32>
    %1318 = vector.shape_cast %1317 : vector<1x8x128xf32> to vector<8x128xf32>
    %1319 = vector.shape_cast %1307 : vector<8x128xf32> to vector<1x8x128xf32>
    tpu.vector_store %arg7[%c1_304, %1316, %c0_305], %1319 {strides = array<i32>} : memref<3x8x128xf32, #tpu.memory_space<vmem>>, vector<1x8x128xf32>,
    %c2_306 = arith.constant 2 : index
    %1320 = arith.index_cast %5 : i32 to index
    %c0_307 = arith.constant 0 : index
    %1321 = vector.load %arg7[%c2_306, %1320, %c0_307] : memref<3x8x128xf32, #tpu.memory_space<vmem>>, vector<1x8x128xf32>
    %1322 = vector.shape_cast %1321 : vector<1x8x128xf32> to vector<8x128xf32>
    %1323 = vector.shape_cast %1311 : vector<8x128xf32> to vector<1x8x128xf32>
    tpu.vector_store %arg7[%c2_306, %1320, %c0_307], %1323 {strides = array<i32>} : memref<3x8x128xf32, #tpu.memory_space<vmem>>, vector<1x8x128xf32>,
    %c1_i32_308 = arith.constant 1 : i32
    return
  }
  func.func @transform_0(%arg0: i32) -> i32 {
    %c0_i32 = arith.constant 0 : i32
    %c0_i32_0 = arith.constant 0 : i32
    return %c0_i32 : i32
  }
  func.func @transform_1(%arg0: i32) -> (i32, i32, i32, i32) {
    %c0_i32 = arith.constant 0 : i32
    %c0_i32_0 = arith.constant 0 : i32
    %c0_i32_1 = arith.constant 0 : i32
    %c0_i32_2 = arith.constant 0 : i32
    return %c0_i32, %c0_i32_0, %arg0, %c0_i32_1 : i32, i32, i32, i32
  }
  func.func @transform_2(%arg0: i32) -> i32 {
    %c0_i32 = arith.constant 0 : i32
    %c0_i32_0 = arith.constant 0 : i32
    return %c0_i32 : i32
  }
  func.func @transform_3(%arg0: i32) -> i32 {
    %c0_i32 = arith.constant 0 : i32
    %c0_i32_0 = arith.constant 0 : i32
    return %c0_i32 : i32
  }
  func.func @transform_4(%arg0: i32) -> i32 {
    %c0_i32 = arith.constant 0 : i32
    %c0_i32_0 = arith.constant 0 : i32
    return %c0_i32 : i32
  }
  func.func @transform_5(%arg0: i32) -> i32 {
    %c0_i32 = arith.constant 0 : i32
    %c0_i32_0 = arith.constant 0 : i32
    return %c0_i32 : i32
  }
  func.func @transform_6(%arg0: i32) -> (i32, i32, i32) {
    %c0_i32 = arith.constant 0 : i32
    %c0_i32_0 = arith.constant 0 : i32
    %c0_i32_1 = arith.constant 0 : i32
    return %c0_i32, %arg0, %c0_i32_0 : i32, i32, i32
  }
}

</mosaic_0001>

<llo_original>
// kernel: iugcnet_forward.2
$region0: #{iugcnet_forward.2}
  #allocation0 [shape = 'u32[]', space=smem, size = 0x4, offset = 0x4, fixed_abs, tag = 'smem constant byte address 0x4 - core index']
  #allocation1 [shape = 'u32[144,128]{1,0:T(1,128)}', space=vmem, size = 0x12000, scoped, tag = 'internal scratch']
  %s0 = inlined_call_operand.vmem [shape: f32[2,3,8,128], index: 0, kind: input, shape index: {}]
  %s1 = inlined_call_operand.vmem [shape: f32[96], index: 1, kind: input, shape index: {}]
  %s2 = inlined_call_operand.vmem [shape: f32[32], index: 2, kind: input, shape index: {}]
  %s3 = inlined_call_operand.vmem [shape: f32[64], index: 3, kind: input, shape index: {}]
  %s4 = inlined_call_operand.vmem [shape: f32[2,2,8,128], index: 4, kind: output, shape index: {0}]
  %s5 = inlined_call_operand.vmem [shape: f32[2,2,8,128], index: 5, kind: output, shape index: {1}]
  %6 = xla_tuple %s4, %s5
  %s7 = sld [smem:[#allocation0]]
  $region73: #{iugcnet_forward.2} parent=0
    _
  %s9 = ssub.s32 1, %s7
  %s10 = scalar_select 0, %s9, %s7
  $region1: #{iugcnet_forward.2} parent=0
    #allocation2 [shape = 'u8[512]{0}', space=smem, size = 0x200, scoped, tag = 'input window, operand 1, single buffered']
    #allocation3 [shape = 's32[2]{0}', space=sflag, size = 0x8, scoped, tag = 'scoped memory for iugcnet_forward.2']
    #allocation4 [shape = 'u8[512]{0}', space=smem, size = 0x200, scoped, tag = 'input window, operand 2, single buffered']
    #allocation5 [shape = 's32[1]{0}', space=sflag, size = 0x4, scoped, tag = 'scoped memory for iugcnet_forward.2']
    #allocation6 [shape = 'u8[512]{0}', space=smem, size = 0x200, scoped, tag = 'input window, operand 3, single buffered']
    %11 = vsyncpa [#allocation3], 0
    %12 = vsyncpa [#allocation5], 0
    loop: start=0, step=1, limit=4
    $region2: #{iugcnet_forward.2} parent=1 // loop_pre_header
      _
    $region3: #{iugcnet_forward.2} parent=1 // loop_header
      %s14 = sphi 0, %s18
      %p15 = scmp.ge.s32.totalorder %s14, 4
      %s21 = sphi 0, %s33
      %s22 = sphi 0, %s29
      %s23 = sphi 0, %s21
      %s24 = sphi 0, %s22
      %s25 = sphi 0, %s23
      %s26 = sphi 0, %s24
      %s38 = sphi 0, %s40
      %s41 = sphi 0, %s38
      %s42 = sphi 0, %s41
      %s58 = sphi 0, %s42
      %s62 = sphi 0, %s62
      %s64 = sphi 0, %s62
      %s65 = sphi 0, %s64
      %s79 = sphi 0, %s65
      %s83 = sphi 0, %s83
      %s85 = sphi 0, %s83
      %s86 = sphi 0, %s85
      %s100 = sphi 0, %s86
      %s104 = sphi 0, %s104
      %s106 = sphi 0, %s104
      %s107 = sphi 0, %s106
      %s121 = sphi 0, %s107
      %s127 = sphi 0, %s129
      %s130 = sphi 0, %s127
      %s131 = sphi 0, %s130
      %s147 = sphi 0, %s131
      %s153 = sphi 0, %s155
      %s156 = sphi 0, %s153
      %s157 = sphi 0, %s156
      %s173 = sphi 0, %s157
    $region4: #{iugcnet_forward.2} parent=1 // loop_header_branch
      %17 = sbr.rel (%p15) target = $region8
    $region5: #{iugcnet_forward.2} parent=1 // loop_body
      %s19 = ssub.s32 %s14, 1
      %s20 = ssub.s32 %s14, 2
      %s27 = sadd.s32 1, %s22
      %p28 = scmp.ge.s32.totalorder %s27, 1
      %s29 = scalar_select %p28, 0, %s27
      %s30 = sadd.s32 1, %s21
      %s31 = scalar_select %p28, %s30, %s21
      %p32 = scmp.ge.s32.totalorder %s31, 2
      %s33 = scalar_select %p32, 0, %s31
      %s34 = ssub.s32 %s21, %s33
      %s35 = ssub.s32 %s22, %s29
      %s36 = sor.u32 %s34, %s35
      %p37 = scmp.eq.s32.totalorder %s36, 0
      %s39 = sadd.s32 %s38, 1
      %s40 = scalar_select %p37, %s38, %s39
      %p43 = pneg %p37
      %p44 = scmp.eq.s32.totalorder %s14, 1
      %p45 = por %p43, %p44
      %p46 = scmp.ne.s32.totalorder %s38, %s41
      %p47 = scmp.eq.s32.totalorder %s14, 0
      %p48 = por %p46, %p47
      %p49 = scmp.ne.s32.totalorder %s38, %s41
      %p50 = scmp.eq.s32.totalorder %s19, 1
      %p51 = por %p49, %p50
      %p52 = scmp.ne.s32.totalorder %s41, %s42
      %p53 = scmp.eq.s32.totalorder %s19, 0
      %p54 = por %p52, %p53
      %p55 = scmp.ne.s32.totalorder %s41, %s42
      %p56 = scmp.eq.s32.totalorder %s20, 1
      %p57 = por %p55, %p56
      %p59 = scmp.ne.s32.totalorder %s42, %s58
      %p60 = scmp.eq.s32.totalorder %s20, 0
      %p61 = por %p59, %p60
      %s63 = sadd.s32 %s62, 1
      %p66 = scmp.eq.s32.totalorder %s14, 1
      %p67 = scmp.ne.s32.totalorder %s62, %s64
      %p68 = scmp.eq.s32.totalorder %s14, 0
      %p69 = por %p67, %p68
      %p70 = scmp.ne.s32.totalorder %s62, %s64
      %p71 = scmp.eq.s32.totalorder %s19, 1
      %p72 = por %p70, %p71
      %p73 = scmp.ne.s32.totalorder %s64, %s65
      %p74 = scmp.eq.s32.totalorder %s19, 0
      %p75 = por %p73, %p74
      %p76 = scmp.ne.s32.totalorder %s64, %s65
      %p77 = scmp.eq.s32.totalorder %s20, 1
      %p78 = por %p76, %p77
      %p80 = scmp.ne.s32.totalorder %s65, %s79
      %p81 = scmp.eq.s32.totalorder %s20, 0
      %p82 = por %p80, %p81
      %s84 = sadd.s32 %s83, 1
      %p87 = scmp.eq.s32.totalorder %s14, 1
      %p88 = scmp.ne.s32.totalorder %s83, %s85
      %p89 = scmp.eq.s32.totalorder %s14, 0
      %p90 = por %p88, %p89
      %p91 = scmp.ne.s32.totalorder %s83, %s85
      %p92 = scmp.eq.s32.totalorder %s19, 1
      %p93 = por %p91, %p92
      %p94 = scmp.ne.s32.totalorder %s85, %s86
      %p95 = scmp.eq.s32.totalorder %s19, 0
      %p96 = por %p94, %p95
      %p97 = scmp.ne.s32.totalorder %s85, %s86
      %p98 = scmp.eq.s32.totalorder %s20, 1
      %p99 = por %p97, %p98
      %p101 = scmp.ne.s32.totalorder %s86, %s100
      %p102 = scmp.eq.s32.totalorder %s20, 0
      %p103 = por %p101, %p102
      %s105 = sadd.s32 %s104, 1
      %p108 = scmp.eq.s32.totalorder %s14, 1
      %p109 = scmp.ne.s32.totalorder %s104, %s106
      %p110 = scmp.eq.s32.totalorder %s14, 0
      %p111 = por %p109, %p110
      %p112 = scmp.ne.s32.totalorder %s104, %s106
      %p113 = scmp.eq.s32.totalorder %s19, 1
      %p114 = por %p112, %p113
      %p115 = scmp.ne.s32.totalorder %s106, %s107
      %p116 = scmp.eq.s32.totalorder %s19, 0
      %p117 = por %p115, %p116
      %p118 = scmp.ne.s32.totalorder %s106, %s107
      %p119 = scmp.eq.s32.totalorder %s20, 1
      %p120 = por %p118, %p119
      %p122 = scmp.ne.s32.totalorder %s107, %s121
      %p123 = scmp.eq.s32.totalorder %s20, 0
      %p124 = por %p122, %p123
      %s125 = ssub.s32 %s21, %s33
      %p126 = scmp.eq.s32.totalorder %s125, 0
      %s128 = sadd.s32 %s127, 1
      %s129 = scalar_select %p126, %s127, %s128
      %p132 = pneg %p126
      %p133 = scmp.eq.s32.totalorder %s14, 1
      %p134 = por %p132, %p133
      %p135 = scmp.ne.s32.totalorder %s127, %s130
      %p136 = scmp.eq.s32.totalorder %s14, 0
      %p137 = por %p135, %p136
      %p138 = scmp.ne.s32.totalorder %s127, %s130
      %p139 = scmp.eq.s32.totalorder %s19, 1
      %p140 = por %p138, %p139
      %p141 = scmp.ne.s32.totalorder %s130, %s131
      %p142 = scmp.eq.s32.totalorder %s19, 0
      %p143 = por %p141, %p142
      %p144 = scmp.ne.s32.totalorder %s130, %s131
      %p145 = scmp.eq.s32.totalorder %s20, 1
      %p146 = por %p144, %p145
      %p148 = scmp.ne.s32.totalorder %s131, %s147
      %p149 = scmp.eq.s32.totalorder %s20, 0
      %p150 = por %p148, %p149
      %s151 = ssub.s32 %s21, %s33
      %p152 = scmp.eq.s32.totalorder %s151, 0
      %s154 = sadd.s32 %s153, 1
      %s155 = scalar_select %p152, %s153, %s154
      %p158 = pneg %p152
      %p159 = scmp.eq.s32.totalorder %s14, 1
      %p160 = por %p158, %p159
      %p161 = scmp.ne.s32.totalorder %s153, %s156
      %p162 = scmp.eq.s32.totalorder %s14, 0
      %p163 = por %p161, %p162
      %p164 = scmp.ne.s32.totalorder %s153, %s156
      %p165 = scmp.eq.s32.totalorder %s19, 1
      %p166 = por %p164, %p165
      %p167 = scmp.ne.s32.totalorder %s156, %s157
      %p168 = scmp.eq.s32.totalorder %s19, 0
      %p169 = por %p167, %p168
      %p170 = scmp.ne.s32.totalorder %s156, %s157
      %p171 = scmp.eq.s32.totalorder %s20, 1
      %p172 = por %p170, %p171
      %p174 = scmp.ne.s32.totalorder %s157, %s173
      %p175 = scmp.eq.s32.totalorder %s20, 0
      %p176 = por %p174, %p175
      %p177 = scmp.le.s32.totalorder 1, %s14
      %p178 = scmp.lt.s32.totalorder %s14, 3
      %p179 = pnand %p177, %p178
      %p180 = pneg %p179
      // Predicated region
      $region9: #{iugcnet_forward.2} parent=5 // pred_check
        _
      $region10: #{iugcnet_forward.2} parent=5 // pred_check_branch
        %182 = sbr.rel (%p179) target = $region12
      $region11: #{iugcnet_forward.2} parent=5 // pred_region
        %s183 = ssub.s32 %s14, 1
        // Predicated region
        $region13: #{iugcnet_forward.2} parent=11 // pred_check
          %p184 = pneg %p75
        $region14: #{iugcnet_forward.2} parent=11 // pred_check_branch
          %186 = sbr.rel (%p184) target = $region16
        $region15: #{iugcnet_forward.2} parent=11 // pred_region
          %s188 = ssub.s32 16, 16
          %189 = vsyncadd [#allocation3], %s188
          %s191 = sshll.u32 %s1, 4
          %s192 = int_to_ptr.vmem [resolvable:$true] %s191
          %194 = dma.vmem_to_smem %s192, 16, [#allocation2], [#allocation3]
        $region16: #{iugcnet_forward.2} parent=11 // pred_fallthru
          _
        // Predicated region
        $region17: #{iugcnet_forward.2} parent=11 // pred_check
          %p195 = pneg %p96
        $region18: #{iugcnet_forward.2} parent=11 // pred_check_branch
          %197 = sbr.rel (%p195) target = $region20
        $region19: #{iugcnet_forward.2} parent=11 // pred_region
          %s199 = ssub.s32 16, 16
          %200 = vsyncadd [#allocation5], %s199
          %s202 = sshll.u32 %s2, 4
          %s203 = int_to_ptr.vmem [resolvable:$true] %s202
          %205 = dma.vmem_to_smem %s203, 16, [#allocation4], [#allocation5]
        $region20: #{iugcnet_forward.2} parent=11 // pred_fallthru
          _
        // Predicated region
        $region21: #{iugcnet_forward.2} parent=11 // pred_check
          %p206 = pneg %p117
        $region22: #{iugcnet_forward.2} parent=11 // pred_check_branch
          %208 = sbr.rel (%p206) target = $region24
        $region23: #{iugcnet_forward.2} parent=11 // pred_region
          %s210 = ssub.s32 16, 16
          %211 = vsyncadd [#allocation5], %s210
          %s213 = sshll.u32 %s3, 4
          %s214 = int_to_ptr.vmem [resolvable:$true] %s213
          %216 = dma.vmem_to_smem %s214, 16, [#allocation6], [#allocation5]
        $region24: #{iugcnet_forward.2} parent=11 // pred_fallthru
          _
      $region12: #{iugcnet_forward.2} parent=5 // pred_fallthru
        _
      %p217 = scmp.lt.s32.totalorder %s14, 2
      // Predicated region
      $region25: #{iugcnet_forward.2} parent=5 // pred_check
        %p218 = pneg %p217
      $region26: #{iugcnet_forward.2} parent=5 // pred_check_branch
        %220 = sbr.rel (%p218) target = $region28
      $region27: #{iugcnet_forward.2} parent=5 // pred_region
        // Predicated region
        $region29: #{iugcnet_forward.2} parent=27 // pred_check
          %p221 = pneg %p48
        $region30: #{iugcnet_forward.2} parent=27 // pred_check_branch
          %223 = sbr.rel (%p221) target = $region32
        $region31: #{iugcnet_forward.2} parent=27 // pred_region
          %p224 = scmp.lt.s32.totalorder %s21, 1
          %s225 = scalar_select %p224, %s21, 1
          %p226 = scmp.lt.s32.totalorder %s22, 0
          %s227 = scalar_select %p226, %s22, 0
          %s228 = smul.addr %s225, 3
          %s229 = sadd.s32 %s227, %s228
          %s230 = smul.addr %s229, 8
          %s231 = scalar_lea.vmem %s0, %s230
        $region32: #{iugcnet_forward.2} parent=27 // pred_fallthru
          _
      $region28: #{iugcnet_forward.2} parent=5 // pred_fallthru
        _
      %p232 = scmp.le.s32.totalorder 1, %s14
      %p233 = scmp.lt.s32.totalorder %s14, 3
      %p234 = pnand %p232, %p233
      %p235 = pneg %p234
      // Predicated region
      $region33: #{iugcnet_forward.2} parent=5 // pred_check
        _
      $region34: #{iugcnet_forward.2} parent=5 // pred_check_branch
        %237 = sbr.rel (%p234) target = $region36
      $region35: #{iugcnet_forward.2} parent=5 // pred_region
        %s238 = ssub.s32 %s14, 1
        // Predicated region
        $region37: #{iugcnet_forward.2} parent=35 // pred_check
          %p239 = pneg %p75
        $region38: #{iugcnet_forward.2} parent=35 // pred_check_branch
          %241 = sbr.rel (%p239) target = $region40
        $region39: #{iugcnet_forward.2} parent=35 // pred_region
          %242 = dma.done [#allocation3], 16
        $region40: #{iugcnet_forward.2} parent=35 // pred_fallthru
          _
        // Predicated region
        $region41: #{iugcnet_forward.2} parent=35 // pred_check
          %p243 = pneg %p96
        $region42: #{iugcnet_forward.2} parent=35 // pred_check_branch
          %245 = sbr.rel (%p243) target = $region44
        $region43: #{iugcnet_forward.2} parent=35 // pred_region
          %246 = dma.done [#allocation5], 16
        $region44: #{iugcnet_forward.2} parent=35 // pred_fallthru
          _
        // Predicated region
        $region45: #{iugcnet_forward.2} parent=35 // pred_check
          %p247 = pneg %p117
        $region46: #{iugcnet_forward.2} parent=35 // pred_check_branch
          %249 = sbr.rel (%p247) target = $region48
        $region47: #{iugcnet_forward.2} parent=35 // pred_region
          %250 = dma.done [#allocation5], 16
        $region48: #{iugcnet_forward.2} parent=35 // pred_fallthru
          _
        %251 = sfence
        %p252 = scmp.lt.s32.totalorder %s23, 1
        %s253 = scalar_select %p252, %s23, 1
        %p254 = scmp.lt.s32.totalorder %s24, 0
        %s255 = scalar_select %p254, %s24, 0
        %s256 = smul.addr %s253, 3
        %s257 = sadd.s32 %s255, %s256
        %s258 = smul.addr %s257, 8
        %s259 = scalar_lea.vmem %s0, %s258
        %p260 = pneg %p54
        %p261 = pneg %p51
        %p262 = pneg %p75
        %p263 = pneg %p72
        %p264 = pneg %p96
        %p265 = pneg %p93
        %p266 = pneg %p117
        %p267 = pneg %p114
        %p268 = pneg %p143
        %p269 = pneg %p140
        %p270 = scmp.lt.s32.totalorder %s23, 1
        %s271 = scalar_select %p270, %s23, 1
        %s272 = smul.addr %s271, 2
        %s273 = smul.addr %s272, 8
        %s274 = scalar_lea.vmem %s4, %s273
        %p275 = pneg %p169
        %p276 = pneg %p166
        %p277 = scmp.lt.s32.totalorder %s23, 1
        %s278 = scalar_select %p277, %s23, 1
        %s279 = smul.addr %s278, 2
        %s280 = smul.addr %s279, 8
        %s281 = scalar_lea.vmem %s5, %s280
        %p282 = scmp.lt.s32.totalorder %s23, 1
        %s283 = scalar_select %p282, %s23, 1
        %p284 = scmp.lt.s32.totalorder %s24, 0
        %s285 = scalar_select %p284, %s24, 0
        %s286 = smul.addr %s283, 3
        %s287 = sadd.s32 %s285, %s286
        %s288 = smul.addr %s287, 8
        %s289 = scalar_lea.vmem %s0, %s288
        %p290 = scmp.lt.s32.totalorder %s23, 1
        %s291 = scalar_select %p290, %s23, 1
        %s292 = smul.addr %s291, 2
        %s293 = smul.addr %s292, 8
        %s294 = scalar_lea.vmem %s4, %s293
        %p295 = scmp.lt.s32.totalorder %s23, 1
        %s296 = scalar_select %p295, %s23, 1
        %s297 = smul.addr %s296, 2
        %s298 = smul.addr %s297, 8
        %s299 = scalar_lea.vmem %s5, %s298
        %p300 = scmp.eq.s32.totalorder %s24, 0
        // Predicated region
        $region49: #{iugcnet_forward.2} parent=35 // pred_check
          %p301 = pneg %p300
        $region50: #{iugcnet_forward.2} parent=35 // pred_check_branch
          %303 = sbr.rel (%p301) target = $region52
        $region51: #{iugcnet_forward.2} parent=35 // pred_region
          %304 = vst [vmem:[%s294] sm:$0xff] 0.0
          %305 = vst [vmem:[%s294 + $0x8] sm:$0xff] 0.0
          %306 = vst [vmem:[%s299] sm:$0xff] 0.0
          %307 = vst [vmem:[%s299 + $0x8] sm:$0xff] 0.0
        $region52: #{iugcnet_forward.2} parent=35 // pred_fallthru
          _
        %v308 = vld [vmem:[%s289] sm:$0xff]
        %s309 = sadd.s32 0, 8
        %s310 = scalar_lea.vmem %s289, %s309
        %v311 = vld [vmem:[%s310] sm:$0xff]
        %s312 = sadd.s32 0, 16
        %s313 = scalar_lea.vmem %s289, %s312
        %v314 = vld [vmem:[%s313] sm:$0xff]
        %v315 = vld [vmem:[%s299] sm:$0xff]
        %v316 = vadd.f32 %v315, %v308
        %317 = vst [vmem:[%s299] sm:$0xff] %v316
        %s318 = scalar_lea.vmem %s299, 8
        %v319 = vld [vmem:[%s318] sm:$0xff]
        %v320 = vmul.f32 %v308, %v308
        %v321 = vadd.f32 %v319, %v320
        %322 = vst [vmem:[%s318] sm:$0xff] %v321
        %s323 = sld [smem:[#allocation4]]
        %v324 = vstv %s323
        %v325 = vadd.f32 %v324, 0.0
        %s326 = sld [smem:[#allocation2]]
        %v327 = vstv %s326
        %v328 = vmul.f32 %v308, %v327
        %v329 = vadd.f32 %v325, %v328
        %s330 = sld [smem:[#allocation2 + $0x1]]
        %v331 = vstv %s330
        %v332 = vmul.f32 %v311, %v331
        %v333 = vadd.f32 %v329, %v332
        %s334 = sld [smem:[#allocation2 + $0x2]]
        %v335 = vstv %s334
        %v336 = vmul.f32 %v314, %v335
        %v337 = vadd.f32 %v333, %v336
        %v338 = vmax.f32 %v337, 0.0
        %s339 = sld [smem:[#allocation6]]
        %v340 = vstv %s339
        %v341 = vmul.f32 %v338, %v340
        %v342 = vadd.f32 %v341, 0.0
        %s343 = sld [smem:[#allocation6 + $0x1]]
        %v344 = vstv %s343
        %v345 = vmul.f32 %v338, %v344
        %v346 = vadd.f32 %v345, 0.0
        %s347 = sld [smem:[#allocation4 + $0x1]]
        %v348 = vstv %s347
        %v349 = vadd.f32 %v348, 0.0
        %s350 = sld [smem:[#allocation2 + $0x3]]
        %v351 = vstv %s350
        %v352 = vmul.f32 %v308, %v351
        %v353 = vadd.f32 %v349, %v352
        %s354 = sld [smem:[#allocation2 + $0x4]]
        %v355 = vstv %s354
        %v356 = vmul.f32 %v311, %v355
        %v357 = vadd.f32 %v353, %v356
        %s358 = sld [smem:[#allocation2 + $0x5]]
        %v359 = vstv %s358
        %v360 = vmul.f32 %v314, %v359
        %v361 = vadd.f32 %v357, %v360
        %v362 = vmax.f32 %v361, 0.0
        %s363 = sld [smem:[#allocation6 + $0x2]]
        %v364 = vstv %s363
        %v365 = vmul.f32 %v362, %v364
        %v366 = vadd.f32 %v342, %v365
        %s367 = sld [smem:[#allocation6 + $0x3]]
        %v368 = vstv %s367
        %v369 = vmul.f32 %v362, %v368
        %v370 = vadd.f32 %v346, %v369
        %s371 = sld [smem:[#allocation4 + $0x2]]
        %v372 = vstv %s371
        %v373 = vadd.f32 %v372, 0.0
        %s374 = sld [smem:[#allocation2 + $0x6]]
        %v375 = vstv %s374
        %v376 = vmul.f32 %v308, %v375
        %v377 = vadd.f32 %v373, %v376
        %s378 = sld [smem:[#allocation2 + $0x7]]
        %v379 = vstv %s378
        %v380 = vmul.f32 %v311, %v379
        %v381 = vadd.f32 %v377, %v380
        %s382 = sld [smem:[#allocation2 + $0x8]]
        %v383 = vstv %s382
        %v384 = vmul.f32 %v314, %v383
        %v385 = vadd.f32 %v381, %v384
        %v386 = vmax.f32 %v385, 0.0
        %s387 = sld [smem:[#allocation6 + $0x4]]
        %v388 = vstv %s387
        %v389 = vmul.f32 %v386, %v388
        %v390 = vadd.f32 %v366, %v389
        %s391 = sld [smem:[#allocation6 + $0x5]]
        %v392 = vstv %s391
        %v393 = vmul.f32 %v386, %v392
        %v394 = vadd.f32 %v370, %v393
        %s395 = sld [smem:[#allocation4 + $0x3]]
        %v396 = vstv %s395
        %v397 = vadd.f32 %v396, 0.0
        %s398 = sld [smem:[#allocation2 + $0x9]]
        %v399 = vstv %s398
        %v400 = vmul.f32 %v308, %v399
        %v401 = vadd.f32 %v397, %v400
        %s402 = sld [smem:[#allocation2 + $0xa]]
        %v403 = vstv %s402
        %v404 = vmul.f32 %v311, %v403
        %v405 = vadd.f32 %v401, %v404
        %s406 = sld [smem:[#allocation2 + $0xb]]
        %v407 = vstv %s406
        %v408 = vmul.f32 %v314, %v407
        %v409 = vadd.f32 %v405, %v408
        %v410 = vmax.f32 %v409, 0.0
        %s411 = sld [smem:[#allocation6 + $0x6]]
        %v412 = vstv %s411
        %v413 = vmul.f32 %v410, %v412
        %v414 = vadd.f32 %v390, %v413
        %s415 = sld [smem:[#allocation6 + $0x7]]
        %v416 = vstv %s415
        %v417 = vmul.f32 %v410, %v416
        %v418 = vadd.f32 %v394, %v417
        %s419 = sld [smem:[#allocation4 + $0x4]]
        %v420 = vstv %s419
        %v421 = vadd.f32 %v420, 0.0
        %s422 = sld [smem:[#allocation2 + $0xc]]
        %v423 = vstv %s422
        %v424 = vmul.f32 %v308, %v423
        %v425 = vadd.f32 %v421, %v424
        %s426 = sld [smem:[#allocation2 + $0xd]]
        %v427 = vstv %s426
        %v428 = vmul.f32 %v311, %v427
        %v429 = vadd.f32 %v425, %v428
        %s430 = sld [smem:[#allocation2 + $0xe]]
        %v431 = vstv %s430
        %v432 = vmul.f32 %v314, %v431
        %v433 = vadd.f32 %v429, %v432
        %v434 = vmax.f32 %v433, 0.0
        %s435 = sld [smem:[#allocation6 + $0x8]]
        %v436 = vstv %s435
        %v437 = vmul.f32 %v434, %v436
        %v438 = vadd.f32 %v414, %v437
        %s439 = sld [smem:[#allocation6 + $0x9]]
        %v440 = vstv %s439
        %v441 = vmul.f32 %v434, %v440
        %v442 = vadd.f32 %v418, %v441
        %s443 = sld [smem:[#allocation4 + $0x5]]
        %v444 = vstv %s443
        %v445 = vadd.f32 %v444, 0.0
        %s446 = sld [smem:[#allocation2 + $0xf]]
        %v447 = vstv %s446
        %v448 = vmul.f32 %v308, %v447
        %v449 = vadd.f32 %v445, %v448
        %s450 = sld [smem:[#allocation2 + $0x10]]
        %v451 = vstv %s450
        %v452 = vmul.f32 %v311, %v451
        %v453 = vadd.f32 %v449, %v452
        %s454 = sld [smem:[#allocation2 + $0x11]]
        %v455 = vstv %s454
        %v456 = vmul.f32 %v314, %v455
        %v457 = vadd.f32 %v453, %v456
        %v458 = vmax.f32 %v457, 0.0
        %s459 = sld [smem:[#allocation6 + $0xa]]
        %v460 = vstv %s459
        %v461 = vmul.f32 %v458, %v460
        %v462 = vadd.f32 %v438, %v461
        %s463 = sld [smem:[#allocation6 + $0xb]]
        %v464 = vstv %s463
        %v465 = vmul.f32 %v458, %v464
        %v466 = vadd.f32 %v442, %v465
        %s467 = sld [smem:[#allocation4 + $0x6]]
        %v468 = vstv %s467
        %v469 = vadd.f32 %v468, 0.0
        %s470 = sld [smem:[#allocation2 + $0x12]]
        %v471 = vstv %s470
        %v472 = vmul.f32 %v308, %v471
        %v473 = vadd.f32 %v469, %v472
        %s474 = sld [smem:[#allocation2 + $0x13]]
        %v475 = vstv %s474
        %v476 = vmul.f32 %v311, %v475
        %v477 = vadd.f32 %v473, %v476
        %s478 = sld [smem:[#allocation2 + $0x14]]
        %v479 = vstv %s478
        %v480 = vmul.f32 %v314, %v479
        %v481 = vadd.f32 %v477, %v480
        %v482 = vmax.f32 %v481, 0.0
        %s483 = sld [smem:[#allocation6 + $0xc]]
        %v484 = vstv %s483
        %v485 = vmul.f32 %v482, %v484
        %v486 = vadd.f32 %v462, %v485
        %s487 = sld [smem:[#allocation6 + $0xd]]
        %v488 = vstv %s487
        %v489 = vmul.f32 %v482, %v488
        %v490 = vadd.f32 %v466, %v489
        %s491 = sld [smem:[#allocation4 + $0x7]]
        %v492 = vstv %s491
        %v493 = vadd.f32 %v492, 0.0
        %s494 = sld [smem:[#allocation2 + $0x15]]
        %v495 = vstv %s494
        %v496 = vmul.f32 %v308, %v495
        %v497 = vadd.f32 %v493, %v496
        %s498 = sld [smem:[#allocation2 + $0x16]]
        %v499 = vstv %s498
        %v500 = vmul.f32 %v311, %v499
        %v501 = vadd.f32 %v497, %v500
        %s502 = sld [smem:[#allocation2 + $0x17]]
        %v503 = vstv %s502
        %v504 = vmul.f32 %v314, %v503
        %v505 = vadd.f32 %v501, %v504
        %v506 = vmax.f32 %v505, 0.0
        %s507 = sld [smem:[#allocation6 + $0xe]]
        %v508 = vstv %s507
        %v509 = vmul.f32 %v506, %v508
        %v510 = vadd.f32 %v486, %v509
        %s511 = sld [smem:[#allocation6 + $0xf]]
        %v512 = vstv %s511
        %v513 = vmul.f32 %v506, %v512
        %v514 = vadd.f32 %v490, %v513
        %s515 = sld [smem:[#allocation4 + $0x8]]
        %v516 = vstv %s515
        %v517 = vadd.f32 %v516, 0.0
        %s518 = sld [smem:[#allocation2 + $0x18]]
        %v519 = vstv %s518
        %v520 = vmul.f32 %v308, %v519
        %v521 = vadd.f32 %v517, %v520
        %s522 = sld [smem:[#allocation2 + $0x19]]
        %v523 = vstv %s522
        %v524 = vmul.f32 %v311, %v523
        %v525 = vadd.f32 %v521, %v524
        %s526 = sld [smem:[#allocation2 + $0x1a]]
        %v527 = vstv %s526
        %v528 = vmul.f32 %v314, %v527
        %v529 = vadd.f32 %v525, %v528
        %v530 = vmax.f32 %v529, 0.0
        %s531 = sld [smem:[#allocation6 + $0x10]]
        %v532 = vstv %s531
        %v533 = vmul.f32 %v530, %v532
        %v534 = vadd.f32 %v510, %v533
        %s535 = sld [smem:[#allocation6 + $0x11]]
        %v536 = vstv %s535
        %v537 = vmul.f32 %v530, %v536
        %v538 = vadd.f32 %v514, %v537
        %s539 = sld [smem:[#allocation4 + $0x9]]
        %v540 = vstv %s539
        %v541 = vadd.f32 %v540, 0.0
        %s542 = sld [smem:[#allocation2 + $0x1b]]
        %v543 = vstv %s542
        %v544 = vmul.f32 %v308, %v543
        %v545 = vadd.f32 %v541, %v544
        %s546 = sld [smem:[#allocation2 + $0x1c]]
        %v547 = vstv %s546
        %v548 = vmul.f32 %v311, %v547
        %v549 = vadd.f32 %v545, %v548
        %s550 = sld [smem:[#allocation2 + $0x1d]]
        %v551 = vstv %s550
        %v552 = vmul.f32 %v314, %v551
        %v553 = vadd.f32 %v549, %v552
        %v554 = vmax.f32 %v553, 0.0
        %s555 = sld [smem:[#allocation6 + $0x12]]
        %v556 = vstv %s555
        %v557 = vmul.f32 %v554, %v556
        %v558 = vadd.f32 %v534, %v557
        %s559 = sld [smem:[#allocation6 + $0x13]]
        %v560 = vstv %s559
        %v561 = vmul.f32 %v554, %v560
        %v562 = vadd.f32 %v538, %v561
        %s563 = sld [smem:[#allocation4 + $0xa]]
        %v564 = vstv %s563
        %v565 = vadd.f32 %v564, 0.0
        %s566 = sld [smem:[#allocation2 + $0x1e]]
        %v567 = vstv %s566
        %v568 = vmul.f32 %v308, %v567
        %v569 = vadd.f32 %v565, %v568
        %s570 = sld [smem:[#allocation2 + $0x1f]]
        %v571 = vstv %s570
        %v572 = vmul.f32 %v311, %v571
        %v573 = vadd.f32 %v569, %v572
        %s574 = sld [smem:[#allocation2 + $0x20]]
        %v575 = vstv %s574
        %v576 = vmul.f32 %v314, %v575
        %v577 = vadd.f32 %v573, %v576
        %v578 = vmax.f32 %v577, 0.0
        %s579 = sld [smem:[#allocation6 + $0x14]]
        %v580 = vstv %s579
        %v581 = vmul.f32 %v578, %v580
        %v582 = vadd.f32 %v558, %v581
        %s583 = sld [smem:[#allocation6 + $0x15]]
        %v584 = vstv %s583
        %v585 = vmul.f32 %v578, %v584
        %v586 = vadd.f32 %v562, %v585
        %s587 = sld [smem:[#allocation4 + $0xb]]
        %v588 = vstv %s587
        %v589 = vadd.f32 %v588, 0.0
        %s590 = sld [smem:[#allocation2 + $0x21]]
        %v591 = vstv %s590
        %v592 = vmul.f32 %v308, %v591
        %v593 = vadd.f32 %v589, %v592
        %s594 = sld [smem:[#allocation2 + $0x22]]
        %v595 = vstv %s594
        %v596 = vmul.f32 %v311, %v595
        %v597 = vadd.f32 %v593, %v596
        %s598 = sld [smem:[#allocation2 + $0x23]]
        %v599 = vstv %s598
        %v600 = vmul.f32 %v314, %v599
        %v601 = vadd.f32 %v597, %v600
        %v602 = vmax.f32 %v601, 0.0
        %s603 = sld [smem:[#allocation6 + $0x16]]
        %v604 = vstv %s603
        %v605 = vmul.f32 %v602, %v604
        %v606 = vadd.f32 %v582, %v605
        %s607 = sld [smem:[#allocation6 + $0x17]]
        %v608 = vstv %s607
        %v609 = vmul.f32 %v602, %v608
        %v610 = vadd.f32 %v586, %v609
        %s611 = sld [smem:[#allocation4 + $0xc]]
        %v612 = vstv %s611
        %v613 = vadd.f32 %v612, 0.0
        %s614 = sld [smem:[#allocation2 + $0x24]]
        %v615 = vstv %s614
        %v616 = vmul.f32 %v308, %v615
        %v617 = vadd.f32 %v613, %v616
        %s618 = sld [smem:[#allocation2 + $0x25]]
        %v619 = vstv %s618
        %v620 = vmul.f32 %v311, %v619
        %v621 = vadd.f32 %v617, %v620
        %s622 = sld [smem:[#allocation2 + $0x26]]
        %v623 = vstv %s622
        %v624 = vmul.f32 %v314, %v623
        %v625 = vadd.f32 %v621, %v624
        %v626 = vmax.f32 %v625, 0.0
        %s627 = sld [smem:[#allocation6 + $0x18]]
        %v628 = vstv %s627
        %v629 = vmul.f32 %v626, %v628
        %v630 = vadd.f32 %v606, %v629
        %s631 = sld [smem:[#allocation6 + $0x19]]
        %v632 = vstv %s631
        %v633 = vmul.f32 %v626, %v632
        %v634 = vadd.f32 %v610, %v633
        %s635 = sld [smem:[#allocation4 + $0xd]]
        %v636 = vstv %s635
        %v637 = vadd.f32 %v636, 0.0
        %s638 = sld [smem:[#allocation2 + $0x27]]
        %v639 = vstv %s638
        %v640 = vmul.f32 %v308, %v639
        %v641 = vadd.f32 %v637, %v640
        %s642 = sld [smem:[#allocation2 + $0x28]]
        %v643 = vstv %s642
        %v644 = vmul.f32 %v311, %v643
        %v645 = vadd.f32 %v641, %v644
        %s646 = sld [smem:[#allocation2 + $0x29]]
        %v647 = vstv %s646
        %v648 = vmul.f32 %v314, %v647
        %v649 = vadd.f32 %v645, %v648
        %v650 = vmax.f32 %v649, 0.0
        %s651 = sld [smem:[#allocation6 + $0x1a]]
        %v652 = vstv %s651
        %v653 = vmul.f32 %v650, %v652
        %v654 = vadd.f32 %v630, %v653
        %s655 = sld [smem:[#allocation6 + $0x1b]]
        %v656 = vstv %s655
        %v657 = vmul.f32 %v650, %v656
        %v658 = vadd.f32 %v634, %v657
        %s659 = sld [smem:[#allocation4 + $0xe]]
        %v660 = vstv %s659
        %v661 = vadd.f32 %v660, 0.0
        %s662 = sld [smem:[#allocation2 + $0x2a]]
        %v663 = vstv %s662
        %v664 = vmul.f32 %v308, %v663
        %v665 = vadd.f32 %v661, %v664
        %s666 = sld [smem:[#allocation2 + $0x2b]]
        %v667 = vstv %s666
        %v668 = vmul.f32 %v311, %v667
        %v669 = vadd.f32 %v665, %v668
        %s670 = sld [smem:[#allocation2 + $0x2c]]
        %v671 = vstv %s670
        %v672 = vmul.f32 %v314, %v671
        %v673 = vadd.f32 %v669, %v672
        %v674 = vmax.f32 %v673, 0.0
        %s675 = sld [smem:[#allocation6 + $0x1c]]
        %v676 = vstv %s675
        %v677 = vmul.f32 %v674, %v676
        %v678 = vadd.f32 %v654, %v677
        %s679 = sld [smem:[#allocation6 + $0x1d]]
        %v680 = vstv %s679
        %v681 = vmul.f32 %v674, %v680
        %v682 = vadd.f32 %v658, %v681
        %s683 = sld [smem:[#allocation4 + $0xf]]
        %v684 = vstv %s683
        %v685 = vadd.f32 %v684, 0.0
        %s686 = sld [smem:[#allocation2 + $0x2d]]
        %v687 = vstv %s686
        %v688 = vmul.f32 %v308, %v687
        %v689 = vadd.f32 %v685, %v688
        %s690 = sld [smem:[#allocation2 + $0x2e]]
        %v691 = vstv %s690
        %v692 = vmul.f32 %v311, %v691
        %v693 = vadd.f32 %v689, %v692
        %s694 = sld [smem:[#allocation2 + $0x2f]]
        %v695 = vstv %s694
        %v696 = vmul.f32 %v314, %v695
        %v697 = vadd.f32 %v693, %v696
        %v698 = vmax.f32 %v697, 0.0
        %s699 = sld [smem:[#allocation6 + $0x1e]]
        %v700 = vstv %s699
        %v701 = vmul.f32 %v698, %v700
        %v702 = vadd.f32 %v678, %v701
        %s703 = sld [smem:[#allocation6 + $0x1f]]
        %v704 = vstv %s703
        %v705 = vmul.f32 %v698, %v704
        %v706 = vadd.f32 %v682, %v705
        %s707 = sld [smem:[#allocation4 + $0x10]]
        %v708 = vstv %s707
        %v709 = vadd.f32 %v708, 0.0
        %s710 = sld [smem:[#allocation2 + $0x30]]
        %v711 = vstv %s710
        %v712 = vmul.f32 %v308, %v711
        %v713 = vadd.f32 %v709, %v712
        %s714 = sld [smem:[#allocation2 + $0x31]]
        %v715 = vstv %s714
        %v716 = vmul.f32 %v311, %v715
        %v717 = vadd.f32 %v713, %v716
        %s718 = sld [smem:[#allocation2 + $0x32]]
        %v719 = vstv %s718
        %v720 = vmul.f32 %v314, %v719
        %v721 = vadd.f32 %v717, %v720
        %v722 = vmax.f32 %v721, 0.0
        %s723 = sld [smem:[#allocation6 + $0x20]]
        %v724 = vstv %s723
        %v725 = vmul.f32 %v722, %v724
        %v726 = vadd.f32 %v702, %v725
        %s727 = sld [smem:[#allocation6 + $0x21]]
        %v728 = vstv %s727
        %v729 = vmul.f32 %v722, %v728
        %v730 = vadd.f32 %v706, %v729
        %s731 = sld [smem:[#allocation4 + $0x11]]
        %v732 = vstv %s731
        %v733 = vadd.f32 %v732, 0.0
        %s734 = sld [smem:[#allocation2 + $0x33]]
        %v735 = vstv %s734
        %v736 = vmul.f32 %v308, %v735
        %v737 = vadd.f32 %v733, %v736
        %s738 = sld [smem:[#allocation2 + $0x34]]
        %v739 = vstv %s738
        %v740 = vmul.f32 %v311, %v739
        %v741 = vadd.f32 %v737, %v740
        %s742 = sld [smem:[#allocation2 + $0x35]]
        %v743 = vstv %s742
        %v744 = vmul.f32 %v314, %v743
        %v745 = vadd.f32 %v741, %v744
        %v746 = vmax.f32 %v745, 0.0
        %s747 = sld [smem:[#allocation6 + $0x22]]
        %v748 = vstv %s747
        %v749 = vmul.f32 %v746, %v748
        %v750 = vadd.f32 %v726, %v749
        %s751 = sld [smem:[#allocation6 + $0x23]]
        %v752 = vstv %s751
        %v753 = vmul.f32 %v746, %v752
        %v754 = vadd.f32 %v730, %v753
        %s755 = sld [smem:[#allocation4 + $0x12]]
        %v756 = vstv %s755
        %v757 = vadd.f32 %v756, 0.0
        %s758 = sld [smem:[#allocation2 + $0x36]]
        %v759 = vstv %s758
        %v760 = vmul.f32 %v308, %v759
        %v761 = vadd.f32 %v757, %v760
        %s762 = sld [smem:[#allocation2 + $0x37]]
        %v763 = vstv %s762
        %v764 = vmul.f32 %v311, %v763
        %v765 = vadd.f32 %v761, %v764
        %s766 = sld [smem:[#allocation2 + $0x38]]
        %v767 = vstv %s766
        %v768 = vmul.f32 %v314, %v767
        %v769 = vadd.f32 %v765, %v768
        %v770 = vmax.f32 %v769, 0.0
        %s771 = sld [smem:[#allocation6 + $0x24]]
        %v772 = vstv %s771
        %v773 = vmul.f32 %v770, %v772
        %v774 = vadd.f32 %v750, %v773
        %s775 = sld [smem:[#allocation6 + $0x25]]
        %v776 = vstv %s775
        %v777 = vmul.f32 %v770, %v776
        %v778 = vadd.f32 %v754, %v777
        %s779 = sld [smem:[#allocation4 + $0x13]]
        %v780 = vstv %s779
        %v781 = vadd.f32 %v780, 0.0
        %s782 = sld [smem:[#allocation2 + $0x39]]
        %v783 = vstv %s782
        %v784 = vmul.f32 %v308, %v783
        %v785 = vadd.f32 %v781, %v784
        %s786 = sld [smem:[#allocation2 + $0x3a]]
        %v787 = vstv %s786
        %v788 = vmul.f32 %v311, %v787
        %v789 = vadd.f32 %v785, %v788
        %s790 = sld [smem:[#allocation2 + $0x3b]]
        %v791 = vstv %s790
        %v792 = vmul.f32 %v314, %v791
        %v793 = vadd.f32 %v789, %v792
        %v794 = vmax.f32 %v793, 0.0
        %s795 = sld [smem:[#allocation6 + $0x26]]
        %v796 = vstv %s795
        %v797 = vmul.f32 %v794, %v796
        %v798 = vadd.f32 %v774, %v797
        %s799 = sld [smem:[#allocation6 + $0x27]]
        %v800 = vstv %s799
        %v801 = vmul.f32 %v794, %v800
        %v802 = vadd.f32 %v778, %v801
        %s803 = sld [smem:[#allocation4 + $0x14]]
        %v804 = vstv %s803
        %v805 = vadd.f32 %v804, 0.0
        %s806 = sld [smem:[#allocation2 + $0x3c]]
        %v807 = vstv %s806
        %v808 = vmul.f32 %v308, %v807
        %v809 = vadd.f32 %v805, %v808
        %s810 = sld [smem:[#allocation2 + $0x3d]]
        %v811 = vstv %s810
        %v812 = vmul.f32 %v311, %v811
        %v813 = vadd.f32 %v809, %v812
        %s814 = sld [smem:[#allocation2 + $0x3e]]
        %v815 = vstv %s814
        %v816 = vmul.f32 %v314, %v815
        %v817 = vadd.f32 %v813, %v816
        %v818 = vmax.f32 %v817, 0.0
        %s819 = sld [smem:[#allocation6 + $0x28]]
        %v820 = vstv %s819
        %v821 = vmul.f32 %v818, %v820
        %v822 = vadd.f32 %v798, %v821
        %s823 = sld [smem:[#allocation6 + $0x29]]
        %v824 = vstv %s823
        %v825 = vmul.f32 %v818, %v824
        %v826 = vadd.f32 %v802, %v825
        %s827 = sld [smem:[#allocation4 + $0x15]]
        %v828 = vstv %s827
        %v829 = vadd.f32 %v828, 0.0
        %s830 = sld [smem:[#allocation2 + $0x3f]]
        %v831 = vstv %s830
        %v832 = vmul.f32 %v308, %v831
        %v833 = vadd.f32 %v829, %v832
        %s834 = sld [smem:[#allocation2 + $0x40]]
        %v835 = vstv %s834
        %v836 = vmul.f32 %v311, %v835
        %v837 = vadd.f32 %v833, %v836
        %s838 = sld [smem:[#allocation2 + $0x41]]
        %v839 = vstv %s838
        %v840 = vmul.f32 %v314, %v839
        %v841 = vadd.f32 %v837, %v840
        %v842 = vmax.f32 %v841, 0.0
        %s843 = sld [smem:[#allocation6 + $0x2a]]
        %v844 = vstv %s843
        %v845 = vmul.f32 %v842, %v844
        %v846 = vadd.f32 %v822, %v845
        %s847 = sld [smem:[#allocation6 + $0x2b]]
        %v848 = vstv %s847
        %v849 = vmul.f32 %v842, %v848
        %v850 = vadd.f32 %v826, %v849
        %s851 = sld [smem:[#allocation4 + $0x16]]
        %v852 = vstv %s851
        %v853 = vadd.f32 %v852, 0.0
        %s854 = sld [smem:[#allocation2 + $0x42]]
        %v855 = vstv %s854
        %v856 = vmul.f32 %v308, %v855
        %v857 = vadd.f32 %v853, %v856
        %s858 = sld [smem:[#allocation2 + $0x43]]
        %v859 = vstv %s858
        %v860 = vmul.f32 %v311, %v859
        %v861 = vadd.f32 %v857, %v860
        %s862 = sld [smem:[#allocation2 + $0x44]]
        %v863 = vstv %s862
        %v864 = vmul.f32 %v314, %v863
        %v865 = vadd.f32 %v861, %v864
        %v866 = vmax.f32 %v865, 0.0
        %s867 = sld [smem:[#allocation6 + $0x2c]]
        %v868 = vstv %s867
        %v869 = vmul.f32 %v866, %v868
        %v870 = vadd.f32 %v846, %v869
        %s871 = sld [smem:[#allocation6 + $0x2d]]
        %v872 = vstv %s871
        %v873 = vmul.f32 %v866, %v872
        %v874 = vadd.f32 %v850, %v873
        %s875 = sld [smem:[#allocation4 + $0x17]]
        %v876 = vstv %s875
        %v877 = vadd.f32 %v876, 0.0
        %s878 = sld [smem:[#allocation2 + $0x45]]
        %v879 = vstv %s878
        %v880 = vmul.f32 %v308, %v879
        %v881 = vadd.f32 %v877, %v880
        %s882 = sld [smem:[#allocation2 + $0x46]]
        %v883 = vstv %s882
        %v884 = vmul.f32 %v311, %v883
        %v885 = vadd.f32 %v881, %v884
        %s886 = sld [smem:[#allocation2 + $0x47]]
        %v887 = vstv %s886
        %v888 = vmul.f32 %v314, %v887
        %v889 = vadd.f32 %v885, %v888
        %v890 = vmax.f32 %v889, 0.0
        %s891 = sld [smem:[#allocation6 + $0x2e]]
        %v892 = vstv %s891
        %v893 = vmul.f32 %v890, %v892
        %v894 = vadd.f32 %v870, %v893
        %s895 = sld [smem:[#allocation6 + $0x2f]]
        %v896 = vstv %s895
        %v897 = vmul.f32 %v890, %v896
        %v898 = vadd.f32 %v874, %v897
        %s899 = sld [smem:[#allocation4 + $0x18]]
        %v900 = vstv %s899
        %v901 = vadd.f32 %v900, 0.0
        %s902 = sld [smem:[#allocation2 + $0x48]]
        %v903 = vstv %s902
        %v904 = vmul.f32 %v308, %v903
        %v905 = vadd.f32 %v901, %v904
        %s906 = sld [smem:[#allocation2 + $0x49]]
        %v907 = vstv %s906
        %v908 = vmul.f32 %v311, %v907
        %v909 = vadd.f32 %v905, %v908
        %s910 = sld [smem:[#allocation2 + $0x4a]]
        %v911 = vstv %s910
        %v912 = vmul.f32 %v314, %v911
        %v913 = vadd.f32 %v909, %v912
        %v914 = vmax.f32 %v913, 0.0
        %s915 = sld [smem:[#allocation6 + $0x30]]
        %v916 = vstv %s915
        %v917 = vmul.f32 %v914, %v916
        %v918 = vadd.f32 %v894, %v917
        %s919 = sld [smem:[#allocation6 + $0x31]]
        %v920 = vstv %s919
        %v921 = vmul.f32 %v914, %v920
        %v922 = vadd.f32 %v898, %v921
        %s923 = sld [smem:[#allocation4 + $0x19]]
        %v924 = vstv %s923
        %v925 = vadd.f32 %v924, 0.0
        %s926 = sld [smem:[#allocation2 + $0x4b]]
        %v927 = vstv %s926
        %v928 = vmul.f32 %v308, %v927
        %v929 = vadd.f32 %v925, %v928
        %s930 = sld [smem:[#allocation2 + $0x4c]]
        %v931 = vstv %s930
        %v932 = vmul.f32 %v311, %v931
        %v933 = vadd.f32 %v929, %v932
        %s934 = sld [smem:[#allocation2 + $0x4d]]
        %v935 = vstv %s934
        %v936 = vmul.f32 %v314, %v935
        %v937 = vadd.f32 %v933, %v936
        %v938 = vmax.f32 %v937, 0.0
        %s939 = sld [smem:[#allocation6 + $0x32]]
        %v940 = vstv %s939
        %v941 = vmul.f32 %v938, %v940
        %v942 = vadd.f32 %v918, %v941
        %s943 = sld [smem:[#allocation6 + $0x33]]
        %v944 = vstv %s943
        %v945 = vmul.f32 %v938, %v944
        %v946 = vadd.f32 %v922, %v945
        %s947 = sld [smem:[#allocation4 + $0x1a]]
        %v948 = vstv %s947
        %v949 = vadd.f32 %v948, 0.0
        %s950 = sld [smem:[#allocation2 + $0x4e]]
        %v951 = vstv %s950
        %v952 = vmul.f32 %v308, %v951
        %v953 = vadd.f32 %v949, %v952
        %s954 = sld [smem:[#allocation2 + $0x4f]]
        %v955 = vstv %s954
        %v956 = vmul.f32 %v311, %v955
        %v957 = vadd.f32 %v953, %v956
        %s958 = sld [smem:[#allocation2 + $0x50]]
        %v959 = vstv %s958
        %v960 = vmul.f32 %v314, %v959
        %v961 = vadd.f32 %v957, %v960
        %v962 = vmax.f32 %v961, 0.0
        %s963 = sld [smem:[#allocation6 + $0x34]]
        %v964 = vstv %s963
        %v965 = vmul.f32 %v962, %v964
        %v966 = vadd.f32 %v942, %v965
        %s967 = sld [smem:[#allocation6 + $0x35]]
        %v968 = vstv %s967
        %v969 = vmul.f32 %v962, %v968
        %v970 = vadd.f32 %v946, %v969
        %s971 = sld [smem:[#allocation4 + $0x1b]]
        %v972 = vstv %s971
        %v973 = vadd.f32 %v972, 0.0
        %s974 = sld [smem:[#allocation2 + $0x51]]
        %v975 = vstv %s974
        %v976 = vmul.f32 %v308, %v975
        %v977 = vadd.f32 %v973, %v976
        %s978 = sld [smem:[#allocation2 + $0x52]]
        %v979 = vstv %s978
        %v980 = vmul.f32 %v311, %v979
        %v981 = vadd.f32 %v977, %v980
        %s982 = sld [smem:[#allocation2 + $0x53]]
        %v983 = vstv %s982
        %v984 = vmul.f32 %v314, %v983
        %v985 = vadd.f32 %v981, %v984
        %v986 = vmax.f32 %v985, 0.0
        %s987 = sld [smem:[#allocation6 + $0x36]]
        %v988 = vstv %s987
        %v989 = vmul.f32 %v986, %v988
        %v990 = vadd.f32 %v966, %v989
        %s991 = sld [smem:[#allocation6 + $0x37]]
        %v992 = vstv %s991
        %v993 = vmul.f32 %v986, %v992
        %v994 = vadd.f32 %v970, %v993
        %s995 = sld [smem:[#allocation4 + $0x1c]]
        %v996 = vstv %s995
        %v997 = vadd.f32 %v996, 0.0
        %s998 = sld [smem:[#allocation2 + $0x54]]
        %v999 = vstv %s998
        %v1000 = vmul.f32 %v308, %v999
        %v1001 = vadd.f32 %v997, %v1000
        %s1002 = sld [smem:[#allocation2 + $0x55]]
        %v1003 = vstv %s1002
        %v1004 = vmul.f32 %v311, %v1003
        %v1005 = vadd.f32 %v1001, %v1004
        %s1006 = sld [smem:[#allocation2 + $0x56]]
        %v1007 = vstv %s1006
        %v1008 = vmul.f32 %v314, %v1007
        %v1009 = vadd.f32 %v1005, %v1008
        %v1010 = vmax.f32 %v1009, 0.0
        %s1011 = sld [smem:[#allocation6 + $0x38]]
        %v1012 = vstv %s1011
        %v1013 = vmul.f32 %v1010, %v1012
        %v1014 = vadd.f32 %v990, %v1013
        %s1015 = sld [smem:[#allocation6 + $0x39]]
        %v1016 = vstv %s1015
        %v1017 = vmul.f32 %v1010, %v1016
        %v1018 = vadd.f32 %v994, %v1017
        %s1019 = sld [smem:[#allocation4 + $0x1d]]
        %v1020 = vstv %s1019
        %v1021 = vadd.f32 %v1020, 0.0
        %s1022 = sld [smem:[#allocation2 + $0x57]]
        %v1023 = vstv %s1022
        %v1024 = vmul.f32 %v308, %v1023
        %v1025 = vadd.f32 %v1021, %v1024
        %s1026 = sld [smem:[#allocation2 + $0x58]]
        %v1027 = vstv %s1026
        %v1028 = vmul.f32 %v311, %v1027
        %v1029 = vadd.f32 %v1025, %v1028
        %s1030 = sld [smem:[#allocation2 + $0x59]]
        %v1031 = vstv %s1030
        %v1032 = vmul.f32 %v314, %v1031
        %v1033 = vadd.f32 %v1029, %v1032
        %v1034 = vmax.f32 %v1033, 0.0
        %s1035 = sld [smem:[#allocation6 + $0x3a]]
        %v1036 = vstv %s1035
        %v1037 = vmul.f32 %v1034, %v1036
        %v1038 = vadd.f32 %v1014, %v1037
        %s1039 = sld [smem:[#allocation6 + $0x3b]]
        %v1040 = vstv %s1039
        %v1041 = vmul.f32 %v1034, %v1040
        %v1042 = vadd.f32 %v1018, %v1041
        %s1043 = sld [smem:[#allocation4 + $0x1e]]
        %v1044 = vstv %s1043
        %v1045 = vadd.f32 %v1044, 0.0
        %s1046 = sld [smem:[#allocation2 + $0x5a]]
        %v1047 = vstv %s1046
        %v1048 = vmul.f32 %v308, %v1047
        %v1049 = vadd.f32 %v1045, %v1048
        %s1050 = sld [smem:[#allocation2 + $0x5b]]
        %v1051 = vstv %s1050
        %v1052 = vmul.f32 %v311, %v1051
        %v1053 = vadd.f32 %v1049, %v1052
        %s1054 = sld [smem:[#allocation2 + $0x5c]]
        %v1055 = vstv %s1054
        %v1056 = vmul.f32 %v314, %v1055
        %v1057 = vadd.f32 %v1053, %v1056
        %v1058 = vmax.f32 %v1057, 0.0
        %s1059 = sld [smem:[#allocation6 + $0x3c]]
        %v1060 = vstv %s1059
        %v1061 = vmul.f32 %v1058, %v1060
        %v1062 = vadd.f32 %v1038, %v1061
        %s1063 = sld [smem:[#allocation6 + $0x3d]]
        %v1064 = vstv %s1063
        %v1065 = vmul.f32 %v1058, %v1064
        %v1066 = vadd.f32 %v1042, %v1065
        %s1067 = sld [smem:[#allocation4 + $0x1f]]
        %v1068 = vstv %s1067
        %v1069 = vadd.f32 %v1068, 0.0
        %s1070 = sld [smem:[#allocation2 + $0x5d]]
        %v1071 = vstv %s1070
        %v1072 = vmul.f32 %v308, %v1071
        %v1073 = vadd.f32 %v1069, %v1072
        %s1074 = sld [smem:[#allocation2 + $0x5e]]
        %v1075 = vstv %s1074
        %v1076 = vmul.f32 %v311, %v1075
        %v1077 = vadd.f32 %v1073, %v1076
        %s1078 = sld [smem:[#allocation2 + $0x5f]]
        %v1079 = vstv %s1078
        %v1080 = vmul.f32 %v314, %v1079
        %v1081 = vadd.f32 %v1077, %v1080
        %v1082 = vmax.f32 %v1081, 0.0
        %s1083 = sld [smem:[#allocation6 + $0x3e]]
        %v1084 = vstv %s1083
        %v1085 = vmul.f32 %v1082, %v1084
        %v1086 = vadd.f32 %v1062, %v1085
        %s1087 = sld [smem:[#allocation6 + $0x3f]]
        %v1088 = vstv %s1087
        %v1089 = vmul.f32 %v1082, %v1088
        %v1090 = vadd.f32 %v1066, %v1089
        %v1091 = vld [vmem:[%s294] sm:$0xff]
        %v1092 = vadd.f32 %v1091, %v1086
        %1093 = vst [vmem:[%s294] sm:$0xff] %v1092
        %s1094 = scalar_lea.vmem %s294, 8
        %v1095 = vld [vmem:[%s1094] sm:$0xff]
        %v1096 = vadd.f32 %v1095, %v1090
        %1097 = vst [vmem:[%s1094] sm:$0xff] %v1096
        %p1098 = scmp.lt.s32.totalorder %s23, 1
        %s1099 = scalar_select %p1098, %s23, 1
        %s1100 = smul.addr %s1099, 2
        %s1101 = smul.addr %s1100, 8
        %s1102 = scalar_lea.vmem %s4, %s1101
        %p1103 = scmp.lt.s32.totalorder %s23, 1
        %s1104 = scalar_select %p1103, %s23, 1
        %s1105 = smul.addr %s1104, 2
        %s1106 = smul.addr %s1105, 8
        %s1107 = scalar_lea.vmem %s5, %s1106
        // Predicated region
        $region53: #{iugcnet_forward.2} parent=35 // pred_check
          %p1108 = pneg %p140
        $region54: #{iugcnet_forward.2} parent=35 // pred_check_branch
          %1110 = sbr.rel (%p1108) target = $region56
        $region55: #{iugcnet_forward.2} parent=35 // pred_region
          _
        $region56: #{iugcnet_forward.2} parent=35 // pred_fallthru
          _
        // Predicated region
        $region57: #{iugcnet_forward.2} parent=35 // pred_check
          %p1111 = pneg %p166
        $region58: #{iugcnet_forward.2} parent=35 // pred_check_branch
          %1113 = sbr.rel (%p1111) target = $region60
        $region59: #{iugcnet_forward.2} parent=35 // pred_region
          _
        $region60: #{iugcnet_forward.2} parent=35 // pred_fallthru
          _
      $region36: #{iugcnet_forward.2} parent=5 // pred_fallthru
        _
      %p1114 = scmp.le.s32.totalorder 2, %s14
      // Predicated region
      $region61: #{iugcnet_forward.2} parent=5 // pred_check
        %p1115 = pneg %p1114
      $region62: #{iugcnet_forward.2} parent=5 // pred_check_branch
        %1117 = sbr.rel (%p1115) target = $region64
      $region63: #{iugcnet_forward.2} parent=5 // pred_region
        %s1118 = ssub.s32 %s14, 2
        // Predicated region
        $region65: #{iugcnet_forward.2} parent=63 // pred_check
          %p1119 = pneg %p146
        $region66: #{iugcnet_forward.2} parent=63 // pred_check_branch
          %1121 = sbr.rel (%p1119) target = $region68
        $region67: #{iugcnet_forward.2} parent=63 // pred_region
          %p1122 = scmp.lt.s32.totalorder %s25, 1
          %s1123 = scalar_select %p1122, %s25, 1
          %s1124 = smul.addr %s1123, 2
          %s1125 = smul.addr %s1124, 8
          %s1126 = scalar_lea.vmem %s4, %s1125
        $region68: #{iugcnet_forward.2} parent=63 // pred_fallthru
          _
        // Predicated region
        $region69: #{iugcnet_forward.2} parent=63 // pred_check
          %p1127 = pneg %p172
        $region70: #{iugcnet_forward.2} parent=63 // pred_check_branch
          %1129 = sbr.rel (%p1127) target = $region72
        $region71: #{iugcnet_forward.2} parent=63 // pred_region
          %p1130 = scmp.lt.s32.totalorder %s25, 1
          %s1131 = scalar_select %p1130, %s25, 1
          %s1132 = smul.addr %s1131, 2
          %s1133 = smul.addr %s1132, 8
          %s1134 = scalar_lea.vmem %s5, %s1133
        $region72: #{iugcnet_forward.2} parent=63 // pred_fallthru
          _
      $region64: #{iugcnet_forward.2} parent=5 // pred_fallthru
        _
    $region6: #{iugcnet_forward.2} parent=1 // loop_footer
      %s18 = sadd.s32 1, %s14
    $region7: #{iugcnet_forward.2} parent=1 // loop_footer_branch
      %13 = sbr.rel target = $region3
    $region8: #{iugcnet_forward.2} parent=1 // loop_exit
      _
    %1135 = vsyncpa [#allocation3], 1
    %s1136 = scalar_lea.sflag [#allocation3], 1
    %1137 = vsyncpa %s1136, 1
    %1138 = vsyncpa [#allocation5], 1

// kernel: iugcnet_forward.3
$region0: #{iugcnet_forward.3}
  #allocation0 [shape = 'u32[]', space=smem, size = 0x4, offset = 0x4, fixed_abs, tag = 'smem constant byte address 0x4 - core index']
  #allocation1 [shape = 'u32[144,128]{1,0:T(1,128)}', space=vmem, size = 0x12000, scoped, tag = 'internal scratch']
  %s0 = inlined_call_operand.vmem [shape: f32[2], index: 0, kind: input, shape index: {}]
  %s1 = inlined_call_operand.vmem [shape: f32[2,3,8,128], index: 1, kind: input, shape index: {}]
  %s2 = inlined_call_operand.vmem [shape: f32[32], index: 2, kind: input, shape index: {}]
  %s3 = inlined_call_operand.vmem [shape: f32[32], index: 3, kind: input, shape index: {}]
  %s4 = inlined_call_operand.vmem [shape: f32[96], index: 4, kind: input, shape index: {}]
  %s5 = inlined_call_operand.vmem [shape: f32[3], index: 5, kind: input, shape index: {}]
  %s6 = inlined_call_operand.vmem [shape: f32[3,8,128], index: 6, kind: output, shape index: {}]
  %s7 = sld [smem:[#allocation0]]
  $region92: #{iugcnet_forward.3} parent=0
    _
  %s9 = ssub.s32 1, %s7
  %s10 = scalar_select 0, %s9, %s7
  $region1: #{iugcnet_forward.3} parent=0
    #allocation2 [shape = 'u8[512]{0}', space=smem, size = 0x200, scoped, tag = 'input window, operand 0, single buffered']
    #allocation3 [shape = 's32[1]{0}', space=sflag, size = 0x4, scoped, tag = 'scoped memory for iugcnet_forward.3']
    #allocation4 [shape = 'u8[8192]{0}', space=vmem, size = 0x2000, scoped, tag = 'input window, operand 1, single buffered']
    #allocation5 [shape = 'u8[512]{0}', space=smem, size = 0x200, scoped, tag = 'input window, operand 2, single buffered']
    #allocation6 [shape = 's32[1]{0}', space=sflag, size = 0x4, scoped, tag = 'scoped memory for iugcnet_forward.3']
    #allocation7 [shape = 'u8[512]{0}', space=smem, size = 0x200, scoped, tag = 'input window, operand 3, single buffered']
    #allocation8 [shape = 'u8[512]{0}', space=smem, size = 0x200, scoped, tag = 'input window, operand 4, single buffered']
    #allocation9 [shape = 's32[1]{0}', space=sflag, size = 0x4, scoped, tag = 'scoped memory for iugcnet_forward.3']
    #allocation10 [shape = 'u8[512]{0}', space=smem, size = 0x200, scoped, tag = 'input window, operand 5, single buffered']
    %11 = vsyncpa [#allocation3], 0
    %12 = vsyncpa [#allocation6], 0
    %13 = vsyncpa [#allocation9], 0
    // Predicated region
    $region2: #{iugcnet_forward.3} parent=1 // pred_check
      _
    $region3: #{iugcnet_forward.3} parent=1 // pred_check_branch
      %15 = sbr.rel (0) target = $region5
    $region4: #{iugcnet_forward.3} parent=1 // pred_region
      %s17 = ssub.s32 16, 16
      %18 = vsyncadd [#allocation3], %s17
      %s20 = sshll.u32 %s0, 4
      %s21 = int_to_ptr.vmem [resolvable:$true] %s20
      %23 = dma.vmem_to_smem %s21, 16, [#allocation2], [#allocation3]
    $region5: #{iugcnet_forward.3} parent=1 // pred_fallthru
      _
    // Predicated region
    $region6: #{iugcnet_forward.3} parent=1 // pred_check
      _
    $region7: #{iugcnet_forward.3} parent=1 // pred_check_branch
      %25 = sbr.rel (0) target = $region9
    $region8: #{iugcnet_forward.3} parent=1 // pred_region
      // Predicated region
      $region10: #{iugcnet_forward.3} parent=8 // pred_check
        _
      $region11: #{iugcnet_forward.3} parent=8 // pred_check_branch
        %27 = sbr.rel (0) target = $region13
      $region12: #{iugcnet_forward.3} parent=8 // pred_region
        // Predicated region
        $region14: #{iugcnet_forward.3} parent=12 // pred_check
          _
        $region15: #{iugcnet_forward.3} parent=12 // pred_check_branch
          %29 = sbr.rel (0) target = $region17
        $region16: #{iugcnet_forward.3} parent=12 // pred_region
          // Predicated region
          $region29: #{iugcnet_forward.3} parent=16 // pred_check
            _
          $region30: #{iugcnet_forward.3} parent=16 // pred_check_branch
            %46 = sbr.rel (0) target = $region32
          $region31: #{iugcnet_forward.3} parent=16 // pred_region
            loop: start=0, step=1, limit=1
            $region33: #{iugcnet_forward.3} parent=31 // loop_pre_header
              _
            $region34: #{iugcnet_forward.3} parent=31 // loop_header
              %s48 = sphi 0, %s52
              %p49 = scmp.ge.s32.totalorder %s48, 1
              %s53 = sphi %s1, %s1
              %s54 = sphi [#allocation4], [#allocation4]
            $region35: #{iugcnet_forward.3} parent=31 // loop_header_branch
              %51 = sbr.rel (%p49) target = $region39
            $region36: #{iugcnet_forward.3} parent=31 // loop_body
              %v55 = vld [vmem:[%s53] sm:$0xff]
              %56 = vst [vmem:[%s54] sm:$0xff] %v55
              %v57 = vld [vmem:[%s53 + $0x18] sm:$0xff]
              %58 = vst [vmem:[%s54 + $0x8] sm:$0xff] %v57
            $region37: #{iugcnet_forward.3} parent=31 // loop_footer
              %s52 = sadd.s32 1, %s48
            $region38: #{iugcnet_forward.3} parent=31 // loop_footer_branch
              %47 = sbr.rel target = $region34
            $region39: #{iugcnet_forward.3} parent=31 // loop_exit
              _
          $region32: #{iugcnet_forward.3} parent=16 // pred_fallthru
            _
          // Predicated region
          $region40: #{iugcnet_forward.3} parent=16 // pred_check
            _
          $region41: #{iugcnet_forward.3} parent=16 // pred_check_branch
            %60 = sbr.rel target = $region43
          $region42: #{iugcnet_forward.3} parent=16 // pred_region
            _
          $region43: #{iugcnet_forward.3} parent=16 // pred_fallthru
            _
        $region17: #{iugcnet_forward.3} parent=12 // pred_fallthru
          _
        // Predicated region
        $region18: #{iugcnet_forward.3} parent=12 // pred_check
          _
        $region19: #{iugcnet_forward.3} parent=12 // pred_check_branch
          %31 = sbr.rel target = $region21
        $region20: #{iugcnet_forward.3} parent=12 // pred_region
          loop: start=0, step=1, limit=1
          $region22: #{iugcnet_forward.3} parent=20 // loop_pre_header
            _
          $region23: #{iugcnet_forward.3} parent=20 // loop_header
            %s34 = sphi 0, %s38
            %p35 = scmp.ge.s32.totalorder %s34, 1
            %s39 = sphi %s1, %s1
            %s40 = sphi [#allocation4], [#allocation4]
          $region24: #{iugcnet_forward.3} parent=20 // loop_header_branch
            %37 = sbr.rel (%p35) target = $region28
          $region25: #{iugcnet_forward.3} parent=20 // loop_body
            %v41 = vld [vmem:[%s39] sm:$0xff]
            %42 = vst [vmem:[%s40] sm:$0xff] %v41
            %v43 = vld [vmem:[%s39 + $0x18] sm:$0xff]
            %44 = vst [vmem:[%s40 + $0x8] sm:$0xff] %v43
          $region26: #{iugcnet_forward.3} parent=20 // loop_footer
            %s38 = sadd.s32 1, %s34
          $region27: #{iugcnet_forward.3} parent=20 // loop_footer_branch
            %33 = sbr.rel target = $region23
          $region28: #{iugcnet_forward.3} parent=20 // loop_exit
            _
        $region21: #{iugcnet_forward.3} parent=12 // pred_fallthru
          _
      $region13: #{iugcnet_forward.3} parent=8 // pred_fallthru
        _
      %61 = vnop
    $region9: #{iugcnet_forward.3} parent=1 // pred_fallthru
      _
    // Predicated region
    $region44: #{iugcnet_forward.3} parent=1 // pred_check
      _
    $region45: #{iugcnet_forward.3} parent=1 // pred_check_branch
      %63 = sbr.rel (0) target = $region47
    $region46: #{iugcnet_forward.3} parent=1 // pred_region
      %s65 = ssub.s32 16, 16
      %66 = vsyncadd [#allocation6], %s65
      %s68 = sshll.u32 %s2, 4
      %s69 = int_to_ptr.vmem [resolvable:$true] %s68
      %71 = dma.vmem_to_smem %s69, 16, [#allocation5], [#allocation6]
    $region47: #{iugcnet_forward.3} parent=1 // pred_fallthru
      _
    // Predicated region
    $region48: #{iugcnet_forward.3} parent=1 // pred_check
      _
    $region49: #{iugcnet_forward.3} parent=1 // pred_check_branch
      %73 = sbr.rel (0) target = $region51
    $region50: #{iugcnet_forward.3} parent=1 // pred_region
      %s75 = ssub.s32 16, 16
      %76 = vsyncadd [#allocation6], %s75
      %s78 = sshll.u32 %s3, 4
      %s79 = int_to_ptr.vmem [resolvable:$true] %s78
      %81 = dma.vmem_to_smem %s79, 16, [#allocation7], [#allocation6]
    $region51: #{iugcnet_forward.3} parent=1 // pred_fallthru
      _
    // Predicated region
    $region52: #{iugcnet_forward.3} parent=1 // pred_check
      _
    $region53: #{iugcnet_forward.3} parent=1 // pred_check_branch
      %83 = sbr.rel (0) target = $region55
    $region54: #{iugcnet_forward.3} parent=1 // pred_region
      %s85 = ssub.s32 16, 16
      %86 = vsyncadd [#allocation9], %s85
      %s88 = sshll.u32 %s4, 4
      %s89 = int_to_ptr.vmem [resolvable:$true] %s88
      %91 = dma.vmem_to_smem %s89, 16, [#allocation8], [#allocation9]
    $region55: #{iugcnet_forward.3} parent=1 // pred_fallthru
      _
    // Predicated region
    $region56: #{iugcnet_forward.3} parent=1 // pred_check
      _
    $region57: #{iugcnet_forward.3} parent=1 // pred_check_branch
      %93 = sbr.rel (0) target = $region59
    $region58: #{iugcnet_forward.3} parent=1 // pred_region
      %s95 = ssub.s32 16, 16
      %96 = vsyncadd [#allocation9], %s95
      %s98 = sshll.u32 %s5, 4
      %s99 = int_to_ptr.vmem [resolvable:$true] %s98
      %101 = dma.vmem_to_smem %s99, 16, [#allocation10], [#allocation9]
    $region59: #{iugcnet_forward.3} parent=1 // pred_fallthru
      _
    // Predicated region
    $region60: #{iugcnet_forward.3} parent=1 // pred_check
      _
    $region61: #{iugcnet_forward.3} parent=1 // pred_check_branch
      %103 = sbr.rel (0) target = $region63
    $region62: #{iugcnet_forward.3} parent=1 // pred_region
      %104 = dma.done [#allocation3], 16
    $region63: #{iugcnet_forward.3} parent=1 // pred_fallthru
      _
    // Predicated region
    $region64: #{iugcnet_forward.3} parent=1 // pred_check
      _
    $region65: #{iugcnet_forward.3} parent=1 // pred_check_branch
      %106 = sbr.rel (0) target = $region67
    $region66: #{iugcnet_forward.3} parent=1 // pred_region
      _
    $region67: #{iugcnet_forward.3} parent=1 // pred_fallthru
      _
    // Predicated region
    $region68: #{iugcnet_forward.3} parent=1 // pred_check
      _
    $region69: #{iugcnet_forward.3} parent=1 // pred_check_branch
      %108 = sbr.rel (0) target = $region71
    $region70: #{iugcnet_forward.3} parent=1 // pred_region
      %109 = dma.done [#allocation6], 16
    $region71: #{iugcnet_forward.3} parent=1 // pred_fallthru
      _
    // Predicated region
    $region72: #{iugcnet_forward.3} parent=1 // pred_check
      _
    $region73: #{iugcnet_forward.3} parent=1 // pred_check_branch
      %111 = sbr.rel (0) target = $region75
    $region74: #{iugcnet_forward.3} parent=1 // pred_region
      %112 = dma.done [#allocation6], 16
    $region75: #{iugcnet_forward.3} parent=1 // pred_fallthru
      _
    // Predicated region
    $region76: #{iugcnet_forward.3} parent=1 // pred_check
      _
    $region77: #{iugcnet_forward.3} parent=1 // pred_check_branch
      %114 = sbr.rel (0) target = $region79
    $region78: #{iugcnet_forward.3} parent=1 // pred_region
      %115 = dma.done [#allocation9], 16
    $region79: #{iugcnet_forward.3} parent=1 // pred_fallthru
      _
    // Predicated region
    $region80: #{iugcnet_forward.3} parent=1 // pred_check
      _
    $region81: #{iugcnet_forward.3} parent=1 // pred_check_branch
      %117 = sbr.rel (0) target = $region83
    $region82: #{iugcnet_forward.3} parent=1 // pred_region
      %118 = dma.done [#allocation9], 16
    $region83: #{iugcnet_forward.3} parent=1 // pred_fallthru
      _
    %119 = sfence
    %s120 = sld [smem:[#allocation2]]
    %s121 = sld [smem:[#allocation2 + $0x1]]
    %s122 = sld [smem:[#allocation10]]
    %v123 = vstv %s122
    %v124 = vadd.f32 %v123, 0.0
    %s125 = sld [smem:[#allocation10 + $0x1]]
    %v126 = vstv %s125
    %v127 = vadd.f32 %v126, 0.0
    %s128 = sld [smem:[#allocation10 + $0x2]]
    %v129 = vstv %s128
    %v130 = vadd.f32 %v129, 0.0
    %v131 = vld [vmem:[#allocation4] sm:$0xff]
    %v132 = vstv %s120
    %v133 = vsub.f32 %v131, %v132
    %v134 = vstv %s121
    %v135 = vmul.f32 %v133, %v134
    %s136 = sld [smem:[#allocation5]]
    %v137 = vstv %s136
    %v138 = vmul.f32 %v135, %v137
    %s139 = sld [smem:[#allocation7]]
    %v140 = vstv %s139
    %v141 = vadd.f32 %v138, %v140
    %v142 = vmax.f32 %v141, 0.0
    %s143 = sld [smem:[#allocation8]]
    %v144 = vstv %s143
    %v145 = vmul.f32 %v142, %v144
    %v146 = vadd.f32 %v124, %v145
    %s147 = sld [smem:[#allocation8 + $0x1]]
    %v148 = vstv %s147
    %v149 = vmul.f32 %v142, %v148
    %v150 = vadd.f32 %v127, %v149
    %s151 = sld [smem:[#allocation8 + $0x2]]
    %v152 = vstv %s151
    %v153 = vmul.f32 %v142, %v152
    %v154 = vadd.f32 %v130, %v153
    %s155 = sld [smem:[#allocation5 + $0x1]]
    %v156 = vstv %s155
    %v157 = vmul.f32 %v135, %v156
    %s158 = sld [smem:[#allocation7 + $0x1]]
    %v159 = vstv %s158
    %v160 = vadd.f32 %v157, %v159
    %v161 = vmax.f32 %v160, 0.0
    %s162 = sld [smem:[#allocation8 + $0x3]]
    %v163 = vstv %s162
    %v164 = vmul.f32 %v161, %v163
    %v165 = vadd.f32 %v146, %v164
    %s166 = sld [smem:[#allocation8 + $0x4]]
    %v167 = vstv %s166
    %v168 = vmul.f32 %v161, %v167
    %v169 = vadd.f32 %v150, %v168
    %s170 = sld [smem:[#allocation8 + $0x5]]
    %v171 = vstv %s170
    %v172 = vmul.f32 %v161, %v171
    %v173 = vadd.f32 %v154, %v172
    %s174 = sld [smem:[#allocation5 + $0x2]]
    %v175 = vstv %s174
    %v176 = vmul.f32 %v135, %v175
    %s177 = sld [smem:[#allocation7 + $0x2]]
    %v178 = vstv %s177
    %v179 = vadd.f32 %v176, %v178
    %v180 = vmax.f32 %v179, 0.0
    %s181 = sld [smem:[#allocation8 + $0x6]]
    %v182 = vstv %s181
    %v183 = vmul.f32 %v180, %v182
    %v184 = vadd.f32 %v165, %v183
    %s185 = sld [smem:[#allocation8 + $0x7]]
    %v186 = vstv %s185
    %v187 = vmul.f32 %v180, %v186
    %v188 = vadd.f32 %v169, %v187
    %s189 = sld [smem:[#allocation8 + $0x8]]
    %v190 = vstv %s189
    %v191 = vmul.f32 %v180, %v190
    %v192 = vadd.f32 %v173, %v191
    %s193 = sld [smem:[#allocation5 + $0x3]]
    %v194 = vstv %s193
    %v195 = vmul.f32 %v135, %v194
    %s196 = sld [smem:[#allocation7 + $0x3]]
    %v197 = vstv %s196
    %v198 = vadd.f32 %v195, %v197
    %v199 = vmax.f32 %v198, 0.0
    %s200 = sld [smem:[#allocation8 + $0x9]]
    %v201 = vstv %s200
    %v202 = vmul.f32 %v199, %v201
    %v203 = vadd.f32 %v184, %v202
    %s204 = sld [smem:[#allocation8 + $0xa]]
    %v205 = vstv %s204
    %v206 = vmul.f32 %v199, %v205
    %v207 = vadd.f32 %v188, %v206
    %s208 = sld [smem:[#allocation8 + $0xb]]
    %v209 = vstv %s208
    %v210 = vmul.f32 %v199, %v209
    %v211 = vadd.f32 %v192, %v210
    %s212 = sld [smem:[#allocation5 + $0x4]]
    %v213 = vstv %s212
    %v214 = vmul.f32 %v135, %v213
    %s215 = sld [smem:[#allocation7 + $0x4]]
    %v216 = vstv %s215
    %v217 = vadd.f32 %v214, %v216
    %v218 = vmax.f32 %v217, 0.0
    %s219 = sld [smem:[#allocation8 + $0xc]]
    %v220 = vstv %s219
    %v221 = vmul.f32 %v218, %v220
    %v222 = vadd.f32 %v203, %v221
    %s223 = sld [smem:[#allocation8 + $0xd]]
    %v224 = vstv %s223
    %v225 = vmul.f32 %v218, %v224
    %v226 = vadd.f32 %v207, %v225
    %s227 = sld [smem:[#allocation8 + $0xe]]
    %v228 = vstv %s227
    %v229 = vmul.f32 %v218, %v228
    %v230 = vadd.f32 %v211, %v229
    %s231 = sld [smem:[#allocation5 + $0x5]]
    %v232 = vstv %s231
    %v233 = vmul.f32 %v135, %v232
    %s234 = sld [smem:[#allocation7 + $0x5]]
    %v235 = vstv %s234
    %v236 = vadd.f32 %v233, %v235
    %v237 = vmax.f32 %v236, 0.0
    %s238 = sld [smem:[#allocation8 + $0xf]]
    %v239 = vstv %s238
    %v240 = vmul.f32 %v237, %v239
    %v241 = vadd.f32 %v222, %v240
    %s242 = sld [smem:[#allocation8 + $0x10]]
    %v243 = vstv %s242
    %v244 = vmul.f32 %v237, %v243
    %v245 = vadd.f32 %v226, %v244
    %s246 = sld [smem:[#allocation8 + $0x11]]
    %v247 = vstv %s246
    %v248 = vmul.f32 %v237, %v247
    %v249 = vadd.f32 %v230, %v248
    %s250 = sld [smem:[#allocation5 + $0x6]]
    %v251 = vstv %s250
    %v252 = vmul.f32 %v135, %v251
    %s253 = sld [smem:[#allocation7 + $0x6]]
    %v254 = vstv %s253
    %v255 = vadd.f32 %v252, %v254
    %v256 = vmax.f32 %v255, 0.0
    %s257 = sld [smem:[#allocation8 + $0x12]]
    %v258 = vstv %s257
    %v259 = vmul.f32 %v256, %v258
    %v260 = vadd.f32 %v241, %v259
    %s261 = sld [smem:[#allocation8 + $0x13]]
    %v262 = vstv %s261
    %v263 = vmul.f32 %v256, %v262
    %v264 = vadd.f32 %v245, %v263
    %s265 = sld [smem:[#allocation8 + $0x14]]
    %v266 = vstv %s265
    %v267 = vmul.f32 %v256, %v266
    %v268 = vadd.f32 %v249, %v267
    %s269 = sld [smem:[#allocation5 + $0x7]]
    %v270 = vstv %s269
    %v271 = vmul.f32 %v135, %v270
    %s272 = sld [smem:[#allocation7 + $0x7]]
    %v273 = vstv %s272
    %v274 = vadd.f32 %v271, %v273
    %v275 = vmax.f32 %v274, 0.0
    %s276 = sld [smem:[#allocation8 + $0x15]]
    %v277 = vstv %s276
    %v278 = vmul.f32 %v275, %v277
    %v279 = vadd.f32 %v260, %v278
    %s280 = sld [smem:[#allocation8 + $0x16]]
    %v281 = vstv %s280
    %v282 = vmul.f32 %v275, %v281
    %v283 = vadd.f32 %v264, %v282
    %s284 = sld [smem:[#allocation8 + $0x17]]
    %v285 = vstv %s284
    %v286 = vmul.f32 %v275, %v285
    %v287 = vadd.f32 %v268, %v286
    %s288 = sld [smem:[#allocation5 + $0x8]]
    %v289 = vstv %s288
    %v290 = vmul.f32 %v135, %v289
    %s291 = sld [smem:[#allocation7 + $0x8]]
    %v292 = vstv %s291
    %v293 = vadd.f32 %v290, %v292
    %v294 = vmax.f32 %v293, 0.0
    %s295 = sld [smem:[#allocation8 + $0x18]]
    %v296 = vstv %s295
    %v297 = vmul.f32 %v294, %v296
    %v298 = vadd.f32 %v279, %v297
    %s299 = sld [smem:[#allocation8 + $0x19]]
    %v300 = vstv %s299
    %v301 = vmul.f32 %v294, %v300
    %v302 = vadd.f32 %v283, %v301
    %s303 = sld [smem:[#allocation8 + $0x1a]]
    %v304 = vstv %s303
    %v305 = vmul.f32 %v294, %v304
    %v306 = vadd.f32 %v287, %v305
    %s307 = sld [smem:[#allocation5 + $0x9]]
    %v308 = vstv %s307
    %v309 = vmul.f32 %v135, %v308
    %s310 = sld [smem:[#allocation7 + $0x9]]
    %v311 = vstv %s310
    %v312 = vadd.f32 %v309, %v311
    %v313 = vmax.f32 %v312, 0.0
    %s314 = sld [smem:[#allocation8 + $0x1b]]
    %v315 = vstv %s314
    %v316 = vmul.f32 %v313, %v315
    %v317 = vadd.f32 %v298, %v316
    %s318 = sld [smem:[#allocation8 + $0x1c]]
    %v319 = vstv %s318
    %v320 = vmul.f32 %v313, %v319
    %v321 = vadd.f32 %v302, %v320
    %s322 = sld [smem:[#allocation8 + $0x1d]]
    %v323 = vstv %s322
    %v324 = vmul.f32 %v313, %v323
    %v325 = vadd.f32 %v306, %v324
    %s326 = sld [smem:[#allocation5 + $0xa]]
    %v327 = vstv %s326
    %v328 = vmul.f32 %v135, %v327
    %s329 = sld [smem:[#allocation7 + $0xa]]
    %v330 = vstv %s329
    %v331 = vadd.f32 %v328, %v330
    %v332 = vmax.f32 %v331, 0.0
    %s333 = sld [smem:[#allocation8 + $0x1e]]
    %v334 = vstv %s333
    %v335 = vmul.f32 %v332, %v334
    %v336 = vadd.f32 %v317, %v335
    %s337 = sld [smem:[#allocation8 + $0x1f]]
    %v338 = vstv %s337
    %v339 = vmul.f32 %v332, %v338
    %v340 = vadd.f32 %v321, %v339
    %s341 = sld [smem:[#allocation8 + $0x20]]
    %v342 = vstv %s341
    %v343 = vmul.f32 %v332, %v342
    %v344 = vadd.f32 %v325, %v343
    %s345 = sld [smem:[#allocation5 + $0xb]]
    %v346 = vstv %s345
    %v347 = vmul.f32 %v135, %v346
    %s348 = sld [smem:[#allocation7 + $0xb]]
    %v349 = vstv %s348
    %v350 = vadd.f32 %v347, %v349
    %v351 = vmax.f32 %v350, 0.0
    %s352 = sld [smem:[#allocation8 + $0x21]]
    %v353 = vstv %s352
    %v354 = vmul.f32 %v351, %v353
    %v355 = vadd.f32 %v336, %v354
    %s356 = sld [smem:[#allocation8 + $0x22]]
    %v357 = vstv %s356
    %v358 = vmul.f32 %v351, %v357
    %v359 = vadd.f32 %v340, %v358
    %s360 = sld [smem:[#allocation8 + $0x23]]
    %v361 = vstv %s360
    %v362 = vmul.f32 %v351, %v361
    %v363 = vadd.f32 %v344, %v362
    %s364 = sld [smem:[#allocation5 + $0xc]]
    %v365 = vstv %s364
    %v366 = vmul.f32 %v135, %v365
    %s367 = sld [smem:[#allocation7 + $0xc]]
    %v368 = vstv %s367
    %v369 = vadd.f32 %v366, %v368
    %v370 = vmax.f32 %v369, 0.0
    %s371 = sld [smem:[#allocation8 + $0x24]]
    %v372 = vstv %s371
    %v373 = vmul.f32 %v370, %v372
    %v374 = vadd.f32 %v355, %v373
    %s375 = sld [smem:[#allocation8 + $0x25]]
    %v376 = vstv %s375
    %v377 = vmul.f32 %v370, %v376
    %v378 = vadd.f32 %v359, %v377
    %s379 = sld [smem:[#allocation8 + $0x26]]
    %v380 = vstv %s379
    %v381 = vmul.f32 %v370, %v380
    %v382 = vadd.f32 %v363, %v381
    %s383 = sld [smem:[#allocation5 + $0xd]]
    %v384 = vstv %s383
    %v385 = vmul.f32 %v135, %v384
    %s386 = sld [smem:[#allocation7 + $0xd]]
    %v387 = vstv %s386
    %v388 = vadd.f32 %v385, %v387
    %v389 = vmax.f32 %v388, 0.0
    %s390 = sld [smem:[#allocation8 + $0x27]]
    %v391 = vstv %s390
    %v392 = vmul.f32 %v389, %v391
    %v393 = vadd.f32 %v374, %v392
    %s394 = sld [smem:[#allocation8 + $0x28]]
    %v395 = vstv %s394
    %v396 = vmul.f32 %v389, %v395
    %v397 = vadd.f32 %v378, %v396
    %s398 = sld [smem:[#allocation8 + $0x29]]
    %v399 = vstv %s398
    %v400 = vmul.f32 %v389, %v399
    %v401 = vadd.f32 %v382, %v400
    %s402 = sld [smem:[#allocation5 + $0xe]]
    %v403 = vstv %s402
    %v404 = vmul.f32 %v135, %v403
    %s405 = sld [smem:[#allocation7 + $0xe]]
    %v406 = vstv %s405
    %v407 = vadd.f32 %v404, %v406
    %v408 = vmax.f32 %v407, 0.0
    %s409 = sld [smem:[#allocation8 + $0x2a]]
    %v410 = vstv %s409
    %v411 = vmul.f32 %v408, %v410
    %v412 = vadd.f32 %v393, %v411
    %s413 = sld [smem:[#allocation8 + $0x2b]]
    %v414 = vstv %s413
    %v415 = vmul.f32 %v408, %v414
    %v416 = vadd.f32 %v397, %v415
    %s417 = sld [smem:[#allocation8 + $0x2c]]
    %v418 = vstv %s417
    %v419 = vmul.f32 %v408, %v418
    %v420 = vadd.f32 %v401, %v419
    %s421 = sld [smem:[#allocation5 + $0xf]]
    %v422 = vstv %s421
    %v423 = vmul.f32 %v135, %v422
    %s424 = sld [smem:[#allocation7 + $0xf]]
    %v425 = vstv %s424
    %v426 = vadd.f32 %v423, %v425
    %v427 = vmax.f32 %v426, 0.0
    %s428 = sld [smem:[#allocation8 + $0x2d]]
    %v429 = vstv %s428
    %v430 = vmul.f32 %v427, %v429
    %v431 = vadd.f32 %v412, %v430
    %s432 = sld [smem:[#allocation8 + $0x2e]]
    %v433 = vstv %s432
    %v434 = vmul.f32 %v427, %v433
    %v435 = vadd.f32 %v416, %v434
    %s436 = sld [smem:[#allocation8 + $0x2f]]
    %v437 = vstv %s436
    %v438 = vmul.f32 %v427, %v437
    %v439 = vadd.f32 %v420, %v438
    %s440 = sld [smem:[#allocation5 + $0x10]]
    %v441 = vstv %s440
    %v442 = vmul.f32 %v135, %v441
    %s443 = sld [smem:[#allocation7 + $0x10]]
    %v444 = vstv %s443
    %v445 = vadd.f32 %v442, %v444
    %v446 = vmax.f32 %v445, 0.0
    %s447 = sld [smem:[#allocation8 + $0x30]]
    %v448 = vstv %s447
    %v449 = vmul.f32 %v446, %v448
    %v450 = vadd.f32 %v431, %v449
    %s451 = sld [smem:[#allocation8 + $0x31]]
    %v452 = vstv %s451
    %v453 = vmul.f32 %v446, %v452
    %v454 = vadd.f32 %v435, %v453
    %s455 = sld [smem:[#allocation8 + $0x32]]
    %v456 = vstv %s455
    %v457 = vmul.f32 %v446, %v456
    %v458 = vadd.f32 %v439, %v457
    %s459 = sld [smem:[#allocation5 + $0x11]]
    %v460 = vstv %s459
    %v461 = vmul.f32 %v135, %v460
    %s462 = sld [smem:[#allocation7 + $0x11]]
    %v463 = vstv %s462
    %v464 = vadd.f32 %v461, %v463
    %v465 = vmax.f32 %v464, 0.0
    %s466 = sld [smem:[#allocation8 + $0x33]]
    %v467 = vstv %s466
    %v468 = vmul.f32 %v465, %v467
    %v469 = vadd.f32 %v450, %v468
    %s470 = sld [smem:[#allocation8 + $0x34]]
    %v471 = vstv %s470
    %v472 = vmul.f32 %v465, %v471
    %v473 = vadd.f32 %v454, %v472
    %s474 = sld [smem:[#allocation8 + $0x35]]
    %v475 = vstv %s474
    %v476 = vmul.f32 %v465, %v475
    %v477 = vadd.f32 %v458, %v476
    %s478 = sld [smem:[#allocation5 + $0x12]]
    %v479 = vstv %s478
    %v480 = vmul.f32 %v135, %v479
    %s481 = sld [smem:[#allocation7 + $0x12]]
    %v482 = vstv %s481
    %v483 = vadd.f32 %v480, %v482
    %v484 = vmax.f32 %v483, 0.0
    %s485 = sld [smem:[#allocation8 + $0x36]]
    %v486 = vstv %s485
    %v487 = vmul.f32 %v484, %v486
    %v488 = vadd.f32 %v469, %v487
    %s489 = sld [smem:[#allocation8 + $0x37]]
    %v490 = vstv %s489
    %v491 = vmul.f32 %v484, %v490
    %v492 = vadd.f32 %v473, %v491
    %s493 = sld [smem:[#allocation8 + $0x38]]
    %v494 = vstv %s493
    %v495 = vmul.f32 %v484, %v494
    %v496 = vadd.f32 %v477, %v495
    %s497 = sld [smem:[#allocation5 + $0x13]]
    %v498 = vstv %s497
    %v499 = vmul.f32 %v135, %v498
    %s500 = sld [smem:[#allocation7 + $0x13]]
    %v501 = vstv %s500
    %v502 = vadd.f32 %v499, %v501
    %v503 = vmax.f32 %v502, 0.0
    %s504 = sld [smem:[#allocation8 + $0x39]]
    %v505 = vstv %s504
    %v506 = vmul.f32 %v503, %v505
    %v507 = vadd.f32 %v488, %v506
    %s508 = sld [smem:[#allocation8 + $0x3a]]
    %v509 = vstv %s508
    %v510 = vmul.f32 %v503, %v509
    %v511 = vadd.f32 %v492, %v510
    %s512 = sld [smem:[#allocation8 + $0x3b]]
    %v513 = vstv %s512
    %v514 = vmul.f32 %v503, %v513
    %v515 = vadd.f32 %v496, %v514
    %s516 = sld [smem:[#allocation5 + $0x14]]
    %v517 = vstv %s516
    %v518 = vmul.f32 %v135, %v517
    %s519 = sld [smem:[#allocation7 + $0x14]]
    %v520 = vstv %s519
    %v521 = vadd.f32 %v518, %v520
    %v522 = vmax.f32 %v521, 0.0
    %s523 = sld [smem:[#allocation8 + $0x3c]]
    %v524 = vstv %s523
    %v525 = vmul.f32 %v522, %v524
    %v526 = vadd.f32 %v507, %v525
    %s527 = sld [smem:[#allocation8 + $0x3d]]
    %v528 = vstv %s527
    %v529 = vmul.f32 %v522, %v528
    %v530 = vadd.f32 %v511, %v529
    %s531 = sld [smem:[#allocation8 + $0x3e]]
    %v532 = vstv %s531
    %v533 = vmul.f32 %v522, %v532
    %v534 = vadd.f32 %v515, %v533
    %s535 = sld [smem:[#allocation5 + $0x15]]
    %v536 = vstv %s535
    %v537 = vmul.f32 %v135, %v536
    %s538 = sld [smem:[#allocation7 + $0x15]]
    %v539 = vstv %s538
    %v540 = vadd.f32 %v537, %v539
    %v541 = vmax.f32 %v540, 0.0
    %s542 = sld [smem:[#allocation8 + $0x3f]]
    %v543 = vstv %s542
    %v544 = vmul.f32 %v541, %v543
    %v545 = vadd.f32 %v526, %v544
    %s546 = sld [smem:[#allocation8 + $0x40]]
    %v547 = vstv %s546
    %v548 = vmul.f32 %v541, %v547
    %v549 = vadd.f32 %v530, %v548
    %s550 = sld [smem:[#allocation8 + $0x41]]
    %v551 = vstv %s550
    %v552 = vmul.f32 %v541, %v551
    %v553 = vadd.f32 %v534, %v552
    %s554 = sld [smem:[#allocation5 + $0x16]]
    %v555 = vstv %s554
    %v556 = vmul.f32 %v135, %v555
    %s557 = sld [smem:[#allocation7 + $0x16]]
    %v558 = vstv %s557
    %v559 = vadd.f32 %v556, %v558
    %v560 = vmax.f32 %v559, 0.0
    %s561 = sld [smem:[#allocation8 + $0x42]]
    %v562 = vstv %s561
    %v563 = vmul.f32 %v560, %v562
    %v564 = vadd.f32 %v545, %v563
    %s565 = sld [smem:[#allocation8 + $0x43]]
    %v566 = vstv %s565
    %v567 = vmul.f32 %v560, %v566
    %v568 = vadd.f32 %v549, %v567
    %s569 = sld [smem:[#allocation8 + $0x44]]
    %v570 = vstv %s569
    %v571 = vmul.f32 %v560, %v570
    %v572 = vadd.f32 %v553, %v571
    %s573 = sld [smem:[#allocation5 + $0x17]]
    %v574 = vstv %s573
    %v575 = vmul.f32 %v135, %v574
    %s576 = sld [smem:[#allocation7 + $0x17]]
    %v577 = vstv %s576
    %v578 = vadd.f32 %v575, %v577
    %v579 = vmax.f32 %v578, 0.0
    %s580 = sld [smem:[#allocation8 + $0x45]]
    %v581 = vstv %s580
    %v582 = vmul.f32 %v579, %v581
    %v583 = vadd.f32 %v564, %v582
    %s584 = sld [smem:[#allocation8 + $0x46]]
    %v585 = vstv %s584
    %v586 = vmul.f32 %v579, %v585
    %v587 = vadd.f32 %v568, %v586
    %s588 = sld [smem:[#allocation8 + $0x47]]
    %v589 = vstv %s588
    %v590 = vmul.f32 %v579, %v589
    %v591 = vadd.f32 %v572, %v590
    %s592 = sld [smem:[#allocation5 + $0x18]]
    %v593 = vstv %s592
    %v594 = vmul.f32 %v135, %v593
    %s595 = sld [smem:[#allocation7 + $0x18]]
    %v596 = vstv %s595
    %v597 = vadd.f32 %v594, %v596
    %v598 = vmax.f32 %v597, 0.0
    %s599 = sld [smem:[#allocation8 + $0x48]]
    %v600 = vstv %s599
    %v601 = vmul.f32 %v598, %v600
    %v602 = vadd.f32 %v583, %v601
    %s603 = sld [smem:[#allocation8 + $0x49]]
    %v604 = vstv %s603
    %v605 = vmul.f32 %v598, %v604
    %v606 = vadd.f32 %v587, %v605
    %s607 = sld [smem:[#allocation8 + $0x4a]]
    %v608 = vstv %s607
    %v609 = vmul.f32 %v598, %v608
    %v610 = vadd.f32 %v591, %v609
    %s611 = sld [smem:[#allocation5 + $0x19]]
    %v612 = vstv %s611
    %v613 = vmul.f32 %v135, %v612
    %s614 = sld [smem:[#allocation7 + $0x19]]
    %v615 = vstv %s614
    %v616 = vadd.f32 %v613, %v615
    %v617 = vmax.f32 %v616, 0.0
    %s618 = sld [smem:[#allocation8 + $0x4b]]
    %v619 = vstv %s618
    %v620 = vmul.f32 %v617, %v619
    %v621 = vadd.f32 %v602, %v620
    %s622 = sld [smem:[#allocation8 + $0x4c]]
    %v623 = vstv %s622
    %v624 = vmul.f32 %v617, %v623
    %v625 = vadd.f32 %v606, %v624
    %s626 = sld [smem:[#allocation8 + $0x4d]]
    %v627 = vstv %s626
    %v628 = vmul.f32 %v617, %v627
    %v629 = vadd.f32 %v610, %v628
    %s630 = sld [smem:[#allocation5 + $0x1a]]
    %v631 = vstv %s630
    %v632 = vmul.f32 %v135, %v631
    %s633 = sld [smem:[#allocation7 + $0x1a]]
    %v634 = vstv %s633
    %v635 = vadd.f32 %v632, %v634
    %v636 = vmax.f32 %v635, 0.0
    %s637 = sld [smem:[#allocation8 + $0x4e]]
    %v638 = vstv %s637
    %v639 = vmul.f32 %v636, %v638
    %v640 = vadd.f32 %v621, %v639
    %s641 = sld [smem:[#allocation8 + $0x4f]]
    %v642 = vstv %s641
    %v643 = vmul.f32 %v636, %v642
    %v644 = vadd.f32 %v625, %v643
    %s645 = sld [smem:[#allocation8 + $0x50]]
    %v646 = vstv %s645
    %v647 = vmul.f32 %v636, %v646
    %v648 = vadd.f32 %v629, %v647
    %s649 = sld [smem:[#allocation5 + $0x1b]]
    %v650 = vstv %s649
    %v651 = vmul.f32 %v135, %v650
    %s652 = sld [smem:[#allocation7 + $0x1b]]
    %v653 = vstv %s652
    %v654 = vadd.f32 %v651, %v653
    %v655 = vmax.f32 %v654, 0.0
    %s656 = sld [smem:[#allocation8 + $0x51]]
    %v657 = vstv %s656
    %v658 = vmul.f32 %v655, %v657
    %v659 = vadd.f32 %v640, %v658
    %s660 = sld [smem:[#allocation8 + $0x52]]
    %v661 = vstv %s660
    %v662 = vmul.f32 %v655, %v661
    %v663 = vadd.f32 %v644, %v662
    %s664 = sld [smem:[#allocation8 + $0x53]]
    %v665 = vstv %s664
    %v666 = vmul.f32 %v655, %v665
    %v667 = vadd.f32 %v648, %v666
    %s668 = sld [smem:[#allocation5 + $0x1c]]
    %v669 = vstv %s668
    %v670 = vmul.f32 %v135, %v669
    %s671 = sld [smem:[#allocation7 + $0x1c]]
    %v672 = vstv %s671
    %v673 = vadd.f32 %v670, %v672
    %v674 = vmax.f32 %v673, 0.0
    %s675 = sld [smem:[#allocation8 + $0x54]]
    %v676 = vstv %s675
    %v677 = vmul.f32 %v674, %v676
    %v678 = vadd.f32 %v659, %v677
    %s679 = sld [smem:[#allocation8 + $0x55]]
    %v680 = vstv %s679
    %v681 = vmul.f32 %v674, %v680
    %v682 = vadd.f32 %v663, %v681
    %s683 = sld [smem:[#allocation8 + $0x56]]
    %v684 = vstv %s683
    %v685 = vmul.f32 %v674, %v684
    %v686 = vadd.f32 %v667, %v685
    %s687 = sld [smem:[#allocation5 + $0x1d]]
    %v688 = vstv %s687
    %v689 = vmul.f32 %v135, %v688
    %s690 = sld [smem:[#allocation7 + $0x1d]]
    %v691 = vstv %s690
    %v692 = vadd.f32 %v689, %v691
    %v693 = vmax.f32 %v692, 0.0
    %s694 = sld [smem:[#allocation8 + $0x57]]
    %v695 = vstv %s694
    %v696 = vmul.f32 %v693, %v695
    %v697 = vadd.f32 %v678, %v696
    %s698 = sld [smem:[#allocation8 + $0x58]]
    %v699 = vstv %s698
    %v700 = vmul.f32 %v693, %v699
    %v701 = vadd.f32 %v682, %v700
    %s702 = sld [smem:[#allocation8 + $0x59]]
    %v703 = vstv %s702
    %v704 = vmul.f32 %v693, %v703
    %v705 = vadd.f32 %v686, %v704
    %s706 = sld [smem:[#allocation5 + $0x1e]]
    %v707 = vstv %s706
    %v708 = vmul.f32 %v135, %v707
    %s709 = sld [smem:[#allocation7 + $0x1e]]
    %v710 = vstv %s709
    %v711 = vadd.f32 %v708, %v710
    %v712 = vmax.f32 %v711, 0.0
    %s713 = sld [smem:[#allocation8 + $0x5a]]
    %v714 = vstv %s713
    %v715 = vmul.f32 %v712, %v714
    %v716 = vadd.f32 %v697, %v715
    %s717 = sld [smem:[#allocation8 + $0x5b]]
    %v718 = vstv %s717
    %v719 = vmul.f32 %v712, %v718
    %v720 = vadd.f32 %v701, %v719
    %s721 = sld [smem:[#allocation8 + $0x5c]]
    %v722 = vstv %s721
    %v723 = vmul.f32 %v712, %v722
    %v724 = vadd.f32 %v705, %v723
    %s725 = sld [smem:[#allocation5 + $0x1f]]
    %v726 = vstv %s725
    %v727 = vmul.f32 %v135, %v726
    %s728 = sld [smem:[#allocation7 + $0x1f]]
    %v729 = vstv %s728
    %v730 = vadd.f32 %v727, %v729
    %v731 = vmax.f32 %v730, 0.0
    %s732 = sld [smem:[#allocation8 + $0x5d]]
    %v733 = vstv %s732
    %v734 = vmul.f32 %v731, %v733
    %v735 = vadd.f32 %v716, %v734
    %s736 = sld [smem:[#allocation8 + $0x5e]]
    %v737 = vstv %s736
    %v738 = vmul.f32 %v731, %v737
    %v739 = vadd.f32 %v720, %v738
    %s740 = sld [smem:[#allocation8 + $0x5f]]
    %v741 = vstv %s740
    %v742 = vmul.f32 %v731, %v741
    %v743 = vadd.f32 %v724, %v742
    %s744 = sadd.s32 0, 8
    %s745 = scalar_lea.vmem [#allocation4], %s744
    %v746 = vld [vmem:[%s745] sm:$0xff]
    %v747 = vsub.f32 %v746, %v132
    %v748 = vmul.f32 %v747, %v134
    %v749 = vmul.f32 %v748, %v137
    %v750 = vadd.f32 %v749, %v140
    %v751 = vmax.f32 %v750, 0.0
    %v752 = vmul.f32 %v751, %v144
    %v753 = vadd.f32 %v735, %v752
    %v754 = vmul.f32 %v751, %v148
    %v755 = vadd.f32 %v739, %v754
    %v756 = vmul.f32 %v751, %v152
    %v757 = vadd.f32 %v743, %v756
    %v758 = vmul.f32 %v748, %v156
    %v759 = vadd.f32 %v758, %v159
    %v760 = vmax.f32 %v759, 0.0
    %v761 = vmul.f32 %v760, %v163
    %v762 = vadd.f32 %v753, %v761
    %v763 = vmul.f32 %v760, %v167
    %v764 = vadd.f32 %v755, %v763
    %v765 = vmul.f32 %v760, %v171
    %v766 = vadd.f32 %v757, %v765
    %v767 = vmul.f32 %v748, %v175
    %v768 = vadd.f32 %v767, %v178
    %v769 = vmax.f32 %v768, 0.0
    %v770 = vmul.f32 %v769, %v182
    %v771 = vadd.f32 %v762, %v770
    %v772 = vmul.f32 %v769, %v186
    %v773 = vadd.f32 %v764, %v772
    %v774 = vmul.f32 %v769, %v190
    %v775 = vadd.f32 %v766, %v774
    %v776 = vmul.f32 %v748, %v194
    %v777 = vadd.f32 %v776, %v197
    %v778 = vmax.f32 %v777, 0.0
    %v779 = vmul.f32 %v778, %v201
    %v780 = vadd.f32 %v771, %v779
    %v781 = vmul.f32 %v778, %v205
    %v782 = vadd.f32 %v773, %v781
    %v783 = vmul.f32 %v778, %v209
    %v784 = vadd.f32 %v775, %v783
    %v785 = vmul.f32 %v748, %v213
    %v786 = vadd.f32 %v785, %v216
    %v787 = vmax.f32 %v786, 0.0
    %v788 = vmul.f32 %v787, %v220
    %v789 = vadd.f32 %v780, %v788
    %v790 = vmul.f32 %v787, %v224
    %v791 = vadd.f32 %v782, %v790
    %v792 = vmul.f32 %v787, %v228
    %v793 = vadd.f32 %v784, %v792
    %v794 = vmul.f32 %v748, %v232
    %v795 = vadd.f32 %v794, %v235
    %v796 = vmax.f32 %v795, 0.0
    %v797 = vmul.f32 %v796, %v239
    %v798 = vadd.f32 %v789, %v797
    %v799 = vmul.f32 %v796, %v243
    %v800 = vadd.f32 %v791, %v799
    %v801 = vmul.f32 %v796, %v247
    %v802 = vadd.f32 %v793, %v801
    %v803 = vmul.f32 %v748, %v251
    %v804 = vadd.f32 %v803, %v254
    %v805 = vmax.f32 %v804, 0.0
    %v806 = vmul.f32 %v805, %v258
    %v807 = vadd.f32 %v798, %v806
    %v808 = vmul.f32 %v805, %v262
    %v809 = vadd.f32 %v800, %v808
    %v810 = vmul.f32 %v805, %v266
    %v811 = vadd.f32 %v802, %v810
    %v812 = vmul.f32 %v748, %v270
    %v813 = vadd.f32 %v812, %v273
    %v814 = vmax.f32 %v813, 0.0
    %v815 = vmul.f32 %v814, %v277
    %v816 = vadd.f32 %v807, %v815
    %v817 = vmul.f32 %v814, %v281
    %v818 = vadd.f32 %v809, %v817
    %v819 = vmul.f32 %v814, %v285
    %v820 = vadd.f32 %v811, %v819
    %v821 = vmul.f32 %v748, %v289
    %v822 = vadd.f32 %v821, %v292
    %v823 = vmax.f32 %v822, 0.0
    %v824 = vmul.f32 %v823, %v296
    %v825 = vadd.f32 %v816, %v824
    %v826 = vmul.f32 %v823, %v300
    %v827 = vadd.f32 %v818, %v826
    %v828 = vmul.f32 %v823, %v304
    %v829 = vadd.f32 %v820, %v828
    %v830 = vmul.f32 %v748, %v308
    %v831 = vadd.f32 %v830, %v311
    %v832 = vmax.f32 %v831, 0.0
    %v833 = vmul.f32 %v832, %v315
    %v834 = vadd.f32 %v825, %v833
    %v835 = vmul.f32 %v832, %v319
    %v836 = vadd.f32 %v827, %v835
    %v837 = vmul.f32 %v832, %v323
    %v838 = vadd.f32 %v829, %v837
    %v839 = vmul.f32 %v748, %v327
    %v840 = vadd.f32 %v839, %v330
    %v841 = vmax.f32 %v840, 0.0
    %v842 = vmul.f32 %v841, %v334
    %v843 = vadd.f32 %v834, %v842
    %v844 = vmul.f32 %v841, %v338
    %v845 = vadd.f32 %v836, %v844
    %v846 = vmul.f32 %v841, %v342
    %v847 = vadd.f32 %v838, %v846
    %v848 = vmul.f32 %v748, %v346
    %v849 = vadd.f32 %v848, %v349
    %v850 = vmax.f32 %v849, 0.0
    %v851 = vmul.f32 %v850, %v353
    %v852 = vadd.f32 %v843, %v851
    %v853 = vmul.f32 %v850, %v357
    %v854 = vadd.f32 %v845, %v853
    %v855 = vmul.f32 %v850, %v361
    %v856 = vadd.f32 %v847, %v855
    %v857 = vmul.f32 %v748, %v365
    %v858 = vadd.f32 %v857, %v368
    %v859 = vmax.f32 %v858, 0.0
    %v860 = vmul.f32 %v859, %v372
    %v861 = vadd.f32 %v852, %v860
    %v862 = vmul.f32 %v859, %v376
    %v863 = vadd.f32 %v854, %v862
    %v864 = vmul.f32 %v859, %v380
    %v865 = vadd.f32 %v856, %v864
    %v866 = vmul.f32 %v748, %v384
    %v867 = vadd.f32 %v866, %v387
    %v868 = vmax.f32 %v867, 0.0
    %v869 = vmul.f32 %v868, %v391
    %v870 = vadd.f32 %v861, %v869
    %v871 = vmul.f32 %v868, %v395
    %v872 = vadd.f32 %v863, %v871
    %v873 = vmul.f32 %v868, %v399
    %v874 = vadd.f32 %v865, %v873
    %v875 = vmul.f32 %v748, %v403
    %v876 = vadd.f32 %v875, %v406
    %v877 = vmax.f32 %v876, 0.0
    %v878 = vmul.f32 %v877, %v410
    %v879 = vadd.f32 %v870, %v878
    %v880 = vmul.f32 %v877, %v414
    %v881 = vadd.f32 %v872, %v880
    %v882 = vmul.f32 %v877, %v418
    %v883 = vadd.f32 %v874, %v882
    %v884 = vmul.f32 %v748, %v422
    %v885 = vadd.f32 %v884, %v425
    %v886 = vmax.f32 %v885, 0.0
    %v887 = vmul.f32 %v886, %v429
    %v888 = vadd.f32 %v879, %v887
    %v889 = vmul.f32 %v886, %v433
    %v890 = vadd.f32 %v881, %v889
    %v891 = vmul.f32 %v886, %v437
    %v892 = vadd.f32 %v883, %v891
    %v893 = vmul.f32 %v748, %v441
    %v894 = vadd.f32 %v893, %v444
    %v895 = vmax.f32 %v894, 0.0
    %v896 = vmul.f32 %v895, %v448
    %v897 = vadd.f32 %v888, %v896
    %v898 = vmul.f32 %v895, %v452
    %v899 = vadd.f32 %v890, %v898
    %v900 = vmul.f32 %v895, %v456
    %v901 = vadd.f32 %v892, %v900
    %v902 = vmul.f32 %v748, %v460
    %v903 = vadd.f32 %v902, %v463
    %v904 = vmax.f32 %v903, 0.0
    %v905 = vmul.f32 %v904, %v467
    %v906 = vadd.f32 %v897, %v905
    %v907 = vmul.f32 %v904, %v471
    %v908 = vadd.f32 %v899, %v907
    %v909 = vmul.f32 %v904, %v475
    %v910 = vadd.f32 %v901, %v909
    %v911 = vmul.f32 %v748, %v479
    %v912 = vadd.f32 %v911, %v482
    %v913 = vmax.f32 %v912, 0.0
    %v914 = vmul.f32 %v913, %v486
    %v915 = vadd.f32 %v906, %v914
    %v916 = vmul.f32 %v913, %v490
    %v917 = vadd.f32 %v908, %v916
    %v918 = vmul.f32 %v913, %v494
    %v919 = vadd.f32 %v910, %v918
    %v920 = vmul.f32 %v748, %v498
    %v921 = vadd.f32 %v920, %v501
    %v922 = vmax.f32 %v921, 0.0
    %v923 = vmul.f32 %v922, %v505
    %v924 = vadd.f32 %v915, %v923
    %v925 = vmul.f32 %v922, %v509
    %v926 = vadd.f32 %v917, %v925
    %v927 = vmul.f32 %v922, %v513
    %v928 = vadd.f32 %v919, %v927
    %v929 = vmul.f32 %v748, %v517
    %v930 = vadd.f32 %v929, %v520
    %v931 = vmax.f32 %v930, 0.0
    %v932 = vmul.f32 %v931, %v524
    %v933 = vadd.f32 %v924, %v932
    %v934 = vmul.f32 %v931, %v528
    %v935 = vadd.f32 %v926, %v934
    %v936 = vmul.f32 %v931, %v532
    %v937 = vadd.f32 %v928, %v936
    %v938 = vmul.f32 %v748, %v536
    %v939 = vadd.f32 %v938, %v539
    %v940 = vmax.f32 %v939, 0.0
    %v941 = vmul.f32 %v940, %v543
    %v942 = vadd.f32 %v933, %v941
    %v943 = vmul.f32 %v940, %v547
    %v944 = vadd.f32 %v935, %v943
    %v945 = vmul.f32 %v940, %v551
    %v946 = vadd.f32 %v937, %v945
    %v947 = vmul.f32 %v748, %v555
    %v948 = vadd.f32 %v947, %v558
    %v949 = vmax.f32 %v948, 0.0
    %v950 = vmul.f32 %v949, %v562
    %v951 = vadd.f32 %v942, %v950
    %v952 = vmul.f32 %v949, %v566
    %v953 = vadd.f32 %v944, %v952
    %v954 = vmul.f32 %v949, %v570
    %v955 = vadd.f32 %v946, %v954
    %v956 = vmul.f32 %v748, %v574
    %v957 = vadd.f32 %v956, %v577
    %v958 = vmax.f32 %v957, 0.0
    %v959 = vmul.f32 %v958, %v581
    %v960 = vadd.f32 %v951, %v959
    %v961 = vmul.f32 %v958, %v585
    %v962 = vadd.f32 %v953, %v961
    %v963 = vmul.f32 %v958, %v589
    %v964 = vadd.f32 %v955, %v963
    %v965 = vmul.f32 %v748, %v593
    %v966 = vadd.f32 %v965, %v596
    %v967 = vmax.f32 %v966, 0.0
    %v968 = vmul.f32 %v967, %v600
    %v969 = vadd.f32 %v960, %v968
    %v970 = vmul.f32 %v967, %v604
    %v971 = vadd.f32 %v962, %v970
    %v972 = vmul.f32 %v967, %v608
    %v973 = vadd.f32 %v964, %v972
    %v974 = vmul.f32 %v748, %v612
    %v975 = vadd.f32 %v974, %v615
    %v976 = vmax.f32 %v975, 0.0
    %v977 = vmul.f32 %v976, %v619
    %v978 = vadd.f32 %v969, %v977
    %v979 = vmul.f32 %v976, %v623
    %v980 = vadd.f32 %v971, %v979
    %v981 = vmul.f32 %v976, %v627
    %v982 = vadd.f32 %v973, %v981
    %v983 = vmul.f32 %v748, %v631
    %v984 = vadd.f32 %v983, %v634
    %v985 = vmax.f32 %v984, 0.0
    %v986 = vmul.f32 %v985, %v638
    %v987 = vadd.f32 %v978, %v986
    %v988 = vmul.f32 %v985, %v642
    %v989 = vadd.f32 %v980, %v988
    %v990 = vmul.f32 %v985, %v646
    %v991 = vadd.f32 %v982, %v990
    %v992 = vmul.f32 %v748, %v650
    %v993 = vadd.f32 %v992, %v653
    %v994 = vmax.f32 %v993, 0.0
    %v995 = vmul.f32 %v994, %v657
    %v996 = vadd.f32 %v987, %v995
    %v997 = vmul.f32 %v994, %v661
    %v998 = vadd.f32 %v989, %v997
    %v999 = vmul.f32 %v994, %v665
    %v1000 = vadd.f32 %v991, %v999
    %v1001 = vmul.f32 %v748, %v669
    %v1002 = vadd.f32 %v1001, %v672
    %v1003 = vmax.f32 %v1002, 0.0
    %v1004 = vmul.f32 %v1003, %v676
    %v1005 = vadd.f32 %v996, %v1004
    %v1006 = vmul.f32 %v1003, %v680
    %v1007 = vadd.f32 %v998, %v1006
    %v1008 = vmul.f32 %v1003, %v684
    %v1009 = vadd.f32 %v1000, %v1008
    %v1010 = vmul.f32 %v748, %v688
    %v1011 = vadd.f32 %v1010, %v691
    %v1012 = vmax.f32 %v1011, 0.0
    %v1013 = vmul.f32 %v1012, %v695
    %v1014 = vadd.f32 %v1005, %v1013
    %v1015 = vmul.f32 %v1012, %v699
    %v1016 = vadd.f32 %v1007, %v1015
    %v1017 = vmul.f32 %v1012, %v703
    %v1018 = vadd.f32 %v1009, %v1017
    %v1019 = vmul.f32 %v748, %v707
    %v1020 = vadd.f32 %v1019, %v710
    %v1021 = vmax.f32 %v1020, 0.0
    %v1022 = vmul.f32 %v1021, %v714
    %v1023 = vadd.f32 %v1014, %v1022
    %v1024 = vmul.f32 %v1021, %v718
    %v1025 = vadd.f32 %v1016, %v1024
    %v1026 = vmul.f32 %v1021, %v722
    %v1027 = vadd.f32 %v1018, %v1026
    %v1028 = vmul.f32 %v748, %v726
    %v1029 = vadd.f32 %v1028, %v729
    %v1030 = vmax.f32 %v1029, 0.0
    %v1031 = vmul.f32 %v1030, %v733
    %v1032 = vadd.f32 %v1023, %v1031
    %v1033 = vmul.f32 %v1030, %v737
    %v1034 = vadd.f32 %v1025, %v1033
    %v1035 = vmul.f32 %v1030, %v741
    %v1036 = vadd.f32 %v1027, %v1035
    %1037 = vst [vmem:[%s6] sm:$0xff] %v1032
    %s1038 = scalar_lea.vmem %s6, %s744
    %1039 = vst [vmem:[%s1038] sm:$0xff] %v1034
    %s1040 = sadd.s32 0, 16
    %s1041 = scalar_lea.vmem %s6, %s1040
    %1042 = vst [vmem:[%s1041] sm:$0xff] %v1036
    // Predicated region
    $region84: #{iugcnet_forward.3} parent=1 // pred_check
      _
    $region85: #{iugcnet_forward.3} parent=1 // pred_check_branch
      %1044 = sbr.rel (0) target = $region87
    $region86: #{iugcnet_forward.3} parent=1 // pred_region
      _
    $region87: #{iugcnet_forward.3} parent=1 // pred_fallthru
      _
    // Predicated region
    $region88: #{iugcnet_forward.3} parent=1 // pred_check
      _
    $region89: #{iugcnet_forward.3} parent=1 // pred_check_branch
      %1046 = sbr.rel (0) target = $region91
    $region90: #{iugcnet_forward.3} parent=1 // pred_region
      _
    $region91: #{iugcnet_forward.3} parent=1 // pred_fallthru
      _
    %1047 = vsyncpa [#allocation3], 1
    %1048 = vsyncpa [#allocation6], 1
    %1049 = vsyncpa [#allocation9], 1

</llo_original>
